<compile_context>
chip_gen: v6e
topology: v6e:2x2x1
jax: 0.10.0
libtpu: 0.0.40
codegen_flags: <defaults>
</compile_context>

<pallas_src>
import functools

import jax
import jax.numpy as jnp
from jax.experimental import pallas as pl
from jax.experimental.pallas import tpu as pltpu

EPS = 1e-5
LANE = 128
PADL = 8          # left-halo columns in the scratch so the interior store is 8-aligned


def _round_up(v: int, m: int) -> int:
    return ((v + m - 1) // m) * m


def _vmem_capacity_bytes() -> int:
    """Physical VMEM per core (fallback 128 MiB if the query is unavailable)."""
    try:
        info = pltpu.get_tpu_info()
        cap = getattr(info, "vmem_capacity_bytes", None)
        if cap:
            return int(cap)
    except Exception:
        pass
    return 128 * 1024 * 1024


def _pick_strip_rows(H, W, Cin_p, Cout_p, act_bytes, budget) -> int:
    """Largest strip height hb dividing H whose per-step VMEM estimate fits."""
    valid = [hb for hb in range(1, H + 1) if H % hb == 0 and (hb * W) % 8 == 0]
    if not valid:
        return H
    best = valid[0]
    for hb in valid:
        need = act_bytes * (
            2 * hb * W * Cin_p                    # center input strip, double-buffered
            + 4 * W * Cin_p                       # two halo rows, double-buffered
            + 2 * hb * W * Cout_p                 # output strip, double-buffered
            + 2 * 9 * Cin_p * Cout_p              # weights (see TODO: single-buffer)
            + (hb + 2) * (W + PADL + 1) * Cin_p   # halo scratch
            + 3 * hb * W * Cin_p                  # widest matmul LHS (one dx group)
        ) + 4 * hb * W * Cout_p                   # f32 accumulator value
        if need <= budget:
            best = hb
    return best


# --------------------------------------------------------------------------
# Kernel: fused [optional producer BN+ReLU] -> 3x3 "same" conv (one strip)
#         -> raw conv output + per-strip channel statistics.
# --------------------------------------------------------------------------
def _conv_bn_stats_kernel(x_ref, xup_ref, xdn_ref, scale_ref, shift_ref, w_ref,
                          y_ref, sum_ref, sq_ref,
                          xpad_ref,
                          *, hb, W, Cin_p, Cout_p, num_strips, apply_affine):
    # x_ref     : (hb*W, Cin_p)             lane-dense strip of the input slab
    # xup_ref   : (W, Cin_p)                image row just above the strip (clamped)
    # xdn_ref   : (W, Cin_p)                image row just below the strip (clamped)
    # scale_ref : (1, Cin_p)  f32           folded BN scale of the producer stage
    # shift_ref : (1, Cin_p)  f32           folded BN shift of the producer stage
    # w_ref     : (3, 3*Cin_p, Cout_p)      weights grouped by dx, rows = dy*Cin_p+ci
    # y_ref     : (hb*W, Cout_p)            raw conv output strip
    # sum_ref   : (1, 1, Cout_p) f32        per-strip channel sum
    # sq_ref    : (1, 1, Cout_p) f32        per-strip channel sum of squares
    # xpad_ref  : (hb+2, PADL+W+1, Cin_p)   strip + row halo scratch (no init needed)
    s = pl.program_id(1)

    def _affine(v):
        v = v.astype(jnp.float32)
        if apply_affine:          # fold the producer stage's BatchNorm + ReLU in
            v = jnp.maximum(v * scale_ref[...] + shift_ref[...], 0.0)
        return v.astype(xpad_ref.dtype)

    # Strip interior, stored at an 8-aligned column offset.
    xpad_ref[1:hb + 1, PADL:PADL + W, :] = _affine(x_ref[...]).reshape(hb, W, Cin_p)

    # Top halo row: zeros at the image border, else the producer row above.
    @pl.when(s == 0)
    def _top_zero():
        xpad_ref[0:1, PADL:PADL + W, :] = jnp.zeros((1, W, Cin_p), xpad_ref.dtype)

    @pl.when(s > 0)
    def _top_row():
        xpad_ref[0:1, PADL:PADL + W, :] = _affine(xup_ref[...]).reshape(1, W, Cin_p)

    # Bottom halo row.
    @pl.when(s == num_strips - 1)
    def _bot_zero():
        xpad_ref[hb + 1:hb + 2, PADL:PADL + W, :] = jnp.zeros((1, W, Cin_p),
                                                              xpad_ref.dtype)

    @pl.when(s < num_strips - 1)
    def _bot_row():
        xpad_ref[hb + 1:hb + 2, PADL:PADL + W, :] = _affine(xdn_ref[...]).reshape(
            1, W, Cin_p)

    # Three accumulating MXU dots grouped by dx (K = 3*Cin_p each).  Out-of-image
    # column taps are handled with an edge mask instead of zeroed halo columns,
    # so the scratch never needs initialization (megacore-safe).
    # TODO(synk): the two dx != 1 window loads are sublane-unaligned; a
    # pltpu.roll + edge-mask variant would move them onto the otherwise-idle XLU.
    acc = None
    for dx in range(3):
        xs = xpad_ref[:, PADL - 1 + dx:PADL - 1 + dx + W, :]    # (hb+2, W, Cin_p)
        if dx != 1:
            edge = 0 if dx == 0 else W - 1
            col = jax.lax.broadcasted_iota(jnp.int32, (1, W, 1), 1)
            xs = jnp.where(col == edge, jnp.zeros((), xs.dtype), xs)
        lhs = jnp.concatenate([xs[0:hb], xs[1:hb + 1], xs[2:hb + 2]], axis=-1)
        lhs = lhs.reshape(hb * W, 3 * Cin_p)
        part = jnp.dot(lhs, w_ref[dx], preferred_element_type=jnp.float32)
        acc = part if acc is None else acc + part

    # Lane-dense store of the raw conv output (this stage's BN is applied by its
    # consumer) + per-strip batch statistics while acc is resident.
    y_ref[...] = acc.astype(y_ref.dtype)
    sum_ref[...] = jnp.sum(acc, axis=0).reshape(1, 1, Cout_p)
    sq_ref[...] = jnp.sum(acc * acc, axis=0).reshape(1, 1, Cout_p)


def _conv_stage(x2d, w_dx, scale, shift, *, N, H, W, hb, vmem_limit, apply_affine):
    num_strips = H // hb
    rows = hb * W
    Cin_p = x2d.shape[-1]
    Cout_p = w_dx.shape[-1]
    act_dtype = x2d.dtype
    kernel = functools.partial(
        _conv_bn_stats_kernel, hb=hb, W=W, Cin_p=Cin_p, Cout_p=Cout_p,
        num_strips=num_strips, apply_affine=apply_affine)

    # TODO(synk): weights / scale / shift (constant index_map) are still
    # double-buffered by the pipeline; single-buffer them (pl.Buffered(1) or a
    # one-shot manual DMA) to free VMEM for bigger strips on v7x.
    return pl.pallas_call(
        kernel,
        out_shape=(
            jax.ShapeDtypeStruct((N * H * W, Cout_p), act_dtype),       # conv out
            jax.ShapeDtypeStruct((N * num_strips, 1, Cout_p), jnp.float32),  # sum
            jax.ShapeDtypeStruct((N * num_strips, 1, Cout_p), jnp.float32),  # sum x^2
        ),
        grid=(N, num_strips),
        in_specs=[
            pl.BlockSpec((rows, Cin_p), lambda n, s: (n * num_strips + s, 0)),
            pl.BlockSpec((W, Cin_p),
                         lambda n, s: (n * H + jnp.maximum(s * hb - 1, 0), 0)),
            pl.BlockSpec((W, Cin_p),
                         lambda n, s: (n * H + jnp.minimum((s + 1) * hb, H - 1), 0)),
            pl.BlockSpec((1, Cin_p), lambda n, s: (0, 0)),
            pl.BlockSpec((1, Cin_p), lambda n, s: (0, 0)),
            pl.BlockSpec((3, 3 * Cin_p, Cout_p), lambda n, s: (0, 0, 0)),
        ],
        out_specs=(
            pl.BlockSpec((rows, Cout_p), lambda n, s: (n * num_strips + s, 0)),
            pl.BlockSpec((1, 1, Cout_p), lambda n, s: (n * num_strips + s, 0, 0)),
            pl.BlockSpec((1, 1, Cout_p), lambda n, s: (n * num_strips + s, 0, 0)),
        ),
        scratch_shapes=[pltpu.VMEM((hb + 2, W + PADL + 1, Cin_p), act_dtype)],
        compiler_params=pltpu.CompilerParams(
            dimension_semantics=("parallel", "parallel"),
            vmem_limit_bytes=vmem_limit,
        ),
    )(x2d, x2d, x2d, scale, shift, w_dx)


# --------------------------------------------------------------------------
# Per-channel BN folding from the per-strip statistics (tiny, plain JAX).
# --------------------------------------------------------------------------
def _fold_bn(ssum, ssq, count, gamma_p, beta_p):
    s = jnp.sum(ssum, axis=0, dtype=jnp.float32)     # (1, Cout_p)
    q = jnp.sum(ssq, axis=0, dtype=jnp.float32)
    mean = s / count
    var = q / count - mean * mean                    # biased variance (training BN)
    # TODO(synk): E[x^2]-E[x]^2 in f32 is fine at these scales; switch to a
    # centered / Welford reduction if BN inputs can carry large offsets.
    scale = gamma_p * jax.lax.rsqrt(var + EPS)
    shift = beta_p - mean * scale
    return scale, shift                              # each (1, Cout_p), f32


# --------------------------------------------------------------------------
# Parameter / layout prep (tiny, traced under jit).
# --------------------------------------------------------------------------
def _pad_lanes(v, width):
    return jnp.pad(v, ((0, 0), (0, width - v.shape[-1])))


def _prep_weights(w_oihw, cin_p, cout_p, dtype):
    cout, cin, kh, kw = w_oihw.shape
    w = jnp.transpose(w_oihw, (2, 3, 1, 0))                       # (kh, kw, cin, cout)
    w = jnp.pad(w, ((0, 0), (0, 0), (0, cin_p - cin), (0, cout_p - cout)))
    w = jnp.transpose(w, (1, 0, 2, 3))                            # (dx, dy, cin_p, cout_p)
    return w.reshape(kw, kh * cin_p, cout_p).astype(dtype)        # (3, 3*cin_p, cout_p)


def _prep_bn_param(p, cp):
    # zero-pad so padded channels get scale=0 / shift=0 (stay exactly zero)
    return jnp.pad(p.astype(jnp.float32), (0, cp - p.shape[0])).reshape(1, cp)


# --------------------------------------------------------------------------
# DoubleConv forward (NCHW in / NCHW out, like the PyTorch module).
# --------------------------------------------------------------------------
@functools.partial(jax.jit, static_argnames=("compute_dtype", "strip_rows"))
def double_conv(x_nchw, params, compute_dtype=jnp.bfloat16, strip_rows=None):
    w1, g1, b1, w2, g2, b2 = params        # w*: OIHW like torch Conv2d
    N, Cin, H, W = x_nchw.shape
    Cout = w1.shape[0]
    Cin_p = _round_up(Cin, LANE)
    Cout_p = _round_up(Cout, LANE)
    act_bytes = jnp.dtype(compute_dtype).itemsize

    # Generation-dependent VMEM budget (~96 MiB on v5e/v6e, ~48 MiB on v7x).
    vmem_cap = _vmem_capacity_bytes()
    vmem_limit = int(vmem_cap * 3 // 4)
    budget = int(vmem_limit * 0.8)
    if strip_rows is None:
        hb1 = _pick_strip_rows(H, W, Cin_p, Cout_p, act_bytes, budget)
        hb2 = _pick_strip_rows(H, W, Cout_p, Cout_p, act_bytes, budget)
    else:
        assert H % strip_rows == 0, "strip_rows must divide H"
        hb1 = hb2 = strip_rows

    # NCHW -> lane-dense (N*H*W, Cin_p) slab (zero channel padding).  Padded
    # lanes stay zero and padded weight rows/cols are zero, so they never
    # contribute to the convolution or the statistics.
    # TODO(synk): for tiny stems (Cin < 64) this pads Cin straight to 128 lanes;
    # packing taps*Cin into the lane dim (or running the stem in XLA) would cut
    # the stage-1 MXU waste.
    x2d = jnp.transpose(x_nchw, (0, 2, 3, 1)).reshape(N * H * W, Cin)
    x2d = _pad_lanes(x2d, Cin_p).astype(compute_dtype)

    w1p = _prep_weights(w1, Cin_p, Cout_p, compute_dtype)
    w2p = _prep_weights(w2, Cout_p, Cout_p, compute_dtype)
    g1p, b1p = _prep_bn_param(g1, Cout_p), _prep_bn_param(b1, Cout_p)
    g2p, b2p = _prep_bn_param(g2, Cout_p), _prep_bn_param(b2, Cout_p)

    count = jnp.float32(N * H * W)
    no_affine = jnp.zeros((1, Cin_p), jnp.float32)   # unused placeholders (stage 1)

    # stage 1: conv1 + fused stats (BN1+ReLU is applied by the stage-2 kernel)
    y1, s1, q1 = _conv_stage(x2d, w1p, no_affine, no_affine,
                             N=N, H=H, W=W, hb=hb1, vmem_limit=vmem_limit,
                             apply_affine=False)
    scale1, shift1 = _fold_bn(s1, q1, count, g1p, b1p)

    # stage 2: BN1+ReLU fused into the input load, conv2, fused stats
    y2, s2, q2 = _conv_stage(y1, w2p, scale1, shift1,
                             N=N, H=H, W=W, hb=hb2, vmem_limit=vmem_limit,
                             apply_affine=True)
    scale2, shift2 = _fold_bn(s2, q2, count, g2p, b2p)

    # Final BN2 + ReLU in plain JAX so XLA fuses it with the channel unpad and
    # the NHWC->NCHW transpose (single pass over the conv2 output).
    y2n = y2.reshape(N, H, W, Cout_p)[..., :Cout].astype(jnp.float32)
    out = jnp.maximum(y2n * scale2[0, :Cout] + shift2[0, :Cout], 0.0)
    return jnp.transpose(out, (0, 3, 1, 2)).astype(x_nchw.dtype)


# --------------------------------------------------------------------------
# Pure-JAX reference for correctness checking.
# --------------------------------------------------------------------------
def ref_double_conv(x_nchw, params):
    w1, g1, b1, w2, g2, b2 = params
    x = jnp.transpose(x_nchw, (0, 2, 3, 1))

    def conv(x, w_oihw):
        w = jnp.transpose(w_oihw, (2, 3, 1, 0))
        return jax.lax.conv_general_dilated(
            x, w, (1, 1), "SAME",
            dimension_numbers=("NHWC", "HWIO", "NHWC"))

    def bn_relu(y, g, b):
        mean = y.mean(axis=(0, 1, 2))
        var = y.var(axis=(0, 1, 2))
        return jnp.maximum((y - mean) * g * jax.lax.rsqrt(var + EPS) + b, 0.0)

    y = bn_relu(conv(x, w1), g1, b1)
    y = bn_relu(conv(y, w2), g2, b2)
    return jnp.transpose(y, (0, 3, 1, 2))


if __name__ == "__main__":
    N, C_IN, C_OUT, H, W = 2, 4, 8, 16, 16

    key = jax.random.PRNGKey(0)
    kx, kw1, kw2, kg1, kb1, kg2, kb2 = jax.random.split(key, 7)

    x = jax.random.normal(kx, (N, C_IN, H, W), jnp.float32)
    # Conv2d(in, out, 3, 1, 1, bias=False) weights: (out, in, 3, 3)
    w1 = jax.random.normal(kw1, (C_OUT, C_IN, 3, 3), jnp.float32) * 0.1
    w2 = jax.random.normal(kw2, (C_OUT, C_OUT, 3, 3), jnp.float32) * 0.1
    # BatchNorm2d affine params: (out,)
    g1 = 1.0 + 0.1 * jax.random.normal(kg1, (C_OUT,), jnp.float32)
    b1 = 0.1 * jax.random.normal(kb1, (C_OUT,), jnp.float32)
    g2 = 1.0 + 0.1 * jax.random.normal(kg2, (C_OUT,), jnp.float32)
    b2 = 0.1 * jax.random.normal(kb2, (C_OUT,), jnp.float32)
    params = (w1, g1, b1, w2, g2, b2)

    ref = ref_double_conv(x, params)

    # f32, auto strip size (single strip per image at this toy size): strict check.
    out = jax.block_until_ready(double_conv(x, params, compute_dtype=jnp.float32))
    assert out.shape == (N, C_OUT, H, W)
    err = jnp.max(jnp.abs(out - ref))
    assert jnp.allclose(out, ref, atol=1e-3, rtol=1e-3), f"f32 max abs err {err}"

    # f32, forced 4-row strips: exercises the multi-strip halo path.
    out_s = jax.block_until_ready(
        double_conv(x, params, compute_dtype=jnp.float32, strip_rows=4))
    err_s = jnp.max(jnp.abs(out_s - ref))
    assert jnp.allclose(out_s, ref, atol=1e-3, rtol=1e-3), \
        f"strip-tiled max abs err {err_s}"

    # Default bf16 activation storage / MXU feed (f32 accumulation & statistics):
    # looser tolerance consistent with bf16 rounding.
    out_bf16 = jax.block_until_ready(double_conv(x, params))
    err_bf16 = jnp.max(jnp.abs(out_bf16.astype(jnp.float32) - ref))
    assert err_bf16 < 1e-1, f"bf16 max abs err {err_bf16}"

    print("KERNEL_OK")
</pallas_src>

<mosaic_0001>
module attributes {stable_mosaic.version = 11 : i64} {
  func.func @_conv_bn_stats_kernel(%arg0: i32, %arg1: i32, %arg2: memref<256x128xf32, #tpu.memory_space<vmem>>, %arg3: memref<16x128xf32, #tpu.memory_space<vmem>>, %arg4: memref<16x128xf32, #tpu.memory_space<vmem>>, %arg5: memref<1x128xf32, #tpu.memory_space<vmem>>, %arg6: memref<1x128xf32, #tpu.memory_space<vmem>>, %arg7: memref<3x384x128xf32, #tpu.memory_space<vmem>>, %arg8: memref<256x128xf32, #tpu.memory_space<vmem>>, %arg9: memref<1x1x128xf32, #tpu.memory_space<vmem>>, %arg10: memref<1x1x128xf32, #tpu.memory_space<vmem>>, %arg11: memref<18x25x128xf32, #tpu.memory_space<vmem>>) attributes {dimension_semantics = [#tpu.dimension_semantics<parallel>, #tpu.dimension_semantics<parallel>], iteration_bounds = array<i64: 2, 1>, scalar_prefetch = 0 : i64, scratch_operands = 1 : i64, tpu.core_type = #tpu.core_type<tc>, window_params = [{transform_indices = @transform_0, window_bounds = array<i64: 256, 128>}, {transform_indices = @transform_1, window_bounds = array<i64: 16, 128>}, {transform_indices = @transform_2, window_bounds = array<i64: 16, 128>}, {pipeline_mode = #tpu.pipeline_mode<synchronous>, transform_indices = @transform_3, window_bounds = array<i64: 1, 128>}, {pipeline_mode = #tpu.pipeline_mode<synchronous>, transform_indices = @transform_4, window_bounds = array<i64: 1, 128>}, {pipeline_mode = #tpu.pipeline_mode<synchronous>, transform_indices = @transform_5, window_bounds = array<i64: 3, 384, 128>}, {transform_indices = @transform_6, window_bounds = array<i64: 256, 128>}, {transform_indices = @transform_7, window_bounds = array<i64: 1, 1, 128>}, {transform_indices = @transform_8, window_bounds = array<i64: 1, 1, 128>}]} {
    %c0 = arith.constant 0 : index
    %c0_0 = arith.constant 0 : index
    %0 = vector.load %arg2[%c0, %c0_0] : memref<256x128xf32, #tpu.memory_space<vmem>>, vector<256x128xf32>
    %1 = vector.shape_cast %0 : vector<256x128xf32> to vector<16x16x128xf32>
    %c1 = arith.constant 1 : index
    %c8 = arith.constant 8 : index
    %c0_1 = arith.constant 0 : index
    %2 = vector.load %arg11[%c1, %c8, %c0_1] : memref<18x25x128xf32, #tpu.memory_space<vmem>>, vector<16x16x128xf32>
    tpu.vector_store %arg11[%c1, %c8, %c0_1], %1 {strides = array<i32>} : memref<18x25x128xf32, #tpu.memory_space<vmem>>, vector<16x16x128xf32>,
    %c0_i32 = arith.constant 0 : i32
    %3 = arith.cmpi eq, %arg1, %c0_i32 : i32
    %4 = arith.extui %3 : i1 to i32
    %c0_i32_2 = arith.constant 0 : i32
    %5 = arith.cmpi ne, %4, %c0_i32_2 : i32
    scf.if %5 {
      %cst_39 = arith.constant 0.000000e+00 : f32
      %66 = vector.broadcast %cst_39 : f32 to vector<1x16x128xf32>
      %c0_40 = arith.constant 0 : index
      %c8_41 = arith.constant 8 : index
      %c0_42 = arith.constant 0 : index
      %67 = vector.load %arg11[%c0_40, %c8_41, %c0_42] : memref<18x25x128xf32, #tpu.memory_space<vmem>>, vector<1x16x128xf32>
      tpu.vector_store %arg11[%c0_40, %c8_41, %c0_42], %66 {strides = array<i32>} : memref<18x25x128xf32, #tpu.memory_space<vmem>>, vector<1x16x128xf32>,
    } else {
    }
    %c0_i32_3 = arith.constant 0 : i32
    %6 = arith.cmpi sgt, %arg1, %c0_i32_3 : i32
    %7 = arith.extui %6 : i1 to i32
    %c0_i32_4 = arith.constant 0 : i32
    %8 = arith.cmpi ne, %7, %c0_i32_4 : i32
    scf.if %8 {
      %c0_39 = arith.constant 0 : index
      %c0_40 = arith.constant 0 : index
      %66 = vector.load %arg3[%c0_39, %c0_40] : memref<16x128xf32, #tpu.memory_space<vmem>>, vector<16x128xf32>
      %67 = vector.shape_cast %66 : vector<16x128xf32> to vector<1x16x128xf32>
      %c0_41 = arith.constant 0 : index
      %c8_42 = arith.constant 8 : index
      %c0_43 = arith.constant 0 : index
      %68 = vector.load %arg11[%c0_41, %c8_42, %c0_43] : memref<18x25x128xf32, #tpu.memory_space<vmem>>, vector<1x16x128xf32>
      tpu.vector_store %arg11[%c0_41, %c8_42, %c0_43], %67 {strides = array<i32>} : memref<18x25x128xf32, #tpu.memory_space<vmem>>, vector<1x16x128xf32>,
    } else {
    }
    %c0_i32_5 = arith.constant 0 : i32
    %9 = arith.cmpi eq, %arg1, %c0_i32_5 : i32
    %10 = arith.extui %9 : i1 to i32
    %c0_i32_6 = arith.constant 0 : i32
    %11 = arith.cmpi ne, %10, %c0_i32_6 : i32
    scf.if %11 {
      %cst_39 = arith.constant 0.000000e+00 : f32
      %66 = vector.broadcast %cst_39 : f32 to vector<1x16x128xf32>
      %c17 = arith.constant 17 : index
      %c8_40 = arith.constant 8 : index
      %c0_41 = arith.constant 0 : index
      %67 = vector.load %arg11[%c17, %c8_40, %c0_41] : memref<18x25x128xf32, #tpu.memory_space<vmem>>, vector<1x16x128xf32>
      tpu.vector_store %arg11[%c17, %c8_40, %c0_41], %66 {strides = array<i32>} : memref<18x25x128xf32, #tpu.memory_space<vmem>>, vector<1x16x128xf32>,
    } else {
    }
    %c0_i32_7 = arith.constant 0 : i32
    %12 = arith.cmpi slt, %arg1, %c0_i32_7 : i32
    %13 = arith.extui %12 : i1 to i32
    %c0_i32_8 = arith.constant 0 : i32
    %14 = arith.cmpi ne, %13, %c0_i32_8 : i32
    scf.if %14 {
      %c0_39 = arith.constant 0 : index
      %c0_40 = arith.constant 0 : index
      %66 = vector.load %arg4[%c0_39, %c0_40] : memref<16x128xf32, #tpu.memory_space<vmem>>, vector<16x128xf32>
      %67 = vector.shape_cast %66 : vector<16x128xf32> to vector<1x16x128xf32>
      %c17 = arith.constant 17 : index
      %c8_41 = arith.constant 8 : index
      %c0_42 = arith.constant 0 : index
      %68 = vector.load %arg11[%c17, %c8_41, %c0_42] : memref<18x25x128xf32, #tpu.memory_space<vmem>>, vector<1x16x128xf32>
      tpu.vector_store %arg11[%c17, %c8_41, %c0_42], %67 {strides = array<i32>} : memref<18x25x128xf32, #tpu.memory_space<vmem>>, vector<1x16x128xf32>,
    } else {
    }
    %c0_9 = arith.constant 0 : index
    %c7 = arith.constant 7 : index
    %c0_10 = arith.constant 0 : index
    %15 = vector.load %arg11[%c0_9, %c7, %c0_10] : memref<18x25x128xf32, #tpu.memory_space<vmem>>, vector<18x16x128xf32>
    %16 = tpu.iota {dimensions = array<i32: 1>} : vector<1x16x1xi32>
    %c0_i32_11 = arith.constant 0 : i32
    %17 = vector.broadcast %c0_i32_11 : i32 to vector<1x16x1xi32>
    %18 = arith.cmpi eq, %16, %17 : vector<1x16x1xi32>
    %cst = arith.constant 0.000000e+00 : f32
    %19 = vector.shape_cast %18 : vector<1x16x1xi1> to vector<1x16x1xi1>
    %20 = vector.broadcast %19 : vector<1x16x1xi1> to vector<18x16x128xi1>
    %21 = vector.broadcast %cst : f32 to vector<18x16x128xf32>
    %22 = arith.select %20, %21, %15 : vector<18x16x128xi1>, vector<18x16x128xf32>
    %23 = vector.extract_strided_slice %22 {offsets = [0, 0, 0], sizes = [16, 16, 128], strides = [1, 1, 1]} : vector<18x16x128xf32> to vector<16x16x128xf32>
    %24 = vector.extract_strided_slice %22 {offsets = [1, 0, 0], sizes = [16, 16, 128], strides = [1, 1, 1]} : vector<18x16x128xf32> to vector<16x16x128xf32>
    %25 = vector.extract_strided_slice %22 {offsets = [2, 0, 0], sizes = [16, 16, 128], strides = [1, 1, 1]} : vector<18x16x128xf32> to vector<16x16x128xf32>
    %26 = tpu.concatenate %23, %24, %25 in 2 : vector<16x16x128xf32>, vector<16x16x128xf32>, vector<16x16x128xf32> -> vector<16x16x384xf32>
    %27 = vector.shape_cast %26 : vector<16x16x384xf32> to vector<256x384xf32>
    %c0_12 = arith.constant 0 : index
    %c0_13 = arith.constant 0 : index
    %c0_14 = arith.constant 0 : index
    %28 = vector.load %arg7[%c0_12, %c0_13, %c0_14] : memref<3x384x128xf32, #tpu.memory_space<vmem>>, vector<1x384x128xf32>
    %29 = vector.shape_cast %28 : vector<1x384x128xf32> to vector<384x128xf32>
    %cst_15 = arith.constant dense<0.000000e+00> : vector<256x128xf32>
    %30 = tpu.matmul %27, %29, %cst_15 {dimension_numbers = #tpu.dot_dimension_numbers<[1], [0], [0], [1], [0, 0, 1, 1], [], []>} : vector<256x384xf32>, vector<384x128xf32>, vector<256x128xf32> -> vector<256x128xf32>
    %c0_16 = arith.constant 0 : index
    %c8_17 = arith.constant 8 : index
    %c0_18 = arith.constant 0 : index
    %31 = vector.load %arg11[%c0_16, %c8_17, %c0_18] : memref<18x25x128xf32, #tpu.memory_space<vmem>>, vector<18x16x128xf32>
    %32 = vector.extract_strided_slice %31 {offsets = [0, 0, 0], sizes = [16, 16, 128], strides = [1, 1, 1]} : vector<18x16x128xf32> to vector<16x16x128xf32>
    %33 = vector.extract_strided_slice %31 {offsets = [1, 0, 0], sizes = [16, 16, 128], strides = [1, 1, 1]} : vector<18x16x128xf32> to vector<16x16x128xf32>
    %34 = vector.extract_strided_slice %31 {offsets = [2, 0, 0], sizes = [16, 16, 128], strides = [1, 1, 1]} : vector<18x16x128xf32> to vector<16x16x128xf32>
    %35 = tpu.concatenate %32, %33, %34 in 2 : vector<16x16x128xf32>, vector<16x16x128xf32>, vector<16x16x128xf32> -> vector<16x16x384xf32>
    %36 = vector.shape_cast %35 : vector<16x16x384xf32> to vector<256x384xf32>
    %c1_19 = arith.constant 1 : index
    %c0_20 = arith.constant 0 : index
    %c0_21 = arith.constant 0 : index
    %37 = vector.load %arg7[%c1_19, %c0_20, %c0_21] : memref<3x384x128xf32, #tpu.memory_space<vmem>>, vector<1x384x128xf32>
    %38 = vector.shape_cast %37 : vector<1x384x128xf32> to vector<384x128xf32>
    %cst_22 = arith.constant dense<0.000000e+00> : vector<256x128xf32>
    %39 = tpu.matmul %36, %38, %cst_22 {dimension_numbers = #tpu.dot_dimension_numbers<[1], [0], [0], [1], [0, 0, 1, 1], [], []>} : vector<256x384xf32>, vector<384x128xf32>, vector<256x128xf32> -> vector<256x128xf32>
    %40 = arith.addf %30, %39 : vector<256x128xf32>
    %c0_23 = arith.constant 0 : index
    %c9 = arith.constant 9 : index
    %c0_24 = arith.constant 0 : index
    %41 = vector.load %arg11[%c0_23, %c9, %c0_24] : memref<18x25x128xf32, #tpu.memory_space<vmem>>, vector<18x16x128xf32>
    %42 = tpu.iota {dimensions = array<i32: 1>} : vector<1x16x1xi32>
    %c15_i32 = arith.constant 15 : i32
    %43 = vector.broadcast %c15_i32 : i32 to vector<1x16x1xi32>
    %44 = arith.cmpi eq, %42, %43 : vector<1x16x1xi32>
    %cst_25 = arith.constant 0.000000e+00 : f32
    %45 = vector.shape_cast %44 : vector<1x16x1xi1> to vector<1x16x1xi1>
    %46 = vector.broadcast %45 : vector<1x16x1xi1> to vector<18x16x128xi1>
    %47 = vector.broadcast %cst_25 : f32 to vector<18x16x128xf32>
    %48 = arith.select %46, %47, %41 : vector<18x16x128xi1>, vector<18x16x128xf32>
    %49 = vector.extract_strided_slice %48 {offsets = [0, 0, 0], sizes = [16, 16, 128], strides = [1, 1, 1]} : vector<18x16x128xf32> to vector<16x16x128xf32>
    %50 = vector.extract_strided_slice %48 {offsets = [1, 0, 0], sizes = [16, 16, 128], strides = [1, 1, 1]} : vector<18x16x128xf32> to vector<16x16x128xf32>
    %51 = vector.extract_strided_slice %48 {offsets = [2, 0, 0], sizes = [16, 16, 128], strides = [1, 1, 1]} : vector<18x16x128xf32> to vector<16x16x128xf32>
    %52 = tpu.concatenate %49, %50, %51 in 2 : vector<16x16x128xf32>, vector<16x16x128xf32>, vector<16x16x128xf32> -> vector<16x16x384xf32>
    %53 = vector.shape_cast %52 : vector<16x16x384xf32> to vector<256x384xf32>
    %c2 = arith.constant 2 : index
    %c0_26 = arith.constant 0 : index
    %c0_27 = arith.constant 0 : index
    %54 = vector.load %arg7[%c2, %c0_26, %c0_27] : memref<3x384x128xf32, #tpu.memory_space<vmem>>, vector<1x384x128xf32>
    %55 = vector.shape_cast %54 : vector<1x384x128xf32> to vector<384x128xf32>
    %cst_28 = arith.constant dense<0.000000e+00> : vector<256x128xf32>
    %56 = tpu.matmul %53, %55, %cst_28 {dimension_numbers = #tpu.dot_dimension_numbers<[1], [0], [0], [1], [0, 0, 1, 1], [], []>} : vector<256x384xf32>, vector<384x128xf32>, vector<256x128xf32> -> vector<256x128xf32>
    %57 = arith.addf %40, %56 : vector<256x128xf32>
    %c0_29 = arith.constant 0 : index
    %c0_30 = arith.constant 0 : index
    %58 = vector.load %arg8[%c0_29, %c0_30] : memref<256x128xf32, #tpu.memory_space<vmem>>, vector<256x128xf32>
    tpu.vector_store %arg8[%c0_29, %c0_30], %57 {strides = array<i32>} : memref<256x128xf32, #tpu.memory_space<vmem>>, vector<256x128xf32>,
    %cst_31 = arith.constant dense<0.000000e+00> : vector<128xf32>
    %59 = vector.multi_reduction <add>, %57, %cst_31 [0] : vector<256x128xf32> to vector<128xf32>
    %60 = vector.shape_cast %59 : vector<128xf32> to vector<1x1x128xf32>
    %c0_32 = arith.constant 0 : index
    %c0_33 = arith.constant 0 : index
    %c0_34 = arith.constant 0 : index
    %61 = vector.load %arg9[%c0_32, %c0_33, %c0_34] : memref<1x1x128xf32, #tpu.memory_space<vmem>>, vector<1x1x128xf32>
    tpu.vector_store %arg9[%c0_32, %c0_33, %c0_34], %60 {strides = array<i32>} : memref<1x1x128xf32, #tpu.memory_space<vmem>>, vector<1x1x128xf32>,
    %62 = arith.mulf %57, %57 : vector<256x128xf32>
    %cst_35 = arith.constant dense<0.000000e+00> : vector<128xf32>
    %63 = vector.multi_reduction <add>, %62, %cst_35 [0] : vector<256x128xf32> to vector<128xf32>
    %64 = vector.shape_cast %63 : vector<128xf32> to vector<1x1x128xf32>
    %c0_36 = arith.constant 0 : index
    %c0_37 = arith.constant 0 : index
    %c0_38 = arith.constant 0 : index
    %65 = vector.load %arg10[%c0_36, %c0_37, %c0_38] : memref<1x1x128xf32, #tpu.memory_space<vmem>>, vector<1x1x128xf32>
    tpu.vector_store %arg10[%c0_36, %c0_37, %c0_38], %64 {strides = array<i32>} : memref<1x1x128xf32, #tpu.memory_space<vmem>>, vector<1x1x128xf32>,
    return
  }
  func.func @transform_0(%arg0: i32, %arg1: i32) -> (i32, i32) {
    %c1_i32 = arith.constant 1 : i32
    %0 = arith.muli %arg0, %c1_i32 : i32
    %1 = arith.addi %0, %arg1 : i32
    %c0_i32 = arith.constant 0 : i32
    %c0_i32_0 = arith.constant 0 : i32
    return %1, %c0_i32 : i32, i32
  }
  func.func @transform_1(%arg0: i32, %arg1: i32) -> (i32, i32) {
    %c16_i32 = arith.constant 16 : i32
    %0 = arith.muli %arg0, %c16_i32 : i32
    %c16_i32_0 = arith.constant 16 : i32
    %1 = arith.muli %arg1, %c16_i32_0 : i32
    %c1_i32 = arith.constant 1 : i32
    %2 = arith.subi %1, %c1_i32 : i32
    %c0_i32 = arith.constant 0 : i32
    %3 = arith.maxsi %2, %c0_i32 : i32
    %4 = arith.addi %0, %3 : i32
    %c0_i32_1 = arith.constant 0 : i32
    %c0_i32_2 = arith.constant 0 : i32
    return %4, %c0_i32_1 : i32, i32
  }
  func.func @transform_2(%arg0: i32, %arg1: i32) -> (i32, i32) {
    %c16_i32 = arith.constant 16 : i32
    %0 = arith.muli %arg0, %c16_i32 : i32
    %c1_i32 = arith.constant 1 : i32
    %1 = arith.addi %arg1, %c1_i32 : i32
    %c16_i32_0 = arith.constant 16 : i32
    %2 = arith.muli %1, %c16_i32_0 : i32
    %c15_i32 = arith.constant 15 : i32
    %3 = arith.minsi %2, %c15_i32 : i32
    %4 = arith.addi %0, %3 : i32
    %c0_i32 = arith.constant 0 : i32
    %c0_i32_1 = arith.constant 0 : i32
    return %4, %c0_i32 : i32, i32
  }
  func.func @transform_3(%arg0: i32, %arg1: i32) -> (i32, i32) {
    %c0_i32 = arith.constant 0 : i32
    %c0_i32_0 = arith.constant 0 : i32
    %c0_i32_1 = arith.constant 0 : i32
    return %c0_i32, %c0_i32_0 : i32, i32
  }
  func.func @transform_4(%arg0: i32, %arg1: i32) -> (i32, i32) {
    %c0_i32 = arith.constant 0 : i32
    %c0_i32_0 = arith.constant 0 : i32
    %c0_i32_1 = arith.constant 0 : i32
    return %c0_i32, %c0_i32_0 : i32, i32
  }
  func.func @transform_5(%arg0: i32, %arg1: i32) -> (i32, i32, i32) {
    %c0_i32 = arith.constant 0 : i32
    %c0_i32_0 = arith.constant 0 : i32
    %c0_i32_1 = arith.constant 0 : i32
    %c0_i32_2 = arith.constant 0 : i32
    return %c0_i32, %c0_i32_0, %c0_i32_1 : i32, i32, i32
  }
  func.func @transform_6(%arg0: i32, %arg1: i32) -> (i32, i32) {
    %c1_i32 = arith.constant 1 : i32
    %0 = arith.muli %arg0, %c1_i32 : i32
    %1 = arith.addi %0, %arg1 : i32
    %c0_i32 = arith.constant 0 : i32
    %c0_i32_0 = arith.constant 0 : i32
    return %1, %c0_i32 : i32, i32
  }
  func.func @transform_7(%arg0: i32, %arg1: i32) -> (i32, i32, i32) {
    %c1_i32 = arith.constant 1 : i32
    %0 = arith.muli %arg0, %c1_i32 : i32
    %1 = arith.addi %0, %arg1 : i32
    %c0_i32 = arith.constant 0 : i32
    %c0_i32_0 = arith.constant 0 : i32
    %c0_i32_1 = arith.constant 0 : i32
    return %1, %c0_i32, %c0_i32_0 : i32, i32, i32
  }
  func.func @transform_8(%arg0: i32, %arg1: i32) -> (i32, i32, i32) {
    %c1_i32 = arith.constant 1 : i32
    %0 = arith.muli %arg0, %c1_i32 : i32
    %1 = arith.addi %0, %arg1 : i32
    %c0_i32 = arith.constant 0 : i32
    %c0_i32_0 = arith.constant 0 : i32
    %c0_i32_1 = arith.constant 0 : i32
    return %1, %c0_i32, %c0_i32_0 : i32, i32, i32
  }
}

module attributes {stable_mosaic.version = 11 : i64} {
  func.func @_conv_bn_stats_kernel(%arg0: i32, %arg1: i32, %arg2: memref<256x128xf32, #tpu.memory_space<vmem>>, %arg3: memref<16x128xf32, #tpu.memory_space<vmem>>, %arg4: memref<16x128xf32, #tpu.memory_space<vmem>>, %arg5: memref<1x128xf32, #tpu.memory_space<vmem>>, %arg6: memref<1x128xf32, #tpu.memory_space<vmem>>, %arg7: memref<3x384x128xf32, #tpu.memory_space<vmem>>, %arg8: memref<256x128xf32, #tpu.memory_space<vmem>>, %arg9: memref<1x1x128xf32, #tpu.memory_space<vmem>>, %arg10: memref<1x1x128xf32, #tpu.memory_space<vmem>>, %arg11: memref<18x25x128xf32, #tpu.memory_space<vmem>>) attributes {dimension_semantics = [#tpu.dimension_semantics<parallel>, #tpu.dimension_semantics<parallel>], iteration_bounds = array<i64: 2, 1>, scalar_prefetch = 0 : i64, scratch_operands = 1 : i64, tpu.core_type = #tpu.core_type<tc>, window_params = [{transform_indices = @transform_0, window_bounds = array<i64: 256, 128>}, {transform_indices = @transform_1, window_bounds = array<i64: 16, 128>}, {transform_indices = @transform_2, window_bounds = array<i64: 16, 128>}, {pipeline_mode = #tpu.pipeline_mode<synchronous>, transform_indices = @transform_3, window_bounds = array<i64: 1, 128>}, {pipeline_mode = #tpu.pipeline_mode<synchronous>, transform_indices = @transform_4, window_bounds = array<i64: 1, 128>}, {pipeline_mode = #tpu.pipeline_mode<synchronous>, transform_indices = @transform_5, window_bounds = array<i64: 3, 384, 128>}, {transform_indices = @transform_6, window_bounds = array<i64: 256, 128>}, {transform_indices = @transform_7, window_bounds = array<i64: 1, 1, 128>}, {transform_indices = @transform_8, window_bounds = array<i64: 1, 1, 128>}]} {
    %c0 = arith.constant 0 : index
    %c0_0 = arith.constant 0 : index
    %0 = vector.load %arg2[%c0, %c0_0] : memref<256x128xf32, #tpu.memory_space<vmem>>, vector<256x128xf32>
    %c0_1 = arith.constant 0 : index
    %c0_2 = arith.constant 0 : index
    %1 = vector.load %arg5[%c0_1, %c0_2] : memref<1x128xf32, #tpu.memory_space<vmem>>, vector<1x128xf32>
    %2 = vector.broadcast %1 : vector<1x128xf32> to vector<256x128xf32>
    %3 = arith.mulf %0, %2 : vector<256x128xf32>
    %c0_3 = arith.constant 0 : index
    %c0_4 = arith.constant 0 : index
    %4 = vector.load %arg6[%c0_3, %c0_4] : memref<1x128xf32, #tpu.memory_space<vmem>>, vector<1x128xf32>
    %5 = vector.broadcast %4 : vector<1x128xf32> to vector<256x128xf32>
    %6 = arith.addf %3, %5 : vector<256x128xf32>
    %cst = arith.constant 0.000000e+00 : f32
    %7 = vector.broadcast %cst : f32 to vector<256x128xf32>
    %8 = arith.maximumf %6, %7 : vector<256x128xf32>
    %9 = vector.shape_cast %8 : vector<256x128xf32> to vector<16x16x128xf32>
    %c1 = arith.constant 1 : index
    %c8 = arith.constant 8 : index
    %c0_5 = arith.constant 0 : index
    %10 = vector.load %arg11[%c1, %c8, %c0_5] : memref<18x25x128xf32, #tpu.memory_space<vmem>>, vector<16x16x128xf32>
    tpu.vector_store %arg11[%c1, %c8, %c0_5], %9 {strides = array<i32>} : memref<18x25x128xf32, #tpu.memory_space<vmem>>, vector<16x16x128xf32>,
    %c0_i32 = arith.constant 0 : i32
    %11 = arith.cmpi eq, %arg1, %c0_i32 : i32
    %12 = arith.extui %11 : i1 to i32
    %c0_i32_6 = arith.constant 0 : i32
    %13 = arith.cmpi ne, %12, %c0_i32_6 : i32
    scf.if %13 {
      %cst_44 = arith.constant 0.000000e+00 : f32
      %74 = vector.broadcast %cst_44 : f32 to vector<1x16x128xf32>
      %c0_45 = arith.constant 0 : index
      %c8_46 = arith.constant 8 : index
      %c0_47 = arith.constant 0 : index
      %75 = vector.load %arg11[%c0_45, %c8_46, %c0_47] : memref<18x25x128xf32, #tpu.memory_space<vmem>>, vector<1x16x128xf32>
      tpu.vector_store %arg11[%c0_45, %c8_46, %c0_47], %74 {strides = array<i32>} : memref<18x25x128xf32, #tpu.memory_space<vmem>>, vector<1x16x128xf32>,
    } else {
    }
    %c0_i32_7 = arith.constant 0 : i32
    %14 = arith.cmpi sgt, %arg1, %c0_i32_7 : i32
    %15 = arith.extui %14 : i1 to i32
    %c0_i32_8 = arith.constant 0 : i32
    %16 = arith.cmpi ne, %15, %c0_i32_8 : i32
    scf.if %16 {
      %c0_44 = arith.constant 0 : index
      %c0_45 = arith.constant 0 : index
      %74 = vector.load %arg3[%c0_44, %c0_45] : memref<16x128xf32, #tpu.memory_space<vmem>>, vector<16x128xf32>
      %c0_46 = arith.constant 0 : index
      %c0_47 = arith.constant 0 : index
      %75 = vector.load %arg5[%c0_46, %c0_47] : memref<1x128xf32, #tpu.memory_space<vmem>>, vector<1x128xf32>
      %76 = vector.broadcast %75 : vector<1x128xf32> to vector<16x128xf32>
      %77 = arith.mulf %74, %76 : vector<16x128xf32>
      %c0_48 = arith.constant 0 : index
      %c0_49 = arith.constant 0 : index
      %78 = vector.load %arg6[%c0_48, %c0_49] : memref<1x128xf32, #tpu.memory_space<vmem>>, vector<1x128xf32>
      %79 = vector.broadcast %78 : vector<1x128xf32> to vector<16x128xf32>
      %80 = arith.addf %77, %79 : vector<16x128xf32>
      %cst_50 = arith.constant 0.000000e+00 : f32
      %81 = vector.broadcast %cst_50 : f32 to vector<16x128xf32>
      %82 = arith.maximumf %80, %81 : vector<16x128xf32>
      %83 = vector.shape_cast %82 : vector<16x128xf32> to vector<1x16x128xf32>
      %c0_51 = arith.constant 0 : index
      %c8_52 = arith.constant 8 : index
      %c0_53 = arith.constant 0 : index
      %84 = vector.load %arg11[%c0_51, %c8_52, %c0_53] : memref<18x25x128xf32, #tpu.memory_space<vmem>>, vector<1x16x128xf32>
      tpu.vector_store %arg11[%c0_51, %c8_52, %c0_53], %83 {strides = array<i32>} : memref<18x25x128xf32, #tpu.memory_space<vmem>>, vector<1x16x128xf32>,
    } else {
    }
    %c0_i32_9 = arith.constant 0 : i32
    %17 = arith.cmpi eq, %arg1, %c0_i32_9 : i32
    %18 = arith.extui %17 : i1 to i32
    %c0_i32_10 = arith.constant 0 : i32
    %19 = arith.cmpi ne, %18, %c0_i32_10 : i32
    scf.if %19 {
      %cst_44 = arith.constant 0.000000e+00 : f32
      %74 = vector.broadcast %cst_44 : f32 to vector<1x16x128xf32>
      %c17 = arith.constant 17 : index
      %c8_45 = arith.constant 8 : index
      %c0_46 = arith.constant 0 : index
      %75 = vector.load %arg11[%c17, %c8_45, %c0_46] : memref<18x25x128xf32, #tpu.memory_space<vmem>>, vector<1x16x128xf32>
      tpu.vector_store %arg11[%c17, %c8_45, %c0_46], %74 {strides = array<i32>} : memref<18x25x128xf32, #tpu.memory_space<vmem>>, vector<1x16x128xf32>,
    } else {
    }
    %c0_i32_11 = arith.constant 0 : i32
    %20 = arith.cmpi slt, %arg1, %c0_i32_11 : i32
    %21 = arith.extui %20 : i1 to i32
    %c0_i32_12 = arith.constant 0 : i32
    %22 = arith.cmpi ne, %21, %c0_i32_12 : i32
    scf.if %22 {
      %c0_44 = arith.constant 0 : index
      %c0_45 = arith.constant 0 : index
      %74 = vector.load %arg4[%c0_44, %c0_45] : memref<16x128xf32, #tpu.memory_space<vmem>>, vector<16x128xf32>
      %c0_46 = arith.constant 0 : index
      %c0_47 = arith.constant 0 : index
      %75 = vector.load %arg5[%c0_46, %c0_47] : memref<1x128xf32, #tpu.memory_space<vmem>>, vector<1x128xf32>
      %76 = vector.broadcast %75 : vector<1x128xf32> to vector<16x128xf32>
      %77 = arith.mulf %74, %76 : vector<16x128xf32>
      %c0_48 = arith.constant 0 : index
      %c0_49 = arith.constant 0 : index
      %78 = vector.load %arg6[%c0_48, %c0_49] : memref<1x128xf32, #tpu.memory_space<vmem>>, vector<1x128xf32>
      %79 = vector.broadcast %78 : vector<1x128xf32> to vector<16x128xf32>
      %80 = arith.addf %77, %79 : vector<16x128xf32>
      %cst_50 = arith.constant 0.000000e+00 : f32
      %81 = vector.broadcast %cst_50 : f32 to vector<16x128xf32>
      %82 = arith.maximumf %80, %81 : vector<16x128xf32>
      %83 = vector.shape_cast %82 : vector<16x128xf32> to vector<1x16x128xf32>
      %c17 = arith.constant 17 : index
      %c8_51 = arith.constant 8 : index
      %c0_52 = arith.constant 0 : index
      %84 = vector.load %arg11[%c17, %c8_51, %c0_52] : memref<18x25x128xf32, #tpu.memory_space<vmem>>, vector<1x16x128xf32>
      tpu.vector_store %arg11[%c17, %c8_51, %c0_52], %83 {strides = array<i32>} : memref<18x25x128xf32, #tpu.memory_space<vmem>>, vector<1x16x128xf32>,
    } else {
    }
    %c0_13 = arith.constant 0 : index
    %c7 = arith.constant 7 : index
    %c0_14 = arith.constant 0 : index
    %23 = vector.load %arg11[%c0_13, %c7, %c0_14] : memref<18x25x128xf32, #tpu.memory_space<vmem>>, vector<18x16x128xf32>
    %24 = tpu.iota {dimensions = array<i32: 1>} : vector<1x16x1xi32>
    %c0_i32_15 = arith.constant 0 : i32
    %25 = vector.broadcast %c0_i32_15 : i32 to vector<1x16x1xi32>
    %26 = arith.cmpi eq, %24, %25 : vector<1x16x1xi32>
    %cst_16 = arith.constant 0.000000e+00 : f32
    %27 = vector.shape_cast %26 : vector<1x16x1xi1> to vector<1x16x1xi1>
    %28 = vector.broadcast %27 : vector<1x16x1xi1> to vector<18x16x128xi1>
    %29 = vector.broadcast %cst_16 : f32 to vector<18x16x128xf32>
    %30 = arith.select %28, %29, %23 : vector<18x16x128xi1>, vector<18x16x128xf32>
    %31 = vector.extract_strided_slice %30 {offsets = [0, 0, 0], sizes = [16, 16, 128], strides = [1, 1, 1]} : vector<18x16x128xf32> to vector<16x16x128xf32>
    %32 = vector.extract_strided_slice %30 {offsets = [1, 0, 0], sizes = [16, 16, 128], strides = [1, 1, 1]} : vector<18x16x128xf32> to vector<16x16x128xf32>
    %33 = vector.extract_strided_slice %30 {offsets = [2, 0, 0], sizes = [16, 16, 128], strides = [1, 1, 1]} : vector<18x16x128xf32> to vector<16x16x128xf32>
    %34 = tpu.concatenate %31, %32, %33 in 2 : vector<16x16x128xf32>, vector<16x16x128xf32>, vector<16x16x128xf32> -> vector<16x16x384xf32>
    %35 = vector.shape_cast %34 : vector<16x16x384xf32> to vector<256x384xf32>
    %c0_17 = arith.constant 0 : index
    %c0_18 = arith.constant 0 : index
    %c0_19 = arith.constant 0 : index
    %36 = vector.load %arg7[%c0_17, %c0_18, %c0_19] : memref<3x384x128xf32, #tpu.memory_space<vmem>>, vector<1x384x128xf32>
    %37 = vector.shape_cast %36 : vector<1x384x128xf32> to vector<384x128xf32>
    %cst_20 = arith.constant dense<0.000000e+00> : vector<256x128xf32>
    %38 = tpu.matmul %35, %37, %cst_20 {dimension_numbers = #tpu.dot_dimension_numbers<[1], [0], [0], [1], [0, 0, 1, 1], [], []>} : vector<256x384xf32>, vector<384x128xf32>, vector<256x128xf32> -> vector<256x128xf32>
    %c0_21 = arith.constant 0 : index
    %c8_22 = arith.constant 8 : index
    %c0_23 = arith.constant 0 : index
    %39 = vector.load %arg11[%c0_21, %c8_22, %c0_23] : memref<18x25x128xf32, #tpu.memory_space<vmem>>, vector<18x16x128xf32>
    %40 = vector.extract_strided_slice %39 {offsets = [0, 0, 0], sizes = [16, 16, 128], strides = [1, 1, 1]} : vector<18x16x128xf32> to vector<16x16x128xf32>
    %41 = vector.extract_strided_slice %39 {offsets = [1, 0, 0], sizes = [16, 16, 128], strides = [1, 1, 1]} : vector<18x16x128xf32> to vector<16x16x128xf32>
    %42 = vector.extract_strided_slice %39 {offsets = [2, 0, 0], sizes = [16, 16, 128], strides = [1, 1, 1]} : vector<18x16x128xf32> to vector<16x16x128xf32>
    %43 = tpu.concatenate %40, %41, %42 in 2 : vector<16x16x128xf32>, vector<16x16x128xf32>, vector<16x16x128xf32> -> vector<16x16x384xf32>
    %44 = vector.shape_cast %43 : vector<16x16x384xf32> to vector<256x384xf32>
    %c1_24 = arith.constant 1 : index
    %c0_25 = arith.constant 0 : index
    %c0_26 = arith.constant 0 : index
    %45 = vector.load %arg7[%c1_24, %c0_25, %c0_26] : memref<3x384x128xf32, #tpu.memory_space<vmem>>, vector<1x384x128xf32>
    %46 = vector.shape_cast %45 : vector<1x384x128xf32> to vector<384x128xf32>
    %cst_27 = arith.constant dense<0.000000e+00> : vector<256x128xf32>
    %47 = tpu.matmul %44, %46, %cst_27 {dimension_numbers = #tpu.dot_dimension_numbers<[1], [0], [0], [1], [0, 0, 1, 1], [], []>} : vector<256x384xf32>, vector<384x128xf32>, vector<256x128xf32> -> vector<256x128xf32>
    %48 = arith.addf %38, %47 : vector<256x128xf32>
    %c0_28 = arith.constant 0 : index
    %c9 = arith.constant 9 : index
    %c0_29 = arith.constant 0 : index
    %49 = vector.load %arg11[%c0_28, %c9, %c0_29] : memref<18x25x128xf32, #tpu.memory_space<vmem>>, vector<18x16x128xf32>
    %50 = tpu.iota {dimensions = array<i32: 1>} : vector<1x16x1xi32>
    %c15_i32 = arith.constant 15 : i32
    %51 = vector.broadcast %c15_i32 : i32 to vector<1x16x1xi32>
    %52 = arith.cmpi eq, %50, %51 : vector<1x16x1xi32>
    %cst_30 = arith.constant 0.000000e+00 : f32
    %53 = vector.shape_cast %52 : vector<1x16x1xi1> to vector<1x16x1xi1>
    %54 = vector.broadcast %53 : vector<1x16x1xi1> to vector<18x16x128xi1>
    %55 = vector.broadcast %cst_30 : f32 to vector<18x16x128xf32>
    %56 = arith.select %54, %55, %49 : vector<18x16x128xi1>, vector<18x16x128xf32>
    %57 = vector.extract_strided_slice %56 {offsets = [0, 0, 0], sizes = [16, 16, 128], strides = [1, 1, 1]} : vector<18x16x128xf32> to vector<16x16x128xf32>
    %58 = vector.extract_strided_slice %56 {offsets = [1, 0, 0], sizes = [16, 16, 128], strides = [1, 1, 1]} : vector<18x16x128xf32> to vector<16x16x128xf32>
    %59 = vector.extract_strided_slice %56 {offsets = [2, 0, 0], sizes = [16, 16, 128], strides = [1, 1, 1]} : vector<18x16x128xf32> to vector<16x16x128xf32>
    %60 = tpu.concatenate %57, %58, %59 in 2 : vector<16x16x128xf32>, vector<16x16x128xf32>, vector<16x16x128xf32> -> vector<16x16x384xf32>
    %61 = vector.shape_cast %60 : vector<16x16x384xf32> to vector<256x384xf32>
    %c2 = arith.constant 2 : index
    %c0_31 = arith.constant 0 : index
    %c0_32 = arith.constant 0 : index
    %62 = vector.load %arg7[%c2, %c0_31, %c0_32] : memref<3x384x128xf32, #tpu.memory_space<vmem>>, vector<1x384x128xf32>
    %63 = vector.shape_cast %62 : vector<1x384x128xf32> to vector<384x128xf32>
    %cst_33 = arith.constant dense<0.000000e+00> : vector<256x128xf32>
    %64 = tpu.matmul %61, %63, %cst_33 {dimension_numbers = #tpu.dot_dimension_numbers<[1], [0], [0], [1], [0, 0, 1, 1], [], []>} : vector<256x384xf32>, vector<384x128xf32>, vector<256x128xf32> -> vector<256x128xf32>
    %65 = arith.addf %48, %64 : vector<256x128xf32>
    %c0_34 = arith.constant 0 : index
    %c0_35 = arith.constant 0 : index
    %66 = vector.load %arg8[%c0_34, %c0_35] : memref<256x128xf32, #tpu.memory_space<vmem>>, vector<256x128xf32>
    tpu.vector_store %arg8[%c0_34, %c0_35], %65 {strides = array<i32>} : memref<256x128xf32, #tpu.memory_space<vmem>>, vector<256x128xf32>,
    %cst_36 = arith.constant dense<0.000000e+00> : vector<128xf32>
    %67 = vector.multi_reduction <add>, %65, %cst_36 [0] : vector<256x128xf32> to vector<128xf32>
    %68 = vector.shape_cast %67 : vector<128xf32> to vector<1x1x128xf32>
    %c0_37 = arith.constant 0 : index
    %c0_38 = arith.constant 0 : index
    %c0_39 = arith.constant 0 : index
    %69 = vector.load %arg9[%c0_37, %c0_38, %c0_39] : memref<1x1x128xf32, #tpu.memory_space<vmem>>, vector<1x1x128xf32>
    tpu.vector_store %arg9[%c0_37, %c0_38, %c0_39], %68 {strides = array<i32>} : memref<1x1x128xf32, #tpu.memory_space<vmem>>, vector<1x1x128xf32>,
    %70 = arith.mulf %65, %65 : vector<256x128xf32>
    %cst_40 = arith.constant dense<0.000000e+00> : vector<128xf32>
    %71 = vector.multi_reduction <add>, %70, %cst_40 [0] : vector<256x128xf32> to vector<128xf32>
    %72 = vector.shape_cast %71 : vector<128xf32> to vector<1x1x128xf32>
    %c0_41 = arith.constant 0 : index
    %c0_42 = arith.constant 0 : index
    %c0_43 = arith.constant 0 : index
    %73 = vector.load %arg10[%c0_41, %c0_42, %c0_43] : memref<1x1x128xf32, #tpu.memory_space<vmem>>, vector<1x1x128xf32>
    tpu.vector_store %arg10[%c0_41, %c0_42, %c0_43], %72 {strides = array<i32>} : memref<1x1x128xf32, #tpu.memory_space<vmem>>, vector<1x1x128xf32>,
    return
  }
  func.func @transform_0(%arg0: i32, %arg1: i32) -> (i32, i32) {
    %c1_i32 = arith.constant 1 : i32
    %0 = arith.muli %arg0, %c1_i32 : i32
    %1 = arith.addi %0, %arg1 : i32
    %c0_i32 = arith.constant 0 : i32
    %c0_i32_0 = arith.constant 0 : i32
    return %1, %c0_i32 : i32, i32
  }
  func.func @transform_1(%arg0: i32, %arg1: i32) -> (i32, i32) {
    %c16_i32 = arith.constant 16 : i32
    %0 = arith.muli %arg0, %c16_i32 : i32
    %c16_i32_0 = arith.constant 16 : i32
    %1 = arith.muli %arg1, %c16_i32_0 : i32
    %c1_i32 = arith.constant 1 : i32
    %2 = arith.subi %1, %c1_i32 : i32
    %c0_i32 = arith.constant 0 : i32
    %3 = arith.maxsi %2, %c0_i32 : i32
    %4 = arith.addi %0, %3 : i32
    %c0_i32_1 = arith.constant 0 : i32
    %c0_i32_2 = arith.constant 0 : i32
    return %4, %c0_i32_1 : i32, i32
  }
  func.func @transform_2(%arg0: i32, %arg1: i32) -> (i32, i32) {
    %c16_i32 = arith.constant 16 : i32
    %0 = arith.muli %arg0, %c16_i32 : i32
    %c1_i32 = arith.constant 1 : i32
    %1 = arith.addi %arg1, %c1_i32 : i32
    %c16_i32_0 = arith.constant 16 : i32
    %2 = arith.muli %1, %c16_i32_0 : i32
    %c15_i32 = arith.constant 15 : i32
    %3 = arith.minsi %2, %c15_i32 : i32
    %4 = arith.addi %0, %3 : i32
    %c0_i32 = arith.constant 0 : i32
    %c0_i32_1 = arith.constant 0 : i32
    return %4, %c0_i32 : i32, i32
  }
  func.func @transform_3(%arg0: i32, %arg1: i32) -> (i32, i32) {
    %c0_i32 = arith.constant 0 : i32
    %c0_i32_0 = arith.constant 0 : i32
    %c0_i32_1 = arith.constant 0 : i32
    return %c0_i32, %c0_i32_0 : i32, i32
  }
  func.func @transform_4(%arg0: i32, %arg1: i32) -> (i32, i32) {
    %c0_i32 = arith.constant 0 : i32
    %c0_i32_0 = arith.constant 0 : i32
    %c0_i32_1 = arith.constant 0 : i32
    return %c0_i32, %c0_i32_0 : i32, i32
  }
  func.func @transform_5(%arg0: i32, %arg1: i32) -> (i32, i32, i32) {
    %c0_i32 = arith.constant 0 : i32
    %c0_i32_0 = arith.constant 0 : i32
    %c0_i32_1 = arith.constant 0 : i32
    %c0_i32_2 = arith.constant 0 : i32
    return %c0_i32, %c0_i32_0, %c0_i32_1 : i32, i32, i32
  }
  func.func @transform_6(%arg0: i32, %arg1: i32) -> (i32, i32) {
    %c1_i32 = arith.constant 1 : i32
    %0 = arith.muli %arg0, %c1_i32 : i32
    %1 = arith.addi %0, %arg1 : i32
    %c0_i32 = arith.constant 0 : i32
    %c0_i32_0 = arith.constant 0 : i32
    return %1, %c0_i32 : i32, i32
  }
  func.func @transform_7(%arg0: i32, %arg1: i32) -> (i32, i32, i32) {
    %c1_i32 = arith.constant 1 : i32
    %0 = arith.muli %arg0, %c1_i32 : i32
    %1 = arith.addi %0, %arg1 : i32
    %c0_i32 = arith.constant 0 : i32
    %c0_i32_0 = arith.constant 0 : i32
    %c0_i32_1 = arith.constant 0 : i32
    return %1, %c0_i32, %c0_i32_0 : i32, i32, i32
  }
  func.func @transform_8(%arg0: i32, %arg1: i32) -> (i32, i32, i32) {
    %c1_i32 = arith.constant 1 : i32
    %0 = arith.muli %arg0, %c1_i32 : i32
    %1 = arith.addi %0, %arg1 : i32
    %c0_i32 = arith.constant 0 : i32
    %c0_i32_0 = arith.constant 0 : i32
    %c0_i32_1 = arith.constant 0 : i32
    return %1, %c0_i32, %c0_i32_0 : i32, i32, i32
  }
}

</mosaic_0001>

<llo_original>
// kernel: double_conv.2
$region0: #{double_conv.2}
  #allocation0 [shape = 'u32[]', space=smem, size = 0x4, offset = 0x4, fixed_abs, tag = 'smem constant byte address 0x4 - core index']
  #allocation1 [shape = 'u32[144,128]{1,0:T(1,128)}', space=vmem, size = 0x12000, scoped, tag = 'internal scratch']
  #allocation2 [shape = 'f32[18,25,128]{2,1,0:T(8,128)}', space=vmem, size = 0x48000, scoped, tag = 'scratch operand']
  %s0 = inlined_call_operand.vmem [shape: f32[512,128], index: 0, kind: input, shape index: {}, may-alias: {0,1,2}]
  %s1 = inlined_call_operand.vmem [shape: f32[512,128], index: 1, kind: input, shape index: {}, may-alias: {0,1,2}]
  %s2 = inlined_call_operand.vmem [shape: f32[512,128], index: 2, kind: input, shape index: {}, may-alias: {0,1,2}]
  %s3 = inlined_call_operand.vmem [shape: f32[1,128], index: 3, kind: input, shape index: {}, may-alias: {3,4}]
  %s4 = inlined_call_operand.vmem [shape: f32[1,128], index: 4, kind: input, shape index: {}, may-alias: {3,4}]
  %s5 = inlined_call_operand.vmem [shape: f32[3,384,128], index: 5, kind: input, shape index: {}]
  %s6 = inlined_call_operand.vmem [shape: f32[512,128], index: 6, kind: output, shape index: {0}]
  %s7 = inlined_call_operand.vmem [shape: f32[2,1,128], index: 7, kind: output, shape index: {1}]
  %s8 = inlined_call_operand.vmem [shape: f32[2,1,128], index: 8, kind: output, shape index: {2}]
  %9 = xla_tuple %s6, %s7, %s8
  %s10 = sld [smem:[#allocation0]]
  $region89: #{double_conv.2} parent=0
    _
  %s12 = ssub.s32 1, %s10
  %s13 = scalar_select 0, %s12, %s10
  loop: start=0, step=1, limit=4
  $region2: #{double_conv.2} parent=0 // loop_pre_header
    _
  $region3: #{double_conv.2} parent=0 // loop_header
    %s15 = sphi 0, %s19
    %p16 = scmp.ge.s32.totalorder %s15, 4
    %s22 = sphi 0, %s34
    %s23 = sphi 0, %s30
    %s24 = sphi 0, %s22
    %s25 = sphi 0, %s23
    %s26 = sphi 0, %s24
    %s27 = sphi 0, %s25
    %s39 = sphi 0, %s41
    %s42 = sphi 0, %s39
    %s43 = sphi 0, %s42
    %s59 = sphi 0, %s43
    %s77 = sphi 0, %s79
    %s80 = sphi 0, %s77
    %s81 = sphi 0, %s80
    %s97 = sphi 0, %s81
    %s115 = sphi 0, %s117
    %s118 = sphi 0, %s115
    %s119 = sphi 0, %s118
    %s135 = sphi 0, %s119
    %s139 = sphi 0, %s139
    %s141 = sphi 0, %s139
    %s142 = sphi 0, %s141
    %s156 = sphi 0, %s142
    %s160 = sphi 0, %s160
    %s162 = sphi 0, %s160
    %s163 = sphi 0, %s162
    %s177 = sphi 0, %s163
    %s181 = sphi 0, %s181
    %s183 = sphi 0, %s181
    %s184 = sphi 0, %s183
    %s198 = sphi 0, %s184
    %s206 = sphi 0, %s208
    %s209 = sphi 0, %s206
    %s210 = sphi 0, %s209
    %s226 = sphi 0, %s210
    %s234 = sphi 0, %s236
    %s237 = sphi 0, %s234
    %s238 = sphi 0, %s237
    %s254 = sphi 0, %s238
    %s262 = sphi 0, %s264
    %s265 = sphi 0, %s262
    %s266 = sphi 0, %s265
    %s282 = sphi 0, %s266
  $region4: #{double_conv.2} parent=0 // loop_header_branch
    %18 = sbr.rel (%p16) target = $region8
  $region5: #{double_conv.2} parent=0 // loop_body
    %s20 = ssub.s32 %s15, 1
    %s21 = ssub.s32 %s15, 2
    %s28 = sadd.s32 1, %s23
    %p29 = scmp.ge.s32.totalorder %s28, 1
    %s30 = scalar_select %p29, 0, %s28
    %s31 = sadd.s32 1, %s22
    %s32 = scalar_select %p29, %s31, %s22
    %p33 = scmp.ge.s32.totalorder %s32, 2
    %s34 = scalar_select %p33, 0, %s32
    %s35 = sadd.s32 %s22, %s23
    %s36 = sadd.s32 %s34, %s30
    %s37 = ssub.s32 %s35, %s36
    %p38 = scmp.eq.s32.totalorder %s37, 0
    %s40 = sadd.s32 %s39, 1
    %s41 = scalar_select %p38, %s39, %s40
    %p44 = pneg %p38
    %p45 = scmp.eq.s32.totalorder %s15, 1
    %p46 = por %p44, %p45
    %p47 = scmp.ne.s32.totalorder %s39, %s42
    %p48 = scmp.eq.s32.totalorder %s15, 0
    %p49 = por %p47, %p48
    %p50 = scmp.ne.s32.totalorder %s39, %s42
    %p51 = scmp.eq.s32.totalorder %s20, 1
    %p52 = por %p50, %p51
    %p53 = scmp.ne.s32.totalorder %s42, %s43
    %p54 = scmp.eq.s32.totalorder %s20, 0
    %p55 = por %p53, %p54
    %p56 = scmp.ne.s32.totalorder %s42, %s43
    %p57 = scmp.eq.s32.totalorder %s21, 1
    %p58 = por %p56, %p57
    %p60 = scmp.ne.s32.totalorder %s43, %s59
    %p61 = scmp.eq.s32.totalorder %s21, 0
    %p62 = por %p60, %p61
    %s63 = smul.u32 %s22, 16
    %s64 = smul.u32 %s23, 16
    %s65 = ssub.s32 %s64, 1
    %p66 = scmp.gt.s32.totalorder %s65, 0
    %s67 = scalar_select %p66, %s65, 0
    %s68 = sadd.s32 %s63, %s67
    %s69 = smul.u32 %s34, 16
    %s70 = smul.u32 %s30, 16
    %s71 = ssub.s32 %s70, 1
    %p72 = scmp.gt.s32.totalorder %s71, 0
    %s73 = scalar_select %p72, %s71, 0
    %s74 = sadd.s32 %s69, %s73
    %s75 = ssub.s32 %s68, %s74
    %p76 = scmp.eq.s32.totalorder %s75, 0
    %s78 = sadd.s32 %s77, 1
    %s79 = scalar_select %p76, %s77, %s78
    %p82 = pneg %p76
    %p83 = scmp.eq.s32.totalorder %s15, 1
    %p84 = por %p82, %p83
    %p85 = scmp.ne.s32.totalorder %s77, %s80
    %p86 = scmp.eq.s32.totalorder %s15, 0
    %p87 = por %p85, %p86
    %p88 = scmp.ne.s32.totalorder %s77, %s80
    %p89 = scmp.eq.s32.totalorder %s20, 1
    %p90 = por %p88, %p89
    %p91 = scmp.ne.s32.totalorder %s80, %s81
    %p92 = scmp.eq.s32.totalorder %s20, 0
    %p93 = por %p91, %p92
    %p94 = scmp.ne.s32.totalorder %s80, %s81
    %p95 = scmp.eq.s32.totalorder %s21, 1
    %p96 = por %p94, %p95
    %p98 = scmp.ne.s32.totalorder %s81, %s97
    %p99 = scmp.eq.s32.totalorder %s21, 0
    %p100 = por %p98, %p99
    %s101 = smul.u32 %s22, 16
    %s102 = sadd.s32 %s23, 1
    %s103 = smul.u32 %s102, 16
    %p104 = scmp.lt.s32.totalorder %s103, 15
    %s105 = scalar_select %p104, %s103, 15
    %s106 = sadd.s32 %s101, %s105
    %s107 = smul.u32 %s34, 16
    %s108 = sadd.s32 %s30, 1
    %s109 = smul.u32 %s108, 16
    %p110 = scmp.lt.s32.totalorder %s109, 15
    %s111 = scalar_select %p110, %s109, 15
    %s112 = sadd.s32 %s107, %s111
    %s113 = ssub.s32 %s106, %s112
    %p114 = scmp.eq.s32.totalorder %s113, 0
    %s116 = sadd.s32 %s115, 1
    %s117 = scalar_select %p114, %s115, %s116
    %p120 = pneg %p114
    %p121 = scmp.eq.s32.totalorder %s15, 1
    %p122 = por %p120, %p121
    %p123 = scmp.ne.s32.totalorder %s115, %s118
    %p124 = scmp.eq.s32.totalorder %s15, 0
    %p125 = por %p123, %p124
    %p126 = scmp.ne.s32.totalorder %s115, %s118
    %p127 = scmp.eq.s32.totalorder %s20, 1
    %p128 = por %p126, %p127
    %p129 = scmp.ne.s32.totalorder %s118, %s119
    %p130 = scmp.eq.s32.totalorder %s20, 0
    %p131 = por %p129, %p130
    %p132 = scmp.ne.s32.totalorder %s118, %s119
    %p133 = scmp.eq.s32.totalorder %s21, 1
    %p134 = por %p132, %p133
    %p136 = scmp.ne.s32.totalorder %s119, %s135
    %p137 = scmp.eq.s32.totalorder %s21, 0
    %p138 = por %p136, %p137
    %s140 = sadd.s32 %s139, 1
    %p143 = scmp.eq.s32.totalorder %s15, 1
    %p144 = scmp.ne.s32.totalorder %s139, %s141
    %p145 = scmp.eq.s32.totalorder %s15, 0
    %p146 = por %p144, %p145
    %p147 = scmp.ne.s32.totalorder %s139, %s141
    %p148 = scmp.eq.s32.totalorder %s20, 1
    %p149 = por %p147, %p148
    %p150 = scmp.ne.s32.totalorder %s141, %s142
    %p151 = scmp.eq.s32.totalorder %s20, 0
    %p152 = por %p150, %p151
    %p153 = scmp.ne.s32.totalorder %s141, %s142
    %p154 = scmp.eq.s32.totalorder %s21, 1
    %p155 = por %p153, %p154
    %p157 = scmp.ne.s32.totalorder %s142, %s156
    %p158 = scmp.eq.s32.totalorder %s21, 0
    %p159 = por %p157, %p158
    %s161 = sadd.s32 %s160, 1
    %p164 = scmp.eq.s32.totalorder %s15, 1
    %p165 = scmp.ne.s32.totalorder %s160, %s162
    %p166 = scmp.eq.s32.totalorder %s15, 0
    %p167 = por %p165, %p166
    %p168 = scmp.ne.s32.totalorder %s160, %s162
    %p169 = scmp.eq.s32.totalorder %s20, 1
    %p170 = por %p168, %p169
    %p171 = scmp.ne.s32.totalorder %s162, %s163
    %p172 = scmp.eq.s32.totalorder %s20, 0
    %p173 = por %p171, %p172
    %p174 = scmp.ne.s32.totalorder %s162, %s163
    %p175 = scmp.eq.s32.totalorder %s21, 1
    %p176 = por %p174, %p175
    %p178 = scmp.ne.s32.totalorder %s163, %s177
    %p179 = scmp.eq.s32.totalorder %s21, 0
    %p180 = por %p178, %p179
    %s182 = sadd.s32 %s181, 1
    %p185 = scmp.eq.s32.totalorder %s15, 1
    %p186 = scmp.ne.s32.totalorder %s181, %s183
    %p187 = scmp.eq.s32.totalorder %s15, 0
    %p188 = por %p186, %p187
    %p189 = scmp.ne.s32.totalorder %s181, %s183
    %p190 = scmp.eq.s32.totalorder %s20, 1
    %p191 = por %p189, %p190
    %p192 = scmp.ne.s32.totalorder %s183, %s184
    %p193 = scmp.eq.s32.totalorder %s20, 0
    %p194 = por %p192, %p193
    %p195 = scmp.ne.s32.totalorder %s183, %s184
    %p196 = scmp.eq.s32.totalorder %s21, 1
    %p197 = por %p195, %p196
    %p199 = scmp.ne.s32.totalorder %s184, %s198
    %p200 = scmp.eq.s32.totalorder %s21, 0
    %p201 = por %p199, %p200
    %s202 = sadd.s32 %s22, %s23
    %s203 = sadd.s32 %s34, %s30
    %s204 = ssub.s32 %s202, %s203
    %p205 = scmp.eq.s32.totalorder %s204, 0
    %s207 = sadd.s32 %s206, 1
    %s208 = scalar_select %p205, %s206, %s207
    %p211 = pneg %p205
    %p212 = scmp.eq.s32.totalorder %s15, 1
    %p213 = por %p211, %p212
    %p214 = scmp.ne.s32.totalorder %s206, %s209
    %p215 = scmp.eq.s32.totalorder %s15, 0
    %p216 = por %p214, %p215
    %p217 = scmp.ne.s32.totalorder %s206, %s209
    %p218 = scmp.eq.s32.totalorder %s20, 1
    %p219 = por %p217, %p218
    %p220 = scmp.ne.s32.totalorder %s209, %s210
    %p221 = scmp.eq.s32.totalorder %s20, 0
    %p222 = por %p220, %p221
    %p223 = scmp.ne.s32.totalorder %s209, %s210
    %p224 = scmp.eq.s32.totalorder %s21, 1
    %p225 = por %p223, %p224
    %p227 = scmp.ne.s32.totalorder %s210, %s226
    %p228 = scmp.eq.s32.totalorder %s21, 0
    %p229 = por %p227, %p228
    %s230 = sadd.s32 %s22, %s23
    %s231 = sadd.s32 %s34, %s30
    %s232 = ssub.s32 %s230, %s231
    %p233 = scmp.eq.s32.totalorder %s232, 0
    %s235 = sadd.s32 %s234, 1
    %s236 = scalar_select %p233, %s234, %s235
    %p239 = pneg %p233
    %p240 = scmp.eq.s32.totalorder %s15, 1
    %p241 = por %p239, %p240
    %p242 = scmp.ne.s32.totalorder %s234, %s237
    %p243 = scmp.eq.s32.totalorder %s15, 0
    %p244 = por %p242, %p243
    %p245 = scmp.ne.s32.totalorder %s234, %s237
    %p246 = scmp.eq.s32.totalorder %s20, 1
    %p247 = por %p245, %p246
    %p248 = scmp.ne.s32.totalorder %s237, %s238
    %p249 = scmp.eq.s32.totalorder %s20, 0
    %p250 = por %p248, %p249
    %p251 = scmp.ne.s32.totalorder %s237, %s238
    %p252 = scmp.eq.s32.totalorder %s21, 1
    %p253 = por %p251, %p252
    %p255 = scmp.ne.s32.totalorder %s238, %s254
    %p256 = scmp.eq.s32.totalorder %s21, 0
    %p257 = por %p255, %p256
    %s258 = sadd.s32 %s22, %s23
    %s259 = sadd.s32 %s34, %s30
    %s260 = ssub.s32 %s258, %s259
    %p261 = scmp.eq.s32.totalorder %s260, 0
    %s263 = sadd.s32 %s262, 1
    %s264 = scalar_select %p261, %s262, %s263
    %p267 = pneg %p261
    %p268 = scmp.eq.s32.totalorder %s15, 1
    %p269 = por %p267, %p268
    %p270 = scmp.ne.s32.totalorder %s262, %s265
    %p271 = scmp.eq.s32.totalorder %s15, 0
    %p272 = por %p270, %p271
    %p273 = scmp.ne.s32.totalorder %s262, %s265
    %p274 = scmp.eq.s32.totalorder %s20, 1
    %p275 = por %p273, %p274
    %p276 = scmp.ne.s32.totalorder %s265, %s266
    %p277 = scmp.eq.s32.totalorder %s20, 0
    %p278 = por %p276, %p277
    %p279 = scmp.ne.s32.totalorder %s265, %s266
    %p280 = scmp.eq.s32.totalorder %s21, 1
    %p281 = por %p279, %p280
    %p283 = scmp.ne.s32.totalorder %s266, %s282
    %p284 = scmp.eq.s32.totalorder %s21, 0
    %p285 = por %p283, %p284
    %p286 = scmp.le.s32.totalorder 1, %s15
    %p287 = scmp.lt.s32.totalorder %s15, 3
    %p288 = pnand %p286, %p287
    %p289 = pneg %p288
    // Predicated region
    $region9: #{double_conv.2} parent=5 // pred_check
      _
    $region10: #{double_conv.2} parent=5 // pred_check_branch
      %291 = sbr.rel (%p288) target = $region12
    $region11: #{double_conv.2} parent=5 // pred_region
      %s292 = ssub.s32 %s15, 1
      // Predicated region
      $region13: #{double_conv.2} parent=11 // pred_check
        %p293 = pneg %p152
      $region14: #{double_conv.2} parent=11 // pred_check_branch
        %295 = sbr.rel (%p293) target = $region16
      $region15: #{double_conv.2} parent=11 // pred_region
        _
      $region16: #{double_conv.2} parent=11 // pred_fallthru
        _
      // Predicated region
      $region17: #{double_conv.2} parent=11 // pred_check
        %p296 = pneg %p173
      $region18: #{double_conv.2} parent=11 // pred_check_branch
        %298 = sbr.rel (%p296) target = $region20
      $region19: #{double_conv.2} parent=11 // pred_region
        _
      $region20: #{double_conv.2} parent=11 // pred_fallthru
        _
      // Predicated region
      $region21: #{double_conv.2} parent=11 // pred_check
        %p299 = pneg %p194
      $region22: #{double_conv.2} parent=11 // pred_check_branch
        %301 = sbr.rel (%p299) target = $region24
      $region23: #{double_conv.2} parent=11 // pred_region
        _
      $region24: #{double_conv.2} parent=11 // pred_fallthru
        _
    $region12: #{double_conv.2} parent=5 // pred_fallthru
      _
    %p302 = scmp.lt.s32.totalorder %s15, 2
    // Predicated region
    $region25: #{double_conv.2} parent=5 // pred_check
      %p303 = pneg %p302
    $region26: #{double_conv.2} parent=5 // pred_check_branch
      %305 = sbr.rel (%p303) target = $region28
    $region27: #{double_conv.2} parent=5 // pred_region
      // Predicated region
      $region29: #{double_conv.2} parent=27 // pred_check
        %p306 = pneg %p49
      $region30: #{double_conv.2} parent=27 // pred_check_branch
        %308 = sbr.rel (%p306) target = $region32
      $region31: #{double_conv.2} parent=27 // pred_region
        %s309 = sadd.s32 %s22, %s23
        %s310 = smul.u32 32, %s309
        %p311 = scmp.lt.s32.totalorder %s310, 63
        %s312 = scalar_select %p311, %s310, 63
        %s313 = smul.addr %s312, 8
        %s314 = scalar_lea.vmem %s0, %s313
        %s315 = sadd.s32 %s22, %s23
        %s316 = smul.u32 32, %s315
      $region32: #{double_conv.2} parent=27 // pred_fallthru
        _
      // Predicated region
      $region33: #{double_conv.2} parent=27 // pred_check
        %p317 = pneg %p87
      $region34: #{double_conv.2} parent=27 // pred_check_branch
        %319 = sbr.rel (%p317) target = $region36
      $region35: #{double_conv.2} parent=27 // pred_region
        %s320 = smul.u32 %s22, 16
        %s321 = smul.u32 %s23, 16
        %s322 = ssub.s32 %s321, 1
        %p323 = scmp.gt.s32.totalorder %s322, 0
        %s324 = scalar_select %p323, %s322, 0
        %s325 = sadd.s32 %s320, %s324
        %s326 = smul.u32 2, %s325
        %p327 = scmp.lt.s32.totalorder %s326, 63
        %s328 = scalar_select %p327, %s326, 63
        %s329 = smul.addr %s328, 8
        %s330 = scalar_lea.vmem %s1, %s329
        %s331 = smul.u32 %s22, 16
        %s332 = smul.u32 %s23, 16
        %s333 = ssub.s32 %s332, 1
        %p334 = scmp.gt.s32.totalorder %s333, 0
        %s335 = scalar_select %p334, %s333, 0
        %s336 = sadd.s32 %s331, %s335
        %s337 = smul.u32 2, %s336
      $region36: #{double_conv.2} parent=27 // pred_fallthru
        _
      // Predicated region
      $region37: #{double_conv.2} parent=27 // pred_check
        %p338 = pneg %p125
      $region38: #{double_conv.2} parent=27 // pred_check_branch
        %340 = sbr.rel (%p338) target = $region40
      $region39: #{double_conv.2} parent=27 // pred_region
        %s341 = smul.u32 %s22, 16
        %s342 = sadd.s32 %s23, 1
        %s343 = smul.u32 %s342, 16
        %p344 = scmp.lt.s32.totalorder %s343, 15
        %s345 = scalar_select %p344, %s343, 15
        %s346 = sadd.s32 %s341, %s345
        %s347 = smul.u32 2, %s346
        %p348 = scmp.lt.s32.totalorder %s347, 63
        %s349 = scalar_select %p348, %s347, 63
        %s350 = smul.addr %s349, 8
        %s351 = scalar_lea.vmem %s2, %s350
        %s352 = smul.u32 %s22, 16
        %s353 = sadd.s32 %s23, 1
        %s354 = smul.u32 %s353, 16
        %p355 = scmp.lt.s32.totalorder %s354, 15
        %s356 = scalar_select %p355, %s354, 15
        %s357 = sadd.s32 %s352, %s356
        %s358 = smul.u32 2, %s357
      $region40: #{double_conv.2} parent=27 // pred_fallthru
        _
    $region28: #{double_conv.2} parent=5 // pred_fallthru
      _
    %p359 = scmp.le.s32.totalorder 1, %s15
    %p360 = scmp.lt.s32.totalorder %s15, 3
    %p361 = pnand %p359, %p360
    %p362 = pneg %p361
    // Predicated region
    $region41: #{double_conv.2} parent=5 // pred_check
      _
    $region42: #{double_conv.2} parent=5 // pred_check_branch
      %364 = sbr.rel (%p361) target = $region44
    $region43: #{double_conv.2} parent=5 // pred_region
      %s365 = ssub.s32 %s15, 1
      %s366 = sadd.s32 %s24, %s25
      %s367 = smul.u32 32, %s366
      %p368 = scmp.lt.s32.totalorder %s367, 63
      %s369 = scalar_select %p368, %s367, 63
      %s370 = smul.addr %s369, 8
      %s371 = scalar_lea.vmem %s0, %s370
      %p372 = pneg %p55
      %p373 = pneg %p52
      %s374 = smul.u32 %s24, 16
      %s375 = smul.u32 %s25, 16
      %s376 = ssub.s32 %s375, 1
      %p377 = scmp.gt.s32.totalorder %s376, 0
      %s378 = scalar_select %p377, %s376, 0
      %s379 = sadd.s32 %s374, %s378
      %s380 = smul.u32 2, %s379
      %p381 = scmp.lt.s32.totalorder %s380, 63
      %s382 = scalar_select %p381, %s380, 63
      %s383 = smul.addr %s382, 8
      %s384 = scalar_lea.vmem %s1, %s383
      %p385 = pneg %p93
      %p386 = pneg %p90
      %s387 = smul.u32 %s24, 16
      %s388 = sadd.s32 %s25, 1
      %s389 = smul.u32 %s388, 16
      %p390 = scmp.lt.s32.totalorder %s389, 15
      %s391 = scalar_select %p390, %s389, 15
      %s392 = sadd.s32 %s387, %s391
      %s393 = smul.u32 2, %s392
      %p394 = scmp.lt.s32.totalorder %s393, 63
      %s395 = scalar_select %p394, %s393, 63
      %s396 = smul.addr %s395, 8
      %s397 = scalar_lea.vmem %s2, %s396
      %p398 = pneg %p131
      %p399 = pneg %p128
      %p400 = pneg %p152
      %p401 = pneg %p149
      %p402 = pneg %p173
      %p403 = pneg %p170
      %p404 = pneg %p194
      %p405 = pneg %p191
      %p406 = pneg %p222
      %p407 = pneg %p219
      %s408 = sadd.s32 %s24, %s25
      %s409 = smul.u32 32, %s408
      %p410 = scmp.lt.s32.totalorder %s409, 63
      %s411 = scalar_select %p410, %s409, 63
      %s412 = smul.addr %s411, 8
      %s413 = scalar_lea.vmem %s6, %s412
      %p414 = pneg %p250
      %p415 = pneg %p247
      %s416 = sadd.s32 %s24, %s25
      %p417 = scmp.lt.s32.totalorder %s416, 1
      %s418 = scalar_select %p417, %s416, 1
      %s419 = scalar_lea.vmem %s7, %s418
      %p420 = pneg %p278
      %p421 = pneg %p275
      %s422 = sadd.s32 %s24, %s25
      %p423 = scmp.lt.s32.totalorder %s422, 1
      %s424 = scalar_select %p423, %s422, 1
      %s425 = scalar_lea.vmem %s8, %s424
      %s426 = sadd.s32 %s24, %s25
      %s427 = smul.u32 32, %s426
      %p428 = scmp.lt.s32.totalorder %s427, 63
      %s429 = scalar_select %p428, %s427, 63
      %s430 = smul.addr %s429, 8
      %s431 = scalar_lea.vmem %s0, %s430
      %s432 = sadd.s32 %s24, %s25
      %s433 = smul.u32 32, %s432
      %s434 = smul.u32 %s24, 16
      %s435 = smul.u32 %s25, 16
      %s436 = ssub.s32 %s435, 1
      %p437 = scmp.gt.s32.totalorder %s436, 0
      %s438 = scalar_select %p437, %s436, 0
      %s439 = sadd.s32 %s434, %s438
      %s440 = smul.u32 2, %s439
      %p441 = scmp.lt.s32.totalorder %s440, 63
      %s442 = scalar_select %p441, %s440, 63
      %s443 = smul.addr %s442, 8
      %s444 = scalar_lea.vmem %s1, %s443
      %s445 = smul.u32 %s24, 16
      %s446 = smul.u32 %s25, 16
      %s447 = ssub.s32 %s446, 1
      %p448 = scmp.gt.s32.totalorder %s447, 0
      %s449 = scalar_select %p448, %s447, 0
      %s450 = sadd.s32 %s445, %s449
      %s451 = smul.u32 2, %s450
      %s452 = smul.u32 %s24, 16
      %s453 = sadd.s32 %s25, 1
      %s454 = smul.u32 %s453, 16
      %p455 = scmp.lt.s32.totalorder %s454, 15
      %s456 = scalar_select %p455, %s454, 15
      %s457 = sadd.s32 %s452, %s456
      %s458 = smul.u32 2, %s457
      %p459 = scmp.lt.s32.totalorder %s458, 63
      %s460 = scalar_select %p459, %s458, 63
      %s461 = smul.addr %s460, 8
      %s462 = scalar_lea.vmem %s2, %s461
      %s463 = smul.u32 %s24, 16
      %s464 = sadd.s32 %s25, 1
      %s465 = smul.u32 %s464, 16
      %p466 = scmp.lt.s32.totalorder %s465, 15
      %s467 = scalar_select %p466, %s465, 15
      %s468 = sadd.s32 %s463, %s467
      %s469 = smul.u32 2, %s468
      %s470 = sadd.s32 %s24, %s25
      %s471 = smul.u32 32, %s470
      %p472 = scmp.lt.s32.totalorder %s471, 63
      %s473 = scalar_select %p472, %s471, 63
      %s474 = smul.addr %s473, 8
      %s475 = scalar_lea.vmem %s6, %s474
      %s476 = sadd.s32 %s24, %s25
      %s477 = smul.u32 32, %s476
      %s478 = sadd.s32 %s24, %s25
      %p479 = scmp.lt.s32.totalorder %s478, 1
      %s480 = scalar_select %p479, %s478, 1
      %s481 = scalar_lea.vmem %s7, %s480
      %s482 = sadd.s32 %s24, %s25
      %s483 = sadd.s32 %s24, %s25
      %p484 = scmp.lt.s32.totalorder %s483, 1
      %s485 = scalar_select %p484, %s483, 1
      %s486 = scalar_lea.vmem %s8, %s485
      %s487 = sadd.s32 %s24, %s25
      %v488 = vld [vmem:[%s431] sm:$0xff]
      %v489 = vld [vmem:[%s431 + $0x8] sm:$0xff]
      %v490 = vld [vmem:[%s431 + $0x10] sm:$0xff]
      %v491 = vld [vmem:[%s431 + $0x18] sm:$0xff]
      %v492 = vld [vmem:[%s431 + $0x20] sm:$0xff]
      %v493 = vld [vmem:[%s431 + $0x28] sm:$0xff]
      %v494 = vld [vmem:[%s431 + $0x30] sm:$0xff]
      %v495 = vld [vmem:[%s431 + $0x38] sm:$0xff]
      %v496 = vld [vmem:[%s431 + $0x40] sm:$0xff]
      %v497 = vld [vmem:[%s431 + $0x48] sm:$0xff]
      %v498 = vld [vmem:[%s431 + $0x50] sm:$0xff]
      %v499 = vld [vmem:[%s431 + $0x58] sm:$0xff]
      %v500 = vld [vmem:[%s431 + $0x60] sm:$0xff]
      %v501 = vld [vmem:[%s431 + $0x68] sm:$0xff]
      %v502 = vld [vmem:[%s431 + $0x70] sm:$0xff]
      %v503 = vld [vmem:[%s431 + $0x78] sm:$0xff]
      %v504 = vld [vmem:[%s431 + $0x80] sm:$0xff]
      %v505 = vld [vmem:[%s431 + $0x88] sm:$0xff]
      %v506 = vld [vmem:[%s431 + $0x90] sm:$0xff]
      %v507 = vld [vmem:[%s431 + $0x98] sm:$0xff]
      %v508 = vld [vmem:[%s431 + $0xa0] sm:$0xff]
      %v509 = vld [vmem:[%s431 + $0xa8] sm:$0xff]
      %v510 = vld [vmem:[%s431 + $0xb0] sm:$0xff]
      %v511 = vld [vmem:[%s431 + $0xb8] sm:$0xff]
      %v512 = vld [vmem:[%s431 + $0xc0] sm:$0xff]
      %v513 = vld [vmem:[%s431 + $0xc8] sm:$0xff]
      %v514 = vld [vmem:[%s431 + $0xd0] sm:$0xff]
      %v515 = vld [vmem:[%s431 + $0xd8] sm:$0xff]
      %v516 = vld [vmem:[%s431 + $0xe0] sm:$0xff]
      %v517 = vld [vmem:[%s431 + $0xe8] sm:$0xff]
      %v518 = vld [vmem:[%s431 + $0xf0] sm:$0xff]
      %v519 = vld [vmem:[%s431 + $0xf8] sm:$0xff]
      %s520 = scalar_lea.vmem [#allocation2], 32
      %521 = vst [vmem:[%s520 + $0x8] sm:$0xff] %v488
      %522 = vst [vmem:[%s520 + $0x10] sm:$0xff] %v489
      %523 = vst [vmem:[%s520 + $0x28] sm:$0xff] %v490
      %524 = vst [vmem:[%s520 + $0x30] sm:$0xff] %v491
      %525 = vst [vmem:[%s520 + $0x48] sm:$0xff] %v492
      %526 = vst [vmem:[%s520 + $0x50] sm:$0xff] %v493
      %527 = vst [vmem:[%s520 + $0x68] sm:$0xff] %v494
      %528 = vst [vmem:[%s520 + $0x70] sm:$0xff] %v495
      %529 = vst [vmem:[%s520 + $0x88] sm:$0xff] %v496
      %530 = vst [vmem:[%s520 + $0x90] sm:$0xff] %v497
      %531 = vst [vmem:[%s520 + $0xa8] sm:$0xff] %v498
      %532 = vst [vmem:[%s520 + $0xb0] sm:$0xff] %v499
      %533 = vst [vmem:[%s520 + $0xc8] sm:$0xff] %v500
      %534 = vst [vmem:[%s520 + $0xd0] sm:$0xff] %v501
      %535 = vst [vmem:[%s520 + $0xe8] sm:$0xff] %v502
      %536 = vst [vmem:[%s520 + $0xf0] sm:$0xff] %v503
      %537 = vst [vmem:[%s520 + $0x108] sm:$0xff] %v504
      %538 = vst [vmem:[%s520 + $0x110] sm:$0xff] %v505
      %539 = vst [vmem:[%s520 + $0x128] sm:$0xff] %v506
      %540 = vst [vmem:[%s520 + $0x130] sm:$0xff] %v507
      %541 = vst [vmem:[%s520 + $0x148] sm:$0xff] %v508
      %542 = vst [vmem:[%s520 + $0x150] sm:$0xff] %v509
      %543 = vst [vmem:[%s520 + $0x168] sm:$0xff] %v510
      %544 = vst [vmem:[%s520 + $0x170] sm:$0xff] %v511
      %545 = vst [vmem:[%s520 + $0x188] sm:$0xff] %v512
      %546 = vst [vmem:[%s520 + $0x190] sm:$0xff] %v513
      %547 = vst [vmem:[%s520 + $0x1a8] sm:$0xff] %v514
      %548 = vst [vmem:[%s520 + $0x1b0] sm:$0xff] %v515
      %549 = vst [vmem:[%s520 + $0x1c8] sm:$0xff] %v516
      %550 = vst [vmem:[%s520 + $0x1d0] sm:$0xff] %v517
      %551 = vst [vmem:[%s520 + $0x1e8] sm:$0xff] %v518
      %552 = vst [vmem:[%s520 + $0x1f0] sm:$0xff] %v519
      %p553 = scmp.eq.s32.totalorder %s25, 0
      // Predicated region
      $region45: #{double_conv.2} parent=43 // pred_check
        %p554 = pneg %p553
      $region46: #{double_conv.2} parent=43 // pred_check_branch
        %556 = sbr.rel (%p554) target = $region48
      $region47: #{double_conv.2} parent=43 // pred_region
        %557 = vst [vmem:[#allocation2 + $0x8] sm:$0xff] 0.0
        %558 = vst [vmem:[#allocation2 + $0x10] sm:$0xff] 0.0
      $region48: #{double_conv.2} parent=43 // pred_fallthru
        _
      %p559 = scmp.gt.s32.totalorder %s25, 0
      // Predicated region
      $region49: #{double_conv.2} parent=43 // pred_check
        %p560 = pneg %p559
      $region50: #{double_conv.2} parent=43 // pred_check_branch
        %562 = sbr.rel (%p560) target = $region52
      $region51: #{double_conv.2} parent=43 // pred_region
        %v563 = vld [vmem:[%s444] sm:$0xff]
        %v564 = vld [vmem:[%s444 + $0x8] sm:$0xff]
        %565 = vst [vmem:[#allocation2 + $0x8] sm:$0xff] %v563
        %566 = vst [vmem:[#allocation2 + $0x10] sm:$0xff] %v564
      $region52: #{double_conv.2} parent=43 // pred_fallthru
        _
      // Predicated region
      $region53: #{double_conv.2} parent=43 // pred_check
        %p567 = pneg %p553
      $region54: #{double_conv.2} parent=43 // pred_check_branch
        %569 = sbr.rel (%p567) target = $region56
      $region55: #{double_conv.2} parent=43 // pred_region
        %s570 = scalar_lea.vmem [#allocation2], 544
        %571 = vst [vmem:[%s570 + $0x8] sm:$0xff] 0.0
        %572 = vst [vmem:[%s570 + $0x10] sm:$0xff] 0.0
      $region56: #{double_conv.2} parent=43 // pred_fallthru
        _
      %p573 = scmp.lt.s32.totalorder %s25, 0
      // Predicated region
      $region57: #{double_conv.2} parent=43 // pred_check
        %p574 = pneg %p573
      $region58: #{double_conv.2} parent=43 // pred_check_branch
        %576 = sbr.rel (%p574) target = $region60
      $region59: #{double_conv.2} parent=43 // pred_region
        %v577 = vld [vmem:[%s462] sm:$0xff]
        %v578 = vld [vmem:[%s462 + $0x8] sm:$0xff]
        %s579 = scalar_lea.vmem [#allocation2], 544
        %580 = vst [vmem:[%s579 + $0x8] sm:$0xff] %v577
        %581 = vst [vmem:[%s579 + $0x10] sm:$0xff] %v578
      $region60: #{double_conv.2} parent=43 // pred_fallthru
        _
      %v582 = vld [vmem:[#allocation2 + $0x7] sm:$0xff]
      %v583 = vld [vmem:[#allocation2 + $0xf] sm:$0xff]
      %v584 = vld [vmem:[#allocation2 + $0x27] sm:$0xff]
      %v585 = vld [vmem:[#allocation2 + $0x2f] sm:$0xff]
      %v586 = vld [vmem:[#allocation2 + $0x47] sm:$0xff]
      %v587 = vld [vmem:[#allocation2 + $0x4f] sm:$0xff]
      %v588 = vld [vmem:[#allocation2 + $0x67] sm:$0xff]
      %v589 = vld [vmem:[#allocation2 + $0x6f] sm:$0xff]
      %v590 = vld [vmem:[#allocation2 + $0x87] sm:$0xff]
      %v591 = vld [vmem:[#allocation2 + $0x8f] sm:$0xff]
      %v592 = vld [vmem:[#allocation2 + $0xa7] sm:$0xff]
      %v593 = vld [vmem:[#allocation2 + $0xaf] sm:$0xff]
      %v594 = vld [vmem:[#allocation2 + $0xc7] sm:$0xff]
      %v595 = vld [vmem:[#allocation2 + $0xcf] sm:$0xff]
      %v596 = vld [vmem:[#allocation2 + $0xe7] sm:$0xff]
      %v597 = vld [vmem:[#allocation2 + $0xef] sm:$0xff]
      %v598 = vld [vmem:[#allocation2 + $0x107] sm:$0xff]
      %v599 = vld [vmem:[#allocation2 + $0x10f] sm:$0xff]
      %v600 = vld [vmem:[#allocation2 + $0x127] sm:$0xff]
      %v601 = vld [vmem:[#allocation2 + $0x12f] sm:$0xff]
      %v602 = vld [vmem:[#allocation2 + $0x147] sm:$0xff]
      %v603 = vld [vmem:[#allocation2 + $0x14f] sm:$0xff]
      %v604 = vld [vmem:[#allocation2 + $0x167] sm:$0xff]
      %v605 = vld [vmem:[#allocation2 + $0x16f] sm:$0xff]
      %v606 = vld [vmem:[#allocation2 + $0x187] sm:$0xff]
      %v607 = vld [vmem:[#allocation2 + $0x18f] sm:$0xff]
      %v608 = vld [vmem:[#allocation2 + $0x1a7] sm:$0xff]
      %v609 = vld [vmem:[#allocation2 + $0x1af] sm:$0xff]
      %v610 = vld [vmem:[#allocation2 + $0x1c7] sm:$0xff]
      %v611 = vld [vmem:[#allocation2 + $0x1cf] sm:$0xff]
      %v612 = vld [vmem:[#allocation2 + $0x1e7] sm:$0xff]
      %v613 = vld [vmem:[#allocation2 + $0x1ef] sm:$0xff]
      %v614 = vld [vmem:[#allocation2 + $0x207] sm:$0xff]
      %v615 = vld [vmem:[#allocation2 + $0x20f] sm:$0xff]
      %v616 = vld [vmem:[#allocation2 + $0x227] sm:$0xff]
      %v617 = vld [vmem:[#allocation2 + $0x22f] sm:$0xff]
      %v618 = vlaneseq
      %v619 = vshrl.u32 %v618, 7
      %v620 = vadd.s32 %v619, 8
      %vm621 = vcmp.eq.s32.totalorder %v619, 0
      %vm622 = vcmp.eq.s32.totalorder %v620, 0
      %v623 = vsel %vm621, 1, 0
      %v624 = vsel %vm622, 1, 0
      %vm625 = vcmp.eq.s32.totalorder %v623, 1
      %vm626 = vcmp.eq.s32.totalorder %v624, 1
      %v627 = vsel %vm625, 0.0, %v582
      %v628 = vsel %vm626, 0.0, %v583
      %v629 = vsel %vm625, 0.0, %v584
      %v630 = vsel %vm626, 0.0, %v585
      %v631 = vsel %vm625, 0.0, %v586
      %v632 = vsel %vm626, 0.0, %v587
      %v633 = vsel %vm625, 0.0, %v588
      %v634 = vsel %vm626, 0.0, %v589
      %v635 = vsel %vm625, 0.0, %v590
      %v636 = vsel %vm626, 0.0, %v591
      %v637 = vsel %vm625, 0.0, %v592
      %v638 = vsel %vm626, 0.0, %v593
      %v639 = vsel %vm625, 0.0, %v594
      %v640 = vsel %vm626, 0.0, %v595
      %v641 = vsel %vm625, 0.0, %v596
      %v642 = vsel %vm626, 0.0, %v597
      %v643 = vsel %vm625, 0.0, %v598
      %v644 = vsel %vm626, 0.0, %v599
      %v645 = vsel %vm625, 0.0, %v600
      %v646 = vsel %vm626, 0.0, %v601
      %v647 = vsel %vm625, 0.0, %v602
      %v648 = vsel %vm626, 0.0, %v603
      %v649 = vsel %vm625, 0.0, %v604
      %v650 = vsel %vm626, 0.0, %v605
      %v651 = vsel %vm625, 0.0, %v606
      %v652 = vsel %vm626, 0.0, %v607
      %v653 = vsel %vm625, 0.0, %v608
      %v654 = vsel %vm626, 0.0, %v609
      %v655 = vsel %vm625, 0.0, %v610
      %v656 = vsel %vm626, 0.0, %v611
      %v657 = vsel %vm625, 0.0, %v612
      %v658 = vsel %vm626, 0.0, %v613
      %v659 = vsel %vm625, 0.0, %v614
      %v660 = vsel %vm626, 0.0, %v615
      %v661 = vsel %vm625, 0.0, %v616
      %v662 = vsel %vm626, 0.0, %v617
      %v663 = vld [vmem:[%s5] sm:$0xff]
      %v664 = vld [vmem:[%s5 + $0x8] sm:$0xff]
      %v665 = vld [vmem:[%s5 + $0x10] sm:$0xff]
      %v666 = vld [vmem:[%s5 + $0x18] sm:$0xff]
      %v667 = vld [vmem:[%s5 + $0x20] sm:$0xff]
      %v668 = vld [vmem:[%s5 + $0x28] sm:$0xff]
      %v669 = vld [vmem:[%s5 + $0x30] sm:$0xff]
      %v670 = vld [vmem:[%s5 + $0x38] sm:$0xff]
      %v671 = vld [vmem:[%s5 + $0x40] sm:$0xff]
      %v672 = vld [vmem:[%s5 + $0x48] sm:$0xff]
      %v673 = vld [vmem:[%s5 + $0x50] sm:$0xff]
      %v674 = vld [vmem:[%s5 + $0x58] sm:$0xff]
      %v675 = vld [vmem:[%s5 + $0x60] sm:$0xff]
      %v676 = vld [vmem:[%s5 + $0x68] sm:$0xff]
      %v677 = vld [vmem:[%s5 + $0x70] sm:$0xff]
      %v678 = vld [vmem:[%s5 + $0x78] sm:$0xff]
      %v679 = vld [vmem:[%s5 + $0x80] sm:$0xff]
      %v680 = vld [vmem:[%s5 + $0x88] sm:$0xff]
      %v681 = vld [vmem:[%s5 + $0x90] sm:$0xff]
      %v682 = vld [vmem:[%s5 + $0x98] sm:$0xff]
      %v683 = vld [vmem:[%s5 + $0xa0] sm:$0xff]
      %v684 = vld [vmem:[%s5 + $0xa8] sm:$0xff]
      %v685 = vld [vmem:[%s5 + $0xb0] sm:$0xff]
      %v686 = vld [vmem:[%s5 + $0xb8] sm:$0xff]
      %v687 = vld [vmem:[%s5 + $0xc0] sm:$0xff]
      %v688 = vld [vmem:[%s5 + $0xc8] sm:$0xff]
      %v689 = vld [vmem:[%s5 + $0xd0] sm:$0xff]
      %v690 = vld [vmem:[%s5 + $0xd8] sm:$0xff]
      %v691 = vld [vmem:[%s5 + $0xe0] sm:$0xff]
      %v692 = vld [vmem:[%s5 + $0xe8] sm:$0xff]
      %v693 = vld [vmem:[%s5 + $0xf0] sm:$0xff]
      %v694 = vld [vmem:[%s5 + $0xf8] sm:$0xff]
      %v695 = vld [vmem:[%s5 + $0x100] sm:$0xff]
      %v696 = vld [vmem:[%s5 + $0x108] sm:$0xff]
      %v697 = vld [vmem:[%s5 + $0x110] sm:$0xff]
      %v698 = vld [vmem:[%s5 + $0x118] sm:$0xff]
      %v699 = vld [vmem:[%s5 + $0x120] sm:$0xff]
      %v700 = vld [vmem:[%s5 + $0x128] sm:$0xff]
      %v701 = vld [vmem:[%s5 + $0x130] sm:$0xff]
      %v702 = vld [vmem:[%s5 + $0x138] sm:$0xff]
      %v703 = vld [vmem:[%s5 + $0x140] sm:$0xff]
      %v704 = vld [vmem:[%s5 + $0x148] sm:$0xff]
      %v705 = vld [vmem:[%s5 + $0x150] sm:$0xff]
      %v706 = vld [vmem:[%s5 + $0x158] sm:$0xff]
      %v707 = vld [vmem:[%s5 + $0x160] sm:$0xff]
      %v708 = vld [vmem:[%s5 + $0x168] sm:$0xff]
      %v709 = vld [vmem:[%s5 + $0x170] sm:$0xff]
      %v710 = vld [vmem:[%s5 + $0x178] sm:$0xff]
      %v711 = vld [vmem:[#allocation2 + $0x8] sm:$0xff]
      %v712 = vld [vmem:[#allocation2 + $0x10] sm:$0xff]
      %v713 = vld [vmem:[#allocation2 + $0x28] sm:$0xff]
      %v714 = vld [vmem:[#allocation2 + $0x30] sm:$0xff]
      %v715 = vld [vmem:[#allocation2 + $0x48] sm:$0xff]
      %v716 = vld [vmem:[#allocation2 + $0x50] sm:$0xff]
      %v717 = vld [vmem:[#allocation2 + $0x68] sm:$0xff]
      %v718 = vld [vmem:[#allocation2 + $0x70] sm:$0xff]
      %v719 = vld [vmem:[#allocation2 + $0x88] sm:$0xff]
      %v720 = vld [vmem:[#allocation2 + $0x90] sm:$0xff]
      %v721 = vld [vmem:[#allocation2 + $0xa8] sm:$0xff]
      %v722 = vld [vmem:[#allocation2 + $0xb0] sm:$0xff]
      %v723 = vld [vmem:[#allocation2 + $0xc8] sm:$0xff]
      %v724 = vld [vmem:[#allocation2 + $0xd0] sm:$0xff]
      %v725 = vld [vmem:[#allocation2 + $0xe8] sm:$0xff]
      %v726 = vld [vmem:[#allocation2 + $0xf0] sm:$0xff]
      %v727 = vld [vmem:[#allocation2 + $0x108] sm:$0xff]
      %v728 = vld [vmem:[#allocation2 + $0x110] sm:$0xff]
      %v729 = vld [vmem:[#allocation2 + $0x128] sm:$0xff]
      %v730 = vld [vmem:[#allocation2 + $0x130] sm:$0xff]
      %v731 = vld [vmem:[#allocation2 + $0x148] sm:$0xff]
      %v732 = vld [vmem:[#allocation2 + $0x150] sm:$0xff]
      %v733 = vld [vmem:[#allocation2 + $0x168] sm:$0xff]
      %v734 = vld [vmem:[#allocation2 + $0x170] sm:$0xff]
      %v735 = vld [vmem:[#allocation2 + $0x188] sm:$0xff]
      %v736 = vld [vmem:[#allocation2 + $0x190] sm:$0xff]
      %v737 = vld [vmem:[#allocation2 + $0x1a8] sm:$0xff]
      %v738 = vld [vmem:[#allocation2 + $0x1b0] sm:$0xff]
      %v739 = vld [vmem:[#allocation2 + $0x1c8] sm:$0xff]
      %v740 = vld [vmem:[#allocation2 + $0x1d0] sm:$0xff]
      %v741 = vld [vmem:[#allocation2 + $0x1e8] sm:$0xff]
      %v742 = vld [vmem:[#allocation2 + $0x1f0] sm:$0xff]
      %v743 = vld [vmem:[#allocation2 + $0x208] sm:$0xff]
      %v744 = vld [vmem:[#allocation2 + $0x210] sm:$0xff]
      %v745 = vld [vmem:[#allocation2 + $0x228] sm:$0xff]
      %v746 = vld [vmem:[#allocation2 + $0x230] sm:$0xff]
      %s747 = scalar_lea.vmem %s5, 384
      %v748 = vld [vmem:[%s747] sm:$0xff]
      %v749 = vld [vmem:[%s747 + $0x8] sm:$0xff]
      %v750 = vld [vmem:[%s747 + $0x10] sm:$0xff]
      %v751 = vld [vmem:[%s747 + $0x18] sm:$0xff]
      %v752 = vld [vmem:[%s747 + $0x20] sm:$0xff]
      %v753 = vld [vmem:[%s747 + $0x28] sm:$0xff]
      %v754 = vld [vmem:[%s747 + $0x30] sm:$0xff]
      %v755 = vld [vmem:[%s747 + $0x38] sm:$0xff]
      %v756 = vld [vmem:[%s747 + $0x40] sm:$0xff]
      %v757 = vld [vmem:[%s747 + $0x48] sm:$0xff]
      %v758 = vld [vmem:[%s747 + $0x50] sm:$0xff]
      %v759 = vld [vmem:[%s747 + $0x58] sm:$0xff]
      %v760 = vld [vmem:[%s747 + $0x60] sm:$0xff]
      %v761 = vld [vmem:[%s747 + $0x68] sm:$0xff]
      %v762 = vld [vmem:[%s747 + $0x70] sm:$0xff]
      %v763 = vld [vmem:[%s747 + $0x78] sm:$0xff]
      %v764 = vld [vmem:[%s747 + $0x80] sm:$0xff]
      %v765 = vld [vmem:[%s747 + $0x88] sm:$0xff]
      %v766 = vld [vmem:[%s747 + $0x90] sm:$0xff]
      %v767 = vld [vmem:[%s747 + $0x98] sm:$0xff]
      %v768 = vld [vmem:[%s747 + $0xa0] sm:$0xff]
      %v769 = vld [vmem:[%s747 + $0xa8] sm:$0xff]
      %v770 = vld [vmem:[%s747 + $0xb0] sm:$0xff]
      %v771 = vld [vmem:[%s747 + $0xb8] sm:$0xff]
      %v772 = vld [vmem:[%s747 + $0xc0] sm:$0xff]
      %v773 = vld [vmem:[%s747 + $0xc8] sm:$0xff]
      %v774 = vld [vmem:[%s747 + $0xd0] sm:$0xff]
      %v775 = vld [vmem:[%s747 + $0xd8] sm:$0xff]
      %v776 = vld [vmem:[%s747 + $0xe0] sm:$0xff]
      %v777 = vld [vmem:[%s747 + $0xe8] sm:$0xff]
      %v778 = vld [vmem:[%s747 + $0xf0] sm:$0xff]
      %v779 = vld [vmem:[%s747 + $0xf8] sm:$0xff]
      %v780 = vld [vmem:[%s747 + $0x100] sm:$0xff]
      %v781 = vld [vmem:[%s747 + $0x108] sm:$0xff]
      %v782 = vld [vmem:[%s747 + $0x110] sm:$0xff]
      %v783 = vld [vmem:[%s747 + $0x118] sm:$0xff]
      %v784 = vld [vmem:[%s747 + $0x120] sm:$0xff]
      %v785 = vld [vmem:[%s747 + $0x128] sm:$0xff]
      %v786 = vld [vmem:[%s747 + $0x130] sm:$0xff]
      %v787 = vld [vmem:[%s747 + $0x138] sm:$0xff]
      %v788 = vld [vmem:[%s747 + $0x140] sm:$0xff]
      %v789 = vld [vmem:[%s747 + $0x148] sm:$0xff]
      %v790 = vld [vmem:[%s747 + $0x150] sm:$0xff]
      %v791 = vld [vmem:[%s747 + $0x158] sm:$0xff]
      %v792 = vld [vmem:[%s747 + $0x160] sm:$0xff]
      %v793 = vld [vmem:[%s747 + $0x168] sm:$0xff]
      %v794 = vld [vmem:[%s747 + $0x170] sm:$0xff]
      %v795 = vld [vmem:[%s747 + $0x178] sm:$0xff]
      %796 = vmatprep.subr.mxu0 0.0
      %797 = vmatpush1.msra.mxu0 %v763
      %798 = vmatprep.subr.mxu0 0.0
      %799 = vmatpush1.msra.mxu0 %v762
      %800 = vmatprep.subr.mxu0 0.0
      %801 = vmatpush1.msra.mxu0 %v761
      %802 = vmatprep.subr.mxu0 0.0
      %803 = vmatpush1.msra.mxu0 %v760
      %804 = vmatprep.subr.mxu0 0.0
      %805 = vmatpush1.msra.mxu0 %v759
      %806 = vmatprep.subr.mxu0 0.0
      %807 = vmatpush1.msra.mxu0 %v758
      %808 = vmatprep.subr.mxu0 0.0
      %809 = vmatpush1.msra.mxu0 %v757
      %810 = vmatprep.subr.mxu0 0.0
      %811 = vmatpush1.msra.mxu0 %v756
      %812 = vmatprep.subr.mxu0 0.0
      %813 = vmatpush1.msra.mxu0 %v755
      %814 = vmatprep.subr.mxu0 0.0
      %815 = vmatpush1.msra.mxu0 %v754
      %816 = vmatprep.subr.mxu0 0.0
      %817 = vmatpush1.msra.mxu0 %v753
      %818 = vmatprep.subr.mxu0 0.0
      %819 = vmatpush1.msra.mxu0 %v752
      %820 = vmatprep.subr.mxu0 0.0
      %821 = vmatpush1.msra.mxu0 %v751
      %822 = vmatprep.subr.mxu0 0.0
      %823 = vmatpush1.msra.mxu0 %v750
      %824 = vmatprep.subr.mxu0 0.0
      %825 = vmatpush1.msra.mxu0 %v749
      %826 = vmatprep.subr.mxu0 0.0
      %827 = vmatpush1.msra.mxu0 %v748
      %828 = vmatprep.subr.mxu0 0.0
      %829 = vmatpush2.msra.mxu0 %v779
      %830 = vmatprep.subr.mxu0 0.0
      %831 = vmatpush2.msra.mxu0 %v778
      %832 = vmatprep.subr.mxu0 0.0
      %833 = vmatpush2.msra.mxu0 %v777
      %834 = vmatprep.subr.mxu0 0.0
      %835 = vmatpush2.msra.mxu0 %v776
      %836 = vmatprep.subr.mxu0 0.0
      %837 = vmatpush2.msra.mxu0 %v775
      %838 = vmatprep.subr.mxu0 0.0
      %839 = vmatpush2.msra.mxu0 %v774
      %840 = vmatprep.subr.mxu0 0.0
      %841 = vmatpush2.msra.mxu0 %v773
      %842 = vmatprep.subr.mxu0 0.0
      %843 = vmatpush2.msra.mxu0 %v772
      %844 = vmatprep.subr.mxu0 0.0
      %845 = vmatpush2.msra.mxu0 %v771
      %846 = vmatprep.subr.mxu0 0.0
      %847 = vmatpush2.msra.mxu0 %v770
      %848 = vmatprep.subr.mxu0 0.0
      %849 = vmatpush2.msra.mxu0 %v769
      %850 = vmatprep.subr.mxu0 0.0
      %851 = vmatpush2.msra.mxu0 %v768
      %852 = vmatprep.subr.mxu0 0.0
      %853 = vmatpush2.msra.mxu0 %v767
      %854 = vmatprep.subr.mxu0 0.0
      %855 = vmatpush2.msra.mxu0 %v766
      %856 = vmatprep.subr.mxu0 0.0
      %857 = vmatpush2.msra.mxu0 %v765
      %858 = vmatprep.subr.mxu0 0.0
      %859 = vmatpush2.msra.mxu0 %v764
      %860 = vmatprep.mubr.f32.mxu0 %v713
      %861 = vmatmul.mubr.f32.gmra.mxu0 %v711
      %v862 = vpop.f32.mrf.mxu0
      %v863 = vadd.f32 0.0, %v862
      %v864 = vpop.f32.mrf.mxu0
      %865 = vmatprep.mubr.f32.mxu0 %v714
      %866 = vmatmul.mubr.f32.gmra.mxu0 %v712
      %v867 = vpop.f32.mrf.mxu0
      %v868 = vadd.f32 0.0, %v867
      %v869 = vpop.f32.mrf.mxu0
      %870 = vmatprep.mubr.f32.mxu0 %v715
      %871 = vmatmul.mubr.f32.gmra.mxu0 %v713
      %v872 = vpop.f32.mrf.mxu0
      %v873 = vadd.f32 0.0, %v872
      %v874 = vpop.f32.mrf.mxu0
      %875 = vmatprep.mubr.f32.mxu0 %v716
      %876 = vmatmul.mubr.f32.gmra.mxu0 %v714
      %v877 = vpop.f32.mrf.mxu0
      %v878 = vadd.f32 0.0, %v877
      %v879 = vpop.f32.mrf.mxu0
      %880 = vmatprep.mubr.f32.mxu0 %v717
      %881 = vmatmul.mubr.f32.gmra.mxu0 %v715
      %v882 = vpop.f32.mrf.mxu0
      %v883 = vadd.f32 0.0, %v882
      %v884 = vpop.f32.mrf.mxu0
      %885 = vmatprep.mubr.f32.mxu0 %v718
      %886 = vmatmul.mubr.f32.gmra.mxu0 %v716
      %v887 = vpop.f32.mrf.mxu0
      %v888 = vadd.f32 0.0, %v887
      %v889 = vpop.f32.mrf.mxu0
      %890 = vmatprep.mubr.f32.mxu0 %v719
      %891 = vmatmul.mubr.f32.gmra.mxu0 %v717
      %v892 = vpop.f32.mrf.mxu0
      %v893 = vadd.f32 0.0, %v892
      %v894 = vpop.f32.mrf.mxu0
      %895 = vmatprep.mubr.f32.mxu0 %v720
      %896 = vmatmul.mubr.f32.gmra.mxu0 %v718
      %v897 = vpop.f32.mrf.mxu0
      %v898 = vadd.f32 0.0, %v897
      %v899 = vpop.f32.mrf.mxu0
      %900 = vmatprep.mubr.f32.mxu0 %v721
      %901 = vmatmul.mubr.f32.gmra.mxu0 %v719
      %v902 = vpop.f32.mrf.mxu0
      %v903 = vadd.f32 0.0, %v902
      %v904 = vpop.f32.mrf.mxu0
      %905 = vmatprep.mubr.f32.mxu0 %v722
      %906 = vmatmul.mubr.f32.gmra.mxu0 %v720
      %v907 = vpop.f32.mrf.mxu0
      %v908 = vadd.f32 0.0, %v907
      %v909 = vpop.f32.mrf.mxu0
      %910 = vmatprep.mubr.f32.mxu0 %v723
      %911 = vmatmul.mubr.f32.gmra.mxu0 %v721
      %v912 = vpop.f32.mrf.mxu0
      %v913 = vadd.f32 0.0, %v912
      %v914 = vpop.f32.mrf.mxu0
      %915 = vmatprep.mubr.f32.mxu0 %v724
      %916 = vmatmul.mubr.f32.gmra.mxu0 %v722
      %v917 = vpop.f32.mrf.mxu0
      %v918 = vadd.f32 0.0, %v917
      %v919 = vpop.f32.mrf.mxu0
      %920 = vmatprep.mubr.f32.mxu0 %v725
      %921 = vmatmul.mubr.f32.gmra.mxu0 %v723
      %v922 = vpop.f32.mrf.mxu0
      %v923 = vadd.f32 0.0, %v922
      %v924 = vpop.f32.mrf.mxu0
      %925 = vmatprep.mubr.f32.mxu0 %v726
      %926 = vmatmul.mubr.f32.gmra.mxu0 %v724
      %v927 = vpop.f32.mrf.mxu0
      %v928 = vadd.f32 0.0, %v927
      %v929 = vpop.f32.mrf.mxu0
      %930 = vmatprep.mubr.f32.mxu0 %v727
      %931 = vmatmul.mubr.f32.gmra.mxu0 %v725
      %v932 = vpop.f32.mrf.mxu0
      %v933 = vadd.f32 0.0, %v932
      %v934 = vpop.f32.mrf.mxu0
      %935 = vmatprep.mubr.f32.mxu0 %v728
      %936 = vmatmul.mubr.f32.gmra.mxu0 %v726
      %v937 = vpop.f32.mrf.mxu0
      %v938 = vadd.f32 0.0, %v937
      %v939 = vpop.f32.mrf.mxu0
      %940 = vmatprep.mubr.f32.mxu0 %v729
      %941 = vmatmul.mubr.f32.gmra.mxu0 %v727
      %v942 = vpop.f32.mrf.mxu0
      %v943 = vadd.f32 0.0, %v942
      %v944 = vpop.f32.mrf.mxu0
      %945 = vmatprep.mubr.f32.mxu0 %v730
      %946 = vmatmul.mubr.f32.gmra.mxu0 %v728
      %v947 = vpop.f32.mrf.mxu0
      %v948 = vadd.f32 0.0, %v947
      %v949 = vpop.f32.mrf.mxu0
      %950 = vmatprep.mubr.f32.mxu0 %v731
      %951 = vmatmul.mubr.f32.gmra.mxu0 %v729
      %v952 = vpop.f32.mrf.mxu0
      %v953 = vadd.f32 0.0, %v952
      %v954 = vpop.f32.mrf.mxu0
      %955 = vmatprep.mubr.f32.mxu0 %v732
      %956 = vmatmul.mubr.f32.gmra.mxu0 %v730
      %v957 = vpop.f32.mrf.mxu0
      %v958 = vadd.f32 0.0, %v957
      %v959 = vpop.f32.mrf.mxu0
      %960 = vmatprep.mubr.f32.mxu0 %v733
      %961 = vmatmul.mubr.f32.gmra.mxu0 %v731
      %v962 = vpop.f32.mrf.mxu0
      %v963 = vadd.f32 0.0, %v962
      %v964 = vpop.f32.mrf.mxu0
      %965 = vmatprep.mubr.f32.mxu0 %v734
      %966 = vmatmul.mubr.f32.gmra.mxu0 %v732
      %v967 = vpop.f32.mrf.mxu0
      %v968 = vadd.f32 0.0, %v967
      %v969 = vpop.f32.mrf.mxu0
      %970 = vmatprep.mubr.f32.mxu0 %v735
      %971 = vmatmul.mubr.f32.gmra.mxu0 %v733
      %v972 = vpop.f32.mrf.mxu0
      %v973 = vadd.f32 0.0, %v972
      %v974 = vpop.f32.mrf.mxu0
      %975 = vmatprep.mubr.f32.mxu0 %v736
      %976 = vmatmul.mubr.f32.gmra.mxu0 %v734
      %v977 = vpop.f32.mrf.mxu0
      %v978 = vadd.f32 0.0, %v977
      %v979 = vpop.f32.mrf.mxu0
      %980 = vmatprep.mubr.f32.mxu0 %v737
      %981 = vmatmul.mubr.f32.gmra.mxu0 %v735
      %v982 = vpop.f32.mrf.mxu0
      %v983 = vadd.f32 0.0, %v982
      %v984 = vpop.f32.mrf.mxu0
      %985 = vmatprep.mubr.f32.mxu0 %v738
      %986 = vmatmul.mubr.f32.gmra.mxu0 %v736
      %v987 = vpop.f32.mrf.mxu0
      %v988 = vadd.f32 0.0, %v987
      %v989 = vpop.f32.mrf.mxu0
      %990 = vmatprep.mubr.f32.mxu0 %v739
      %991 = vmatmul.mubr.f32.gmra.mxu0 %v737
      %v992 = vpop.f32.mrf.mxu0
      %v993 = vadd.f32 0.0, %v992
      %v994 = vpop.f32.mrf.mxu0
      %995 = vmatprep.mubr.f32.mxu0 %v740
      %996 = vmatmul.mubr.f32.gmra.mxu0 %v738
      %v997 = vpop.f32.mrf.mxu0
      %v998 = vadd.f32 0.0, %v997
      %v999 = vpop.f32.mrf.mxu0
      %1000 = vmatprep.mubr.f32.mxu0 %v741
      %1001 = vmatmul.mubr.f32.gmra.mxu0 %v739
      %v1002 = vpop.f32.mrf.mxu0
      %v1003 = vadd.f32 0.0, %v1002
      %v1004 = vpop.f32.mrf.mxu0
      %1005 = vmatprep.mubr.f32.mxu0 %v742
      %1006 = vmatmul.mubr.f32.gmra.mxu0 %v740
      %v1007 = vpop.f32.mrf.mxu0
      %v1008 = vadd.f32 0.0, %v1007
      %v1009 = vpop.f32.mrf.mxu0
      %1010 = vmatprep.mubr.f32.mxu0 %v743
      %1011 = vmatmul.mubr.f32.gmra.mxu0 %v741
      %v1012 = vpop.f32.mrf.mxu0
      %v1013 = vadd.f32 0.0, %v1012
      %v1014 = vpop.f32.mrf.mxu0
      %1015 = vmatprep.mubr.f32.mxu0 %v744
      %1016 = vmatmul.mubr.f32.gmra.mxu0 %v742
      %v1017 = vpop.f32.mrf.mxu0
      %v1018 = vadd.f32 0.0, %v1017
      %v1019 = vpop.f32.mrf.mxu0
      %1020 = vdwg.mxu0
      %1021 = vmatprep.subr.mxu0 0.0
      %1022 = vmatpush1.msra.mxu0 %v795
      %1023 = vmatprep.subr.mxu0 0.0
      %1024 = vmatpush1.msra.mxu0 %v794
      %1025 = vmatprep.subr.mxu0 0.0
      %1026 = vmatpush1.msra.mxu0 %v793
      %1027 = vmatprep.subr.mxu0 0.0
      %1028 = vmatpush1.msra.mxu0 %v792
      %1029 = vmatprep.subr.mxu0 0.0
      %1030 = vmatpush1.msra.mxu0 %v791
      %1031 = vmatprep.subr.mxu0 0.0
      %1032 = vmatpush1.msra.mxu0 %v790
      %1033 = vmatprep.subr.mxu0 0.0
      %1034 = vmatpush1.msra.mxu0 %v789
      %1035 = vmatprep.subr.mxu0 0.0
      %1036 = vmatpush1.msra.mxu0 %v788
      %1037 = vmatprep.subr.mxu0 0.0
      %1038 = vmatpush1.msra.mxu0 %v787
      %1039 = vmatprep.subr.mxu0 0.0
      %1040 = vmatpush1.msra.mxu0 %v786
      %1041 = vmatprep.subr.mxu0 0.0
      %1042 = vmatpush1.msra.mxu0 %v785
      %1043 = vmatprep.subr.mxu0 0.0
      %1044 = vmatpush1.msra.mxu0 %v784
      %1045 = vmatprep.subr.mxu0 0.0
      %1046 = vmatpush1.msra.mxu0 %v783
      %1047 = vmatprep.subr.mxu0 0.0
      %1048 = vmatpush1.msra.mxu0 %v782
      %1049 = vmatprep.subr.mxu0 0.0
      %1050 = vmatpush1.msra.mxu0 %v781
      %1051 = vmatprep.subr.mxu0 0.0
      %1052 = vmatpush1.msra.mxu0 %v780
      %1053 = vmatprep.subr.mxu0 0.0
      %1054 = vmatpush2.msra.mxu0 0.0
      %1055 = vmatprep.subr.mxu0 0.0
      %1056 = vmatpush2.msra.mxu0 0.0
      %1057 = vmatprep.subr.mxu0 0.0
      %1058 = vmatpush2.msra.mxu0 0.0
      %1059 = vmatprep.subr.mxu0 0.0
      %1060 = vmatpush2.msra.mxu0 0.0
      %1061 = vmatprep.subr.mxu0 0.0
      %1062 = vmatpush2.msra.mxu0 0.0
      %1063 = vmatprep.subr.mxu0 0.0
      %1064 = vmatpush2.msra.mxu0 0.0
      %1065 = vmatprep.subr.mxu0 0.0
      %1066 = vmatpush2.msra.mxu0 0.0
      %1067 = vmatprep.subr.mxu0 0.0
      %1068 = vmatpush2.msra.mxu0 0.0
      %1069 = vmatprep.subr.mxu0 0.0
      %1070 = vmatpush2.msra.mxu0 0.0
      %1071 = vmatprep.subr.mxu0 0.0
      %1072 = vmatpush2.msra.mxu0 0.0
      %1073 = vmatprep.subr.mxu0 0.0
      %1074 = vmatpush2.msra.mxu0 0.0
      %1075 = vmatprep.subr.mxu0 0.0
      %1076 = vmatpush2.msra.mxu0 0.0
      %1077 = vmatprep.subr.mxu0 0.0
      %1078 = vmatpush2.msra.mxu0 0.0
      %1079 = vmatprep.subr.mxu0 0.0
      %1080 = vmatpush2.msra.mxu0 0.0
      %1081 = vmatprep.subr.mxu0 0.0
      %1082 = vmatpush2.msra.mxu0 0.0
      %1083 = vmatprep.subr.mxu0 0.0
      %1084 = vmatpush2.msra.mxu0 0.0
      %1085 = vmatprep.mubr.f32.mxu0 0.0
      %1086 = vmatmul.mubr.f32.gmra.mxu0 %v715
      %v1087 = vpop.f32.mrf.mxu0
      %v1088 = vadd.f32 %v863, %v1087
      %v1089 = vpop.f32.mrf.mxu0
      %1090 = vmatprep.mubr.f32.mxu0 0.0
      %1091 = vmatmul.mubr.f32.gmra.mxu0 %v716
      %v1092 = vpop.f32.mrf.mxu0
      %v1093 = vadd.f32 %v868, %v1092
      %v1094 = vpop.f32.mrf.mxu0
      %1095 = vmatprep.mubr.f32.mxu0 0.0
      %1096 = vmatmul.mubr.f32.gmra.mxu0 %v717
      %v1097 = vpop.f32.mrf.mxu0
      %v1098 = vadd.f32 %v873, %v1097
      %v1099 = vpop.f32.mrf.mxu0
      %1100 = vmatprep.mubr.f32.mxu0 0.0
      %1101 = vmatmul.mubr.f32.gmra.mxu0 %v718
      %v1102 = vpop.f32.mrf.mxu0
      %v1103 = vadd.f32 %v878, %v1102
      %v1104 = vpop.f32.mrf.mxu0
      %1105 = vmatprep.mubr.f32.mxu0 0.0
      %1106 = vmatmul.mubr.f32.gmra.mxu0 %v719
      %v1107 = vpop.f32.mrf.mxu0
      %v1108 = vadd.f32 %v883, %v1107
      %v1109 = vpop.f32.mrf.mxu0
      %1110 = vmatprep.mubr.f32.mxu0 0.0
      %1111 = vmatmul.mubr.f32.gmra.mxu0 %v720
      %v1112 = vpop.f32.mrf.mxu0
      %v1113 = vadd.f32 %v888, %v1112
      %v1114 = vpop.f32.mrf.mxu0
      %1115 = vmatprep.mubr.f32.mxu0 0.0
      %1116 = vmatmul.mubr.f32.gmra.mxu0 %v721
      %v1117 = vpop.f32.mrf.mxu0
      %v1118 = vadd.f32 %v893, %v1117
      %v1119 = vpop.f32.mrf.mxu0
      %1120 = vmatprep.mubr.f32.mxu0 0.0
      %1121 = vmatmul.mubr.f32.gmra.mxu0 %v722
      %v1122 = vpop.f32.mrf.mxu0
      %v1123 = vadd.f32 %v898, %v1122
      %v1124 = vpop.f32.mrf.mxu0
      %1125 = vmatprep.mubr.f32.mxu0 0.0
      %1126 = vmatmul.mubr.f32.gmra.mxu0 %v723
      %v1127 = vpop.f32.mrf.mxu0
      %v1128 = vadd.f32 %v903, %v1127
      %v1129 = vpop.f32.mrf.mxu0
      %1130 = vmatprep.mubr.f32.mxu0 0.0
      %1131 = vmatmul.mubr.f32.gmra.mxu0 %v724
      %v1132 = vpop.f32.mrf.mxu0
      %v1133 = vadd.f32 %v908, %v1132
      %v1134 = vpop.f32.mrf.mxu0
      %1135 = vmatprep.mubr.f32.mxu0 0.0
      %1136 = vmatmul.mubr.f32.gmra.mxu0 %v725
      %v1137 = vpop.f32.mrf.mxu0
      %v1138 = vadd.f32 %v913, %v1137
      %v1139 = vpop.f32.mrf.mxu0
      %1140 = vmatprep.mubr.f32.mxu0 0.0
      %1141 = vmatmul.mubr.f32.gmra.mxu0 %v726
      %v1142 = vpop.f32.mrf.mxu0
      %v1143 = vadd.f32 %v918, %v1142
      %v1144 = vpop.f32.mrf.mxu0
      %1145 = vmatprep.mubr.f32.mxu0 0.0
      %1146 = vmatmul.mubr.f32.gmra.mxu0 %v727
      %v1147 = vpop.f32.mrf.mxu0
      %v1148 = vadd.f32 %v923, %v1147
      %v1149 = vpop.f32.mrf.mxu0
      %1150 = vmatprep.mubr.f32.mxu0 0.0
      %1151 = vmatmul.mubr.f32.gmra.mxu0 %v728
      %v1152 = vpop.f32.mrf.mxu0
      %v1153 = vadd.f32 %v928, %v1152
      %v1154 = vpop.f32.mrf.mxu0
      %1155 = vmatprep.mubr.f32.mxu0 0.0
      %1156 = vmatmul.mubr.f32.gmra.mxu0 %v729
      %v1157 = vpop.f32.mrf.mxu0
      %v1158 = vadd.f32 %v933, %v1157
      %v1159 = vpop.f32.mrf.mxu0
      %1160 = vmatprep.mubr.f32.mxu0 0.0
      %1161 = vmatmul.mubr.f32.gmra.mxu0 %v730
      %v1162 = vpop.f32.mrf.mxu0
      %v1163 = vadd.f32 %v938, %v1162
      %v1164 = vpop.f32.mrf.mxu0
      %1165 = vmatprep.mubr.f32.mxu0 0.0
      %1166 = vmatmul.mubr.f32.gmra.mxu0 %v731
      %v1167 = vpop.f32.mrf.mxu0
      %v1168 = vadd.f32 %v943, %v1167
      %v1169 = vpop.f32.mrf.mxu0
      %1170 = vmatprep.mubr.f32.mxu0 0.0
      %1171 = vmatmul.mubr.f32.gmra.mxu0 %v732
      %v1172 = vpop.f32.mrf.mxu0
      %v1173 = vadd.f32 %v948, %v1172
      %v1174 = vpop.f32.mrf.mxu0
      %1175 = vmatprep.mubr.f32.mxu0 0.0
      %1176 = vmatmul.mubr.f32.gmra.mxu0 %v733
      %v1177 = vpop.f32.mrf.mxu0
      %v1178 = vadd.f32 %v953, %v1177
      %v1179 = vpop.f32.mrf.mxu0
      %1180 = vmatprep.mubr.f32.mxu0 0.0
      %1181 = vmatmul.mubr.f32.gmra.mxu0 %v734
      %v1182 = vpop.f32.mrf.mxu0
      %v1183 = vadd.f32 %v958, %v1182
      %v1184 = vpop.f32.mrf.mxu0
      %1185 = vmatprep.mubr.f32.mxu0 0.0
      %1186 = vmatmul.mubr.f32.gmra.mxu0 %v735
      %v1187 = vpop.f32.mrf.mxu0
      %v1188 = vadd.f32 %v963, %v1187
      %v1189 = vpop.f32.mrf.mxu0
      %1190 = vmatprep.mubr.f32.mxu0 0.0
      %1191 = vmatmul.mubr.f32.gmra.mxu0 %v736
      %v1192 = vpop.f32.mrf.mxu0
      %v1193 = vadd.f32 %v968, %v1192
      %v1194 = vpop.f32.mrf.mxu0
      %1195 = vmatprep.mubr.f32.mxu0 0.0
      %1196 = vmatmul.mubr.f32.gmra.mxu0 %v737
      %v1197 = vpop.f32.mrf.mxu0
      %v1198 = vadd.f32 %v973, %v1197
      %v1199 = vpop.f32.mrf.mxu0
      %1200 = vmatprep.mubr.f32.mxu0 0.0
      %1201 = vmatmul.mubr.f32.gmra.mxu0 %v738
      %v1202 = vpop.f32.mrf.mxu0
      %v1203 = vadd.f32 %v978, %v1202
      %v1204 = vpop.f32.mrf.mxu0
      %1205 = vmatprep.mubr.f32.mxu0 0.0
      %1206 = vmatmul.mubr.f32.gmra.mxu0 %v739
      %v1207 = vpop.f32.mrf.mxu0
      %v1208 = vadd.f32 %v983, %v1207
      %v1209 = vpop.f32.mrf.mxu0
      %1210 = vmatprep.mubr.f32.mxu0 0.0
      %1211 = vmatmul.mubr.f32.gmra.mxu0 %v740
      %v1212 = vpop.f32.mrf.mxu0
      %v1213 = vadd.f32 %v988, %v1212
      %v1214 = vpop.f32.mrf.mxu0
      %1215 = vmatprep.mubr.f32.mxu0 0.0
      %1216 = vmatmul.mubr.f32.gmra.mxu0 %v741
      %v1217 = vpop.f32.mrf.mxu0
      %v1218 = vadd.f32 %v993, %v1217
      %v1219 = vpop.f32.mrf.mxu0
      %1220 = vmatprep.mubr.f32.mxu0 0.0
      %1221 = vmatmul.mubr.f32.gmra.mxu0 %v742
      %v1222 = vpop.f32.mrf.mxu0
      %v1223 = vadd.f32 %v998, %v1222
      %v1224 = vpop.f32.mrf.mxu0
      %1225 = vmatprep.mubr.f32.mxu0 0.0
      %1226 = vmatmul.mubr.f32.gmra.mxu0 %v743
      %v1227 = vpop.f32.mrf.mxu0
      %v1228 = vadd.f32 %v1003, %v1227
      %v1229 = vpop.f32.mrf.mxu0
      %1230 = vmatprep.mubr.f32.mxu0 0.0
      %1231 = vmatmul.mubr.f32.gmra.mxu0 %v744
      %v1232 = vpop.f32.mrf.mxu0
      %v1233 = vadd.f32 %v1008, %v1232
      %v1234 = vpop.f32.mrf.mxu0
      %1235 = vmatprep.mubr.f32.mxu0 0.0
      %1236 = vmatmul.mubr.f32.gmra.mxu0 %v745
      %v1237 = vpop.f32.mrf.mxu0
      %v1238 = vadd.f32 %v1013, %v1237
      %v1239 = vpop.f32.mrf.mxu0
      %1240 = vmatprep.mubr.f32.mxu0 0.0
      %1241 = vmatmul.mubr.f32.gmra.mxu0 %v746
      %v1242 = vpop.f32.mrf.mxu0
      %v1243 = vadd.f32 %v1018, %v1242
      %v1244 = vpop.f32.mrf.mxu0
      %1245 = vdwg.mxu0
      %1246 = vmatprep.subr.mxu0 0.0
      %1247 = vmatpush1.msra.mxu0 %v678
      %1248 = vmatprep.subr.mxu0 0.0
      %1249 = vmatpush1.msra.mxu0 %v677
      %1250 = vmatprep.subr.mxu0 0.0
      %1251 = vmatpush1.msra.mxu0 %v676
      %1252 = vmatprep.subr.mxu0 0.0
      %1253 = vmatpush1.msra.mxu0 %v675
      %1254 = vmatprep.subr.mxu0 0.0
      %1255 = vmatpush1.msra.mxu0 %v674
      %1256 = vmatprep.subr.mxu0 0.0
      %1257 = vmatpush1.msra.mxu0 %v673
      %1258 = vmatprep.subr.mxu0 0.0
      %1259 = vmatpush1.msra.mxu0 %v672
      %1260 = vmatprep.subr.mxu0 0.0
      %1261 = vmatpush1.msra.mxu0 %v671
      %1262 = vmatprep.subr.mxu0 0.0
      %1263 = vmatpush1.msra.mxu0 %v670
      %1264 = vmatprep.subr.mxu0 0.0
      %1265 = vmatpush1.msra.mxu0 %v669
      %1266 = vmatprep.subr.mxu0 0.0
      %1267 = vmatpush1.msra.mxu0 %v668
      %1268 = vmatprep.subr.mxu0 0.0
      %1269 = vmatpush1.msra.mxu0 %v667
      %1270 = vmatprep.subr.mxu0 0.0
      %1271 = vmatpush1.msra.mxu0 %v666
      %1272 = vmatprep.subr.mxu0 0.0
      %1273 = vmatpush1.msra.mxu0 %v665
      %1274 = vmatprep.subr.mxu0 0.0
      %1275 = vmatpush1.msra.mxu0 %v664
      %1276 = vmatprep.subr.mxu0 0.0
      %1277 = vmatpush1.msra.mxu0 %v663
      %1278 = vmatprep.subr.mxu0 0.0
      %1279 = vmatpush2.msra.mxu0 %v694
      %1280 = vmatprep.subr.mxu0 0.0
      %1281 = vmatpush2.msra.mxu0 %v693
      %1282 = vmatprep.subr.mxu0 0.0
      %1283 = vmatpush2.msra.mxu0 %v692
      %1284 = vmatprep.subr.mxu0 0.0
      %1285 = vmatpush2.msra.mxu0 %v691
      %1286 = vmatprep.subr.mxu0 0.0
      %1287 = vmatpush2.msra.mxu0 %v690
      %1288 = vmatprep.subr.mxu0 0.0
      %1289 = vmatpush2.msra.mxu0 %v689
      %1290 = vmatprep.subr.mxu0 0.0
      %1291 = vmatpush2.msra.mxu0 %v688
      %1292 = vmatprep.subr.mxu0 0.0
      %1293 = vmatpush2.msra.mxu0 %v687
      %1294 = vmatprep.subr.mxu0 0.0
      %1295 = vmatpush2.msra.mxu0 %v686
      %1296 = vmatprep.subr.mxu0 0.0
      %1297 = vmatpush2.msra.mxu0 %v685
      %1298 = vmatprep.subr.mxu0 0.0
      %1299 = vmatpush2.msra.mxu0 %v684
      %1300 = vmatprep.subr.mxu0 0.0
      %1301 = vmatpush2.msra.mxu0 %v683
      %1302 = vmatprep.subr.mxu0 0.0
      %1303 = vmatpush2.msra.mxu0 %v682
      %1304 = vmatprep.subr.mxu0 0.0
      %1305 = vmatpush2.msra.mxu0 %v681
      %1306 = vmatprep.subr.mxu0 0.0
      %1307 = vmatpush2.msra.mxu0 %v680
      %1308 = vmatprep.subr.mxu0 0.0
      %1309 = vmatpush2.msra.mxu0 %v679
      %1310 = vmatprep.mubr.f32.mxu0 %v629
      %1311 = vmatmul.mubr.f32.gmra.mxu0 %v627
      %v1312 = vpop.f32.mrf.mxu0
      %v1313 = vadd.f32 %v1088, %v1312
      %v1314 = vpop.f32.mrf.mxu0
      %1315 = vmatprep.mubr.f32.mxu0 %v630
      %1316 = vmatmul.mubr.f32.gmra.mxu0 %v628
      %v1317 = vpop.f32.mrf.mxu0
      %v1318 = vadd.f32 %v1093, %v1317
      %v1319 = vpop.f32.mrf.mxu0
      %1320 = vmatprep.mubr.f32.mxu0 %v631
      %1321 = vmatmul.mubr.f32.gmra.mxu0 %v629
      %v1322 = vpop.f32.mrf.mxu0
      %v1323 = vadd.f32 %v1098, %v1322
      %v1324 = vpop.f32.mrf.mxu0
      %1325 = vmatprep.mubr.f32.mxu0 %v632
      %1326 = vmatmul.mubr.f32.gmra.mxu0 %v630
      %v1327 = vpop.f32.mrf.mxu0
      %v1328 = vadd.f32 %v1103, %v1327
      %v1329 = vpop.f32.mrf.mxu0
      %1330 = vmatprep.mubr.f32.mxu0 %v633
      %1331 = vmatmul.mubr.f32.gmra.mxu0 %v631
      %v1332 = vpop.f32.mrf.mxu0
      %v1333 = vadd.f32 %v1108, %v1332
      %v1334 = vpop.f32.mrf.mxu0
      %1335 = vmatprep.mubr.f32.mxu0 %v634
      %1336 = vmatmul.mubr.f32.gmra.mxu0 %v632
      %v1337 = vpop.f32.mrf.mxu0
      %v1338 = vadd.f32 %v1113, %v1337
      %v1339 = vpop.f32.mrf.mxu0
      %1340 = vmatprep.mubr.f32.mxu0 %v635
      %1341 = vmatmul.mubr.f32.gmra.mxu0 %v633
      %v1342 = vpop.f32.mrf.mxu0
      %v1343 = vadd.f32 %v1118, %v1342
      %v1344 = vpop.f32.mrf.mxu0
      %1345 = vmatprep.mubr.f32.mxu0 %v636
      %1346 = vmatmul.mubr.f32.gmra.mxu0 %v634
      %v1347 = vpop.f32.mrf.mxu0
      %v1348 = vadd.f32 %v1123, %v1347
      %v1349 = vpop.f32.mrf.mxu0
      %1350 = vmatprep.mubr.f32.mxu0 %v637
      %1351 = vmatmul.mubr.f32.gmra.mxu0 %v635
      %v1352 = vpop.f32.mrf.mxu0
      %v1353 = vadd.f32 %v1128, %v1352
      %v1354 = vpop.f32.mrf.mxu0
      %1355 = vmatprep.mubr.f32.mxu0 %v638
      %1356 = vmatmul.mubr.f32.gmra.mxu0 %v636
      %v1357 = vpop.f32.mrf.mxu0
      %v1358 = vadd.f32 %v1133, %v1357
      %v1359 = vpop.f32.mrf.mxu0
      %1360 = vmatprep.mubr.f32.mxu0 %v639
      %1361 = vmatmul.mubr.f32.gmra.mxu0 %v637
      %v1362 = vpop.f32.mrf.mxu0
      %v1363 = vadd.f32 %v1138, %v1362
      %v1364 = vpop.f32.mrf.mxu0
      %1365 = vmatprep.mubr.f32.mxu0 %v640
      %1366 = vmatmul.mubr.f32.gmra.mxu0 %v638
      %v1367 = vpop.f32.mrf.mxu0
      %v1368 = vadd.f32 %v1143, %v1367
      %v1369 = vpop.f32.mrf.mxu0
      %1370 = vmatprep.mubr.f32.mxu0 %v641
      %1371 = vmatmul.mubr.f32.gmra.mxu0 %v639
      %v1372 = vpop.f32.mrf.mxu0
      %v1373 = vadd.f32 %v1148, %v1372
      %v1374 = vpop.f32.mrf.mxu0
      %1375 = vmatprep.mubr.f32.mxu0 %v642
      %1376 = vmatmul.mubr.f32.gmra.mxu0 %v640
      %v1377 = vpop.f32.mrf.mxu0
      %v1378 = vadd.f32 %v1153, %v1377
      %v1379 = vpop.f32.mrf.mxu0
      %1380 = vmatprep.mubr.f32.mxu0 %v643
      %1381 = vmatmul.mubr.f32.gmra.mxu0 %v641
      %v1382 = vpop.f32.mrf.mxu0
      %v1383 = vadd.f32 %v1158, %v1382
      %v1384 = vpop.f32.mrf.mxu0
      %1385 = vmatprep.mubr.f32.mxu0 %v644
      %1386 = vmatmul.mubr.f32.gmra.mxu0 %v642
      %v1387 = vpop.f32.mrf.mxu0
      %v1388 = vadd.f32 %v1163, %v1387
      %v1389 = vpop.f32.mrf.mxu0
      %1390 = vmatprep.mubr.f32.mxu0 %v645
      %1391 = vmatmul.mubr.f32.gmra.mxu0 %v643
      %v1392 = vpop.f32.mrf.mxu0
      %v1393 = vadd.f32 %v1168, %v1392
      %v1394 = vpop.f32.mrf.mxu0
      %1395 = vmatprep.mubr.f32.mxu0 %v646
      %1396 = vmatmul.mubr.f32.gmra.mxu0 %v644
      %v1397 = vpop.f32.mrf.mxu0
      %v1398 = vadd.f32 %v1173, %v1397
      %v1399 = vpop.f32.mrf.mxu0
      %1400 = vmatprep.mubr.f32.mxu0 %v647
      %1401 = vmatmul.mubr.f32.gmra.mxu0 %v645
      %v1402 = vpop.f32.mrf.mxu0
      %v1403 = vadd.f32 %v1178, %v1402
      %v1404 = vpop.f32.mrf.mxu0
      %1405 = vmatprep.mubr.f32.mxu0 %v648
      %1406 = vmatmul.mubr.f32.gmra.mxu0 %v646
      %v1407 = vpop.f32.mrf.mxu0
      %v1408 = vadd.f32 %v1183, %v1407
      %v1409 = vpop.f32.mrf.mxu0
      %1410 = vmatprep.mubr.f32.mxu0 %v649
      %1411 = vmatmul.mubr.f32.gmra.mxu0 %v647
      %v1412 = vpop.f32.mrf.mxu0
      %v1413 = vadd.f32 %v1188, %v1412
      %v1414 = vpop.f32.mrf.mxu0
      %1415 = vmatprep.mubr.f32.mxu0 %v650
      %1416 = vmatmul.mubr.f32.gmra.mxu0 %v648
      %v1417 = vpop.f32.mrf.mxu0
      %v1418 = vadd.f32 %v1193, %v1417
      %v1419 = vpop.f32.mrf.mxu0
      %1420 = vmatprep.mubr.f32.mxu0 %v651
      %1421 = vmatmul.mubr.f32.gmra.mxu0 %v649
      %v1422 = vpop.f32.mrf.mxu0
      %v1423 = vadd.f32 %v1198, %v1422
      %v1424 = vpop.f32.mrf.mxu0
      %1425 = vmatprep.mubr.f32.mxu0 %v652
      %1426 = vmatmul.mubr.f32.gmra.mxu0 %v650
      %v1427 = vpop.f32.mrf.mxu0
      %v1428 = vadd.f32 %v1203, %v1427
      %v1429 = vpop.f32.mrf.mxu0
      %1430 = vmatprep.mubr.f32.mxu0 %v653
      %1431 = vmatmul.mubr.f32.gmra.mxu0 %v651
      %v1432 = vpop.f32.mrf.mxu0
      %v1433 = vadd.f32 %v1208, %v1432
      %v1434 = vpop.f32.mrf.mxu0
      %1435 = vmatprep.mubr.f32.mxu0 %v654
      %1436 = vmatmul.mubr.f32.gmra.mxu0 %v652
      %v1437 = vpop.f32.mrf.mxu0
      %v1438 = vadd.f32 %v1213, %v1437
      %v1439 = vpop.f32.mrf.mxu0
      %1440 = vmatprep.mubr.f32.mxu0 %v655
      %1441 = vmatmul.mubr.f32.gmra.mxu0 %v653
      %v1442 = vpop.f32.mrf.mxu0
      %v1443 = vadd.f32 %v1218, %v1442
      %v1444 = vpop.f32.mrf.mxu0
      %1445 = vmatprep.mubr.f32.mxu0 %v656
      %1446 = vmatmul.mubr.f32.gmra.mxu0 %v654
      %v1447 = vpop.f32.mrf.mxu0
      %v1448 = vadd.f32 %v1223, %v1447
      %v1449 = vpop.f32.mrf.mxu0
      %1450 = vmatprep.mubr.f32.mxu0 %v657
      %1451 = vmatmul.mubr.f32.gmra.mxu0 %v655
      %v1452 = vpop.f32.mrf.mxu0
      %v1453 = vadd.f32 %v1228, %v1452
      %v1454 = vpop.f32.mrf.mxu0
      %1455 = vmatprep.mubr.f32.mxu0 %v658
      %1456 = vmatmul.mubr.f32.gmra.mxu0 %v656
      %v1457 = vpop.f32.mrf.mxu0
      %v1458 = vadd.f32 %v1233, %v1457
      %v1459 = vpop.f32.mrf.mxu0
      %1460 = vmatprep.mubr.f32.mxu0 %v659
      %1461 = vmatmul.mubr.f32.gmra.mxu0 %v657
      %v1462 = vpop.f32.mrf.mxu0
      %v1463 = vadd.f32 %v1238, %v1462
      %v1464 = vpop.f32.mrf.mxu0
      %1465 = vmatprep.mubr.f32.mxu0 %v660
      %1466 = vmatmul.mubr.f32.gmra.mxu0 %v658
      %v1467 = vpop.f32.mrf.mxu0
      %v1468 = vadd.f32 %v1243, %v1467
      %v1469 = vpop.f32.mrf.mxu0
      %1470 = vdwg.mxu0
      %1471 = vmatprep.subr.mxu0 0.0
      %1472 = vmatpush1.msra.mxu0 %v710
      %1473 = vmatprep.subr.mxu0 0.0
      %1474 = vmatpush1.msra.mxu0 %v709
      %1475 = vmatprep.subr.mxu0 0.0
      %1476 = vmatpush1.msra.mxu0 %v708
      %1477 = vmatprep.subr.mxu0 0.0
      %1478 = vmatpush1.msra.mxu0 %v707
      %1479 = vmatprep.subr.mxu0 0.0
      %1480 = vmatpush1.msra.mxu0 %v706
      %1481 = vmatprep.subr.mxu0 0.0
      %1482 = vmatpush1.msra.mxu0 %v705
      %1483 = vmatprep.subr.mxu0 0.0
      %1484 = vmatpush1.msra.mxu0 %v704
      %1485 = vmatprep.subr.mxu0 0.0
      %1486 = vmatpush1.msra.mxu0 %v703
      %1487 = vmatprep.subr.mxu0 0.0
      %1488 = vmatpush1.msra.mxu0 %v702
      %1489 = vmatprep.subr.mxu0 0.0
      %1490 = vmatpush1.msra.mxu0 %v701
      %1491 = vmatprep.subr.mxu0 0.0
      %1492 = vmatpush1.msra.mxu0 %v700
      %1493 = vmatprep.subr.mxu0 0.0
      %1494 = vmatpush1.msra.mxu0 %v699
      %1495 = vmatprep.subr.mxu0 0.0
      %1496 = vmatpush1.msra.mxu0 %v698
      %1497 = vmatprep.subr.mxu0 0.0
      %1498 = vmatpush1.msra.mxu0 %v697
      %1499 = vmatprep.subr.mxu0 0.0
      %1500 = vmatpush1.msra.mxu0 %v696
      %1501 = vmatprep.subr.mxu0 0.0
      %1502 = vmatpush1.msra.mxu0 %v695
      %1503 = vmatprep.subr.mxu0 0.0
      %1504 = vmatpush2.msra.mxu0 0.0
      %1505 = vmatprep.subr.mxu0 0.0
      %1506 = vmatpush2.msra.mxu0 0.0
      %1507 = vmatprep.subr.mxu0 0.0
      %1508 = vmatpush2.msra.mxu0 0.0
      %1509 = vmatprep.subr.mxu0 0.0
      %1510 = vmatpush2.msra.mxu0 0.0
      %1511 = vmatprep.subr.mxu0 0.0
      %1512 = vmatpush2.msra.mxu0 0.0
      %1513 = vmatprep.subr.mxu0 0.0
      %1514 = vmatpush2.msra.mxu0 0.0
      %1515 = vmatprep.subr.mxu0 0.0
      %1516 = vmatpush2.msra.mxu0 0.0
      %1517 = vmatprep.subr.mxu0 0.0
      %1518 = vmatpush2.msra.mxu0 0.0
      %1519 = vmatprep.subr.mxu0 0.0
      %1520 = vmatpush2.msra.mxu0 0.0
      %1521 = vmatprep.subr.mxu0 0.0
      %1522 = vmatpush2.msra.mxu0 0.0
      %1523 = vmatprep.subr.mxu0 0.0
      %1524 = vmatpush2.msra.mxu0 0.0
      %1525 = vmatprep.subr.mxu0 0.0
      %1526 = vmatpush2.msra.mxu0 0.0
      %1527 = vmatprep.subr.mxu0 0.0
      %1528 = vmatpush2.msra.mxu0 0.0
      %1529 = vmatprep.subr.mxu0 0.0
      %1530 = vmatpush2.msra.mxu0 0.0
      %1531 = vmatprep.subr.mxu0 0.0
      %1532 = vmatpush2.msra.mxu0 0.0
      %1533 = vmatprep.subr.mxu0 0.0
      %1534 = vmatpush2.msra.mxu0 0.0
      %1535 = vmatprep.mubr.f32.mxu0 0.0
      %1536 = vmatmul.mubr.f32.gmra.mxu0 %v631
      %v1537 = vpop.f32.mrf.mxu0
      %v1538 = vadd.f32 %v1313, %v1537
      %v1539 = vpop.f32.mrf.mxu0
      %1540 = vmatprep.mubr.f32.mxu0 0.0
      %1541 = vmatmul.mubr.f32.gmra.mxu0 %v632
      %v1542 = vpop.f32.mrf.mxu0
      %v1543 = vadd.f32 %v1318, %v1542
      %v1544 = vpop.f32.mrf.mxu0
      %1545 = vmatprep.mubr.f32.mxu0 0.0
      %1546 = vmatmul.mubr.f32.gmra.mxu0 %v633
      %v1547 = vpop.f32.mrf.mxu0
      %v1548 = vadd.f32 %v1323, %v1547
      %v1549 = vpop.f32.mrf.mxu0
      %1550 = vmatprep.mubr.f32.mxu0 0.0
      %1551 = vmatmul.mubr.f32.gmra.mxu0 %v634
      %v1552 = vpop.f32.mrf.mxu0
      %v1553 = vadd.f32 %v1328, %v1552
      %v1554 = vpop.f32.mrf.mxu0
      %1555 = vmatprep.mubr.f32.mxu0 0.0
      %1556 = vmatmul.mubr.f32.gmra.mxu0 %v635
      %v1557 = vpop.f32.mrf.mxu0
      %v1558 = vadd.f32 %v1333, %v1557
      %v1559 = vpop.f32.mrf.mxu0
      %1560 = vmatprep.mubr.f32.mxu0 0.0
      %1561 = vmatmul.mubr.f32.gmra.mxu0 %v636
      %v1562 = vpop.f32.mrf.mxu0
      %v1563 = vadd.f32 %v1338, %v1562
      %v1564 = vpop.f32.mrf.mxu0
      %1565 = vmatprep.mubr.f32.mxu0 0.0
      %1566 = vmatmul.mubr.f32.gmra.mxu0 %v637
      %v1567 = vpop.f32.mrf.mxu0
      %v1568 = vadd.f32 %v1343, %v1567
      %v1569 = vpop.f32.mrf.mxu0
      %1570 = vmatprep.mubr.f32.mxu0 0.0
      %1571 = vmatmul.mubr.f32.gmra.mxu0 %v638
      %v1572 = vpop.f32.mrf.mxu0
      %v1573 = vadd.f32 %v1348, %v1572
      %v1574 = vpop.f32.mrf.mxu0
      %1575 = vmatprep.mubr.f32.mxu0 0.0
      %1576 = vmatmul.mubr.f32.gmra.mxu0 %v639
      %v1577 = vpop.f32.mrf.mxu0
      %v1578 = vadd.f32 %v1353, %v1577
      %v1579 = vpop.f32.mrf.mxu0
      %1580 = vmatprep.mubr.f32.mxu0 0.0
      %1581 = vmatmul.mubr.f32.gmra.mxu0 %v640
      %v1582 = vpop.f32.mrf.mxu0
      %v1583 = vadd.f32 %v1358, %v1582
      %v1584 = vpop.f32.mrf.mxu0
      %1585 = vmatprep.mubr.f32.mxu0 0.0
      %1586 = vmatmul.mubr.f32.gmra.mxu0 %v641
      %v1587 = vpop.f32.mrf.mxu0
      %v1588 = vadd.f32 %v1363, %v1587
      %v1589 = vpop.f32.mrf.mxu0
      %1590 = vmatprep.mubr.f32.mxu0 0.0
      %1591 = vmatmul.mubr.f32.gmra.mxu0 %v642
      %v1592 = vpop.f32.mrf.mxu0
      %v1593 = vadd.f32 %v1368, %v1592
      %v1594 = vpop.f32.mrf.mxu0
      %1595 = vmatprep.mubr.f32.mxu0 0.0
      %1596 = vmatmul.mubr.f32.gmra.mxu0 %v643
      %v1597 = vpop.f32.mrf.mxu0
      %v1598 = vadd.f32 %v1373, %v1597
      %v1599 = vpop.f32.mrf.mxu0
      %1600 = vmatprep.mubr.f32.mxu0 0.0
      %1601 = vmatmul.mubr.f32.gmra.mxu0 %v644
      %v1602 = vpop.f32.mrf.mxu0
      %v1603 = vadd.f32 %v1378, %v1602
      %v1604 = vpop.f32.mrf.mxu0
      %1605 = vmatprep.mubr.f32.mxu0 0.0
      %1606 = vmatmul.mubr.f32.gmra.mxu0 %v645
      %v1607 = vpop.f32.mrf.mxu0
      %v1608 = vadd.f32 %v1383, %v1607
      %v1609 = vpop.f32.mrf.mxu0
      %1610 = vmatprep.mubr.f32.mxu0 0.0
      %1611 = vmatmul.mubr.f32.gmra.mxu0 %v646
      %v1612 = vpop.f32.mrf.mxu0
      %v1613 = vadd.f32 %v1388, %v1612
      %v1614 = vpop.f32.mrf.mxu0
      %1615 = vmatprep.mubr.f32.mxu0 0.0
      %1616 = vmatmul.mubr.f32.gmra.mxu0 %v647
      %v1617 = vpop.f32.mrf.mxu0
      %v1618 = vadd.f32 %v1393, %v1617
      %v1619 = vpop.f32.mrf.mxu0
      %1620 = vmatprep.mubr.f32.mxu0 0.0
      %1621 = vmatmul.mubr.f32.gmra.mxu0 %v648
      %v1622 = vpop.f32.mrf.mxu0
      %v1623 = vadd.f32 %v1398, %v1622
      %v1624 = vpop.f32.mrf.mxu0
      %1625 = vmatprep.mubr.f32.mxu0 0.0
      %1626 = vmatmul.mubr.f32.gmra.mxu0 %v649
      %v1627 = vpop.f32.mrf.mxu0
      %v1628 = vadd.f32 %v1403, %v1627
      %v1629 = vpop.f32.mrf.mxu0
      %1630 = vmatprep.mubr.f32.mxu0 0.0
      %1631 = vmatmul.mubr.f32.gmra.mxu0 %v650
      %v1632 = vpop.f32.mrf.mxu0
      %v1633 = vadd.f32 %v1408, %v1632
      %v1634 = vpop.f32.mrf.mxu0
      %1635 = vmatprep.mubr.f32.mxu0 0.0
      %1636 = vmatmul.mubr.f32.gmra.mxu0 %v651
      %v1637 = vpop.f32.mrf.mxu0
      %v1638 = vadd.f32 %v1413, %v1637
      %v1639 = vpop.f32.mrf.mxu0
      %1640 = vmatprep.mubr.f32.mxu0 0.0
      %1641 = vmatmul.mubr.f32.gmra.mxu0 %v652
      %v1642 = vpop.f32.mrf.mxu0
      %v1643 = vadd.f32 %v1418, %v1642
      %v1644 = vpop.f32.mrf.mxu0
      %1645 = vmatprep.mubr.f32.mxu0 0.0
      %1646 = vmatmul.mubr.f32.gmra.mxu0 %v653
      %v1647 = vpop.f32.mrf.mxu0
      %v1648 = vadd.f32 %v1423, %v1647
      %v1649 = vpop.f32.mrf.mxu0
      %1650 = vmatprep.mubr.f32.mxu0 0.0
      %1651 = vmatmul.mubr.f32.gmra.mxu0 %v654
      %v1652 = vpop.f32.mrf.mxu0
      %v1653 = vadd.f32 %v1428, %v1652
      %v1654 = vpop.f32.mrf.mxu0
      %1655 = vmatprep.mubr.f32.mxu0 0.0
      %1656 = vmatmul.mubr.f32.gmra.mxu0 %v655
      %v1657 = vpop.f32.mrf.mxu0
      %v1658 = vadd.f32 %v1433, %v1657
      %v1659 = vpop.f32.mrf.mxu0
      %1660 = vmatprep.mubr.f32.mxu0 0.0
      %1661 = vmatmul.mubr.f32.gmra.mxu0 %v656
      %v1662 = vpop.f32.mrf.mxu0
      %v1663 = vadd.f32 %v1438, %v1662
      %v1664 = vpop.f32.mrf.mxu0
      %1665 = vmatprep.mubr.f32.mxu0 0.0
      %1666 = vmatmul.mubr.f32.gmra.mxu0 %v657
      %v1667 = vpop.f32.mrf.mxu0
      %v1668 = vadd.f32 %v1443, %v1667
      %v1669 = vpop.f32.mrf.mxu0
      %1670 = vmatprep.mubr.f32.mxu0 0.0
      %1671 = vmatmul.mubr.f32.gmra.mxu0 %v658
      %v1672 = vpop.f32.mrf.mxu0
      %v1673 = vadd.f32 %v1448, %v1672
      %v1674 = vpop.f32.mrf.mxu0
      %1675 = vmatprep.mubr.f32.mxu0 0.0
      %1676 = vmatmul.mubr.f32.gmra.mxu0 %v659
      %v1677 = vpop.f32.mrf.mxu0
      %v1678 = vadd.f32 %v1453, %v1677
      %v1679 = vpop.f32.mrf.mxu0
      %1680 = vmatprep.mubr.f32.mxu0 0.0
      %1681 = vmatmul.mubr.f32.gmra.mxu0 %v660
      %v1682 = vpop.f32.mrf.mxu0
      %v1683 = vadd.f32 %v1458, %v1682
      %v1684 = vpop.f32.mrf.mxu0
      %1685 = vmatprep.mubr.f32.mxu0 0.0
      %1686 = vmatmul.mubr.f32.gmra.mxu0 %v661
      %v1687 = vpop.f32.mrf.mxu0
      %v1688 = vadd.f32 %v1463, %v1687
      %v1689 = vpop.f32.mrf.mxu0
      %1690 = vmatprep.mubr.f32.mxu0 0.0
      %1691 = vmatmul.mubr.f32.gmra.mxu0 %v662
      %v1692 = vpop.f32.mrf.mxu0
      %v1693 = vadd.f32 %v1468, %v1692
      %v1694 = vpop.f32.mrf.mxu0
      %1695 = vdwg.mxu0
      %v1696 = vld [vmem:[#allocation2 + $0x9] sm:$0xff]
      %v1697 = vld [vmem:[#allocation2 + $0x11] sm:$0xff]
      %v1698 = vld [vmem:[#allocation2 + $0x29] sm:$0xff]
      %v1699 = vld [vmem:[#allocation2 + $0x31] sm:$0xff]
      %v1700 = vld [vmem:[#allocation2 + $0x49] sm:$0xff]
      %v1701 = vld [vmem:[#allocation2 + $0x51] sm:$0xff]
      %v1702 = vld [vmem:[#allocation2 + $0x69] sm:$0xff]
      %v1703 = vld [vmem:[#allocation2 + $0x71] sm:$0xff]
      %v1704 = vld [vmem:[#allocation2 + $0x89] sm:$0xff]
      %v1705 = vld [vmem:[#allocation2 + $0x91] sm:$0xff]
      %v1706 = vld [vmem:[#allocation2 + $0xa9] sm:$0xff]
      %v1707 = vld [vmem:[#allocation2 + $0xb1] sm:$0xff]
      %v1708 = vld [vmem:[#allocation2 + $0xc9] sm:$0xff]
      %v1709 = vld [vmem:[#allocation2 + $0xd1] sm:$0xff]
      %v1710 = vld [vmem:[#allocation2 + $0xe9] sm:$0xff]
      %v1711 = vld [vmem:[#allocation2 + $0xf1] sm:$0xff]
      %v1712 = vld [vmem:[#allocation2 + $0x109] sm:$0xff]
      %v1713 = vld [vmem:[#allocation2 + $0x111] sm:$0xff]
      %v1714 = vld [vmem:[#allocation2 + $0x129] sm:$0xff]
      %v1715 = vld [vmem:[#allocation2 + $0x131] sm:$0xff]
      %v1716 = vld [vmem:[#allocation2 + $0x149] sm:$0xff]
      %v1717 = vld [vmem:[#allocation2 + $0x151] sm:$0xff]
      %v1718 = vld [vmem:[#allocation2 + $0x169] sm:$0xff]
      %v1719 = vld [vmem:[#allocation2 + $0x171] sm:$0xff]
      %v1720 = vld [vmem:[#allocation2 + $0x189] sm:$0xff]
      %v1721 = vld [vmem:[#allocation2 + $0x191] sm:$0xff]
      %v1722 = vld [vmem:[#allocation2 + $0x1a9] sm:$0xff]
      %v1723 = vld [vmem:[#allocation2 + $0x1b1] sm:$0xff]
      %v1724 = vld [vmem:[#allocation2 + $0x1c9] sm:$0xff]
      %v1725 = vld [vmem:[#allocation2 + $0x1d1] sm:$0xff]
      %v1726 = vld [vmem:[#allocation2 + $0x1e9] sm:$0xff]
      %v1727 = vld [vmem:[#allocation2 + $0x1f1] sm:$0xff]
      %v1728 = vld [vmem:[#allocation2 + $0x209] sm:$0xff]
      %v1729 = vld [vmem:[#allocation2 + $0x211] sm:$0xff]
      %v1730 = vld [vmem:[#allocation2 + $0x229] sm:$0xff]
      %v1731 = vld [vmem:[#allocation2 + $0x231] sm:$0xff]
      %vm1732 = vcmp.eq.s32.totalorder %v619, 15
      %vm1733 = vcmp.eq.s32.totalorder %v620, 15
      %v1734 = vsel %vm1732, 1, 0
      %v1735 = vsel %vm1733, 1, 0
      %vm1736 = vcmp.eq.s32.totalorder %v1734, 1
      %vm1737 = vcmp.eq.s32.totalorder %v1735, 1
      %v1738 = vsel %vm1736, 0.0, %v1696
      %v1739 = vsel %vm1737, 0.0, %v1697
      %v1740 = vsel %vm1736, 0.0, %v1698
      %v1741 = vsel %vm1737, 0.0, %v1699
      %v1742 = vsel %vm1736, 0.0, %v1700
      %v1743 = vsel %vm1737, 0.0, %v1701
      %v1744 = vsel %vm1736, 0.0, %v1702
      %v1745 = vsel %vm1737, 0.0, %v1703
      %v1746 = vsel %vm1736, 0.0, %v1704
      %v1747 = vsel %vm1737, 0.0, %v1705
      %v1748 = vsel %vm1736, 0.0, %v1706
      %v1749 = vsel %vm1737, 0.0, %v1707
      %v1750 = vsel %vm1736, 0.0, %v1708
      %v1751 = vsel %vm1737, 0.0, %v1709
      %v1752 = vsel %vm1736, 0.0, %v1710
      %v1753 = vsel %vm1737, 0.0, %v1711
      %v1754 = vsel %vm1736, 0.0, %v1712
      %v1755 = vsel %vm1737, 0.0, %v1713
      %v1756 = vsel %vm1736, 0.0, %v1714
      %v1757 = vsel %vm1737, 0.0, %v1715
      %v1758 = vsel %vm1736, 0.0, %v1716
      %v1759 = vsel %vm1737, 0.0, %v1717
      %v1760 = vsel %vm1736, 0.0, %v1718
      %v1761 = vsel %vm1737, 0.0, %v1719
      %v1762 = vsel %vm1736, 0.0, %v1720
      %v1763 = vsel %vm1737, 0.0, %v1721
      %v1764 = vsel %vm1736, 0.0, %v1722
      %v1765 = vsel %vm1737, 0.0, %v1723
      %v1766 = vsel %vm1736, 0.0, %v1724
      %v1767 = vsel %vm1737, 0.0, %v1725
      %v1768 = vsel %vm1736, 0.0, %v1726
      %v1769 = vsel %vm1737, 0.0, %v1727
      %v1770 = vsel %vm1736, 0.0, %v1728
      %v1771 = vsel %vm1737, 0.0, %v1729
      %v1772 = vsel %vm1736, 0.0, %v1730
      %v1773 = vsel %vm1737, 0.0, %v1731
      %s1774 = scalar_lea.vmem %s5, 768
      %v1775 = vld [vmem:[%s1774] sm:$0xff]
      %v1776 = vld [vmem:[%s1774 + $0x8] sm:$0xff]
      %v1777 = vld [vmem:[%s1774 + $0x10] sm:$0xff]
      %v1778 = vld [vmem:[%s1774 + $0x18] sm:$0xff]
      %v1779 = vld [vmem:[%s1774 + $0x20] sm:$0xff]
      %v1780 = vld [vmem:[%s1774 + $0x28] sm:$0xff]
      %v1781 = vld [vmem:[%s1774 + $0x30] sm:$0xff]
      %v1782 = vld [vmem:[%s1774 + $0x38] sm:$0xff]
      %v1783 = vld [vmem:[%s1774 + $0x40] sm:$0xff]
      %v1784 = vld [vmem:[%s1774 + $0x48] sm:$0xff]
      %v1785 = vld [vmem:[%s1774 + $0x50] sm:$0xff]
      %v1786 = vld [vmem:[%s1774 + $0x58] sm:$0xff]
      %v1787 = vld [vmem:[%s1774 + $0x60] sm:$0xff]
      %v1788 = vld [vmem:[%s1774 + $0x68] sm:$0xff]
      %v1789 = vld [vmem:[%s1774 + $0x70] sm:$0xff]
      %v1790 = vld [vmem:[%s1774 + $0x78] sm:$0xff]
      %v1791 = vld [vmem:[%s1774 + $0x80] sm:$0xff]
      %v1792 = vld [vmem:[%s1774 + $0x88] sm:$0xff]
      %v1793 = vld [vmem:[%s1774 + $0x90] sm:$0xff]
      %v1794 = vld [vmem:[%s1774 + $0x98] sm:$0xff]
      %v1795 = vld [vmem:[%s1774 + $0xa0] sm:$0xff]
      %v1796 = vld [vmem:[%s1774 + $0xa8] sm:$0xff]
      %v1797 = vld [vmem:[%s1774 + $0xb0] sm:$0xff]
      %v1798 = vld [vmem:[%s1774 + $0xb8] sm:$0xff]
      %v1799 = vld [vmem:[%s1774 + $0xc0] sm:$0xff]
      %v1800 = vld [vmem:[%s1774 + $0xc8] sm:$0xff]
      %v1801 = vld [vmem:[%s1774 + $0xd0] sm:$0xff]
      %v1802 = vld [vmem:[%s1774 + $0xd8] sm:$0xff]
      %v1803 = vld [vmem:[%s1774 + $0xe0] sm:$0xff]
      %v1804 = vld [vmem:[%s1774 + $0xe8] sm:$0xff]
      %v1805 = vld [vmem:[%s1774 + $0xf0] sm:$0xff]
      %v1806 = vld [vmem:[%s1774 + $0xf8] sm:$0xff]
      %v1807 = vld [vmem:[%s1774 + $0x100] sm:$0xff]
      %v1808 = vld [vmem:[%s1774 + $0x108] sm:$0xff]
      %v1809 = vld [vmem:[%s1774 + $0x110] sm:$0xff]
      %v1810 = vld [vmem:[%s1774 + $0x118] sm:$0xff]
      %v1811 = vld [vmem:[%s1774 + $0x120] sm:$0xff]
      %v1812 = vld [vmem:[%s1774 + $0x128] sm:$0xff]
      %v1813 = vld [vmem:[%s1774 + $0x130] sm:$0xff]
      %v1814 = vld [vmem:[%s1774 + $0x138] sm:$0xff]
      %v1815 = vld [vmem:[%s1774 + $0x140] sm:$0xff]
      %v1816 = vld [vmem:[%s1774 + $0x148] sm:$0xff]
      %v1817 = vld [vmem:[%s1774 + $0x150] sm:$0xff]
      %v1818 = vld [vmem:[%s1774 + $0x158] sm:$0xff]
      %v1819 = vld [vmem:[%s1774 + $0x160] sm:$0xff]
      %v1820 = vld [vmem:[%s1774 + $0x168] sm:$0xff]
      %v1821 = vld [vmem:[%s1774 + $0x170] sm:$0xff]
      %v1822 = vld [vmem:[%s1774 + $0x178] sm:$0xff]
      %1823 = vmatprep.subr.mxu0 0.0
      %1824 = vmatpush1.msra.mxu0 %v1790
      %1825 = vmatprep.subr.mxu0 0.0
      %1826 = vmatpush1.msra.mxu0 %v1789
      %1827 = vmatprep.subr.mxu0 0.0
      %1828 = vmatpush1.msra.mxu0 %v1788
      %1829 = vmatprep.subr.mxu0 0.0
      %1830 = vmatpush1.msra.mxu0 %v1787
      %1831 = vmatprep.subr.mxu0 0.0
      %1832 = vmatpush1.msra.mxu0 %v1786
      %1833 = vmatprep.subr.mxu0 0.0
      %1834 = vmatpush1.msra.mxu0 %v1785
      %1835 = vmatprep.subr.mxu0 0.0
      %1836 = vmatpush1.msra.mxu0 %v1784
      %1837 = vmatprep.subr.mxu0 0.0
      %1838 = vmatpush1.msra.mxu0 %v1783
      %1839 = vmatprep.subr.mxu0 0.0
      %1840 = vmatpush1.msra.mxu0 %v1782
      %1841 = vmatprep.subr.mxu0 0.0
      %1842 = vmatpush1.msra.mxu0 %v1781
      %1843 = vmatprep.subr.mxu0 0.0
      %1844 = vmatpush1.msra.mxu0 %v1780
      %1845 = vmatprep.subr.mxu0 0.0
      %1846 = vmatpush1.msra.mxu0 %v1779
      %1847 = vmatprep.subr.mxu0 0.0
      %1848 = vmatpush1.msra.mxu0 %v1778
      %1849 = vmatprep.subr.mxu0 0.0
      %1850 = vmatpush1.msra.mxu0 %v1777
      %1851 = vmatprep.subr.mxu0 0.0
      %1852 = vmatpush1.msra.mxu0 %v1776
      %1853 = vmatprep.subr.mxu0 0.0
      %1854 = vmatpush1.msra.mxu0 %v1775
      %1855 = vmatprep.subr.mxu0 0.0
      %1856 = vmatpush2.msra.mxu0 %v1806
      %1857 = vmatprep.subr.mxu0 0.0
      %1858 = vmatpush2.msra.mxu0 %v1805
      %1859 = vmatprep.subr.mxu0 0.0
      %1860 = vmatpush2.msra.mxu0 %v1804
      %1861 = vmatprep.subr.mxu0 0.0
      %1862 = vmatpush2.msra.mxu0 %v1803
      %1863 = vmatprep.subr.mxu0 0.0
      %1864 = vmatpush2.msra.mxu0 %v1802
      %1865 = vmatprep.subr.mxu0 0.0
      %1866 = vmatpush2.msra.mxu0 %v1801
      %1867 = vmatprep.subr.mxu0 0.0
      %1868 = vmatpush2.msra.mxu0 %v1800
      %1869 = vmatprep.subr.mxu0 0.0
      %1870 = vmatpush2.msra.mxu0 %v1799
      %1871 = vmatprep.subr.mxu0 0.0
      %1872 = vmatpush2.msra.mxu0 %v1798
      %1873 = vmatprep.subr.mxu0 0.0
      %1874 = vmatpush2.msra.mxu0 %v1797
      %1875 = vmatprep.subr.mxu0 0.0
      %1876 = vmatpush2.msra.mxu0 %v1796
      %1877 = vmatprep.subr.mxu0 0.0
      %1878 = vmatpush2.msra.mxu0 %v1795
      %1879 = vmatprep.subr.mxu0 0.0
      %1880 = vmatpush2.msra.mxu0 %v1794
      %1881 = vmatprep.subr.mxu0 0.0
      %1882 = vmatpush2.msra.mxu0 %v1793
      %1883 = vmatprep.subr.mxu0 0.0
      %1884 = vmatpush2.msra.mxu0 %v1792
      %1885 = vmatprep.subr.mxu0 0.0
      %1886 = vmatpush2.msra.mxu0 %v1791
      %1887 = vmatprep.mubr.f32.mxu0 %v1740
      %1888 = vmatmul.mubr.f32.gmra.mxu0 %v1738
      %v1889 = vpop.f32.mrf.mxu0
      %v1890 = vadd.f32 0.0, %v1889
      %v1891 = vpop.f32.mrf.mxu0
      %1892 = vmatprep.mubr.f32.mxu0 %v1741
      %1893 = vmatmul.mubr.f32.gmra.mxu0 %v1739
      %v1894 = vpop.f32.mrf.mxu0
      %v1895 = vadd.f32 0.0, %v1894
      %v1896 = vpop.f32.mrf.mxu0
      %1897 = vmatprep.mubr.f32.mxu0 %v1742
      %1898 = vmatmul.mubr.f32.gmra.mxu0 %v1740
      %v1899 = vpop.f32.mrf.mxu0
      %v1900 = vadd.f32 0.0, %v1899
      %v1901 = vpop.f32.mrf.mxu0
      %1902 = vmatprep.mubr.f32.mxu0 %v1743
      %1903 = vmatmul.mubr.f32.gmra.mxu0 %v1741
      %v1904 = vpop.f32.mrf.mxu0
      %v1905 = vadd.f32 0.0, %v1904
      %v1906 = vpop.f32.mrf.mxu0
      %1907 = vmatprep.mubr.f32.mxu0 %v1744
      %1908 = vmatmul.mubr.f32.gmra.mxu0 %v1742
      %v1909 = vpop.f32.mrf.mxu0
      %v1910 = vadd.f32 0.0, %v1909
      %v1911 = vpop.f32.mrf.mxu0
      %1912 = vmatprep.mubr.f32.mxu0 %v1745
      %1913 = vmatmul.mubr.f32.gmra.mxu0 %v1743
      %v1914 = vpop.f32.mrf.mxu0
      %v1915 = vadd.f32 0.0, %v1914
      %v1916 = vpop.f32.mrf.mxu0
      %1917 = vmatprep.mubr.f32.mxu0 %v1746
      %1918 = vmatmul.mubr.f32.gmra.mxu0 %v1744
      %v1919 = vpop.f32.mrf.mxu0
      %v1920 = vadd.f32 0.0, %v1919
      %v1921 = vpop.f32.mrf.mxu0
      %1922 = vmatprep.mubr.f32.mxu0 %v1747
      %1923 = vmatmul.mubr.f32.gmra.mxu0 %v1745
      %v1924 = vpop.f32.mrf.mxu0
      %v1925 = vadd.f32 0.0, %v1924
      %v1926 = vpop.f32.mrf.mxu0
      %1927 = vmatprep.mubr.f32.mxu0 %v1748
      %1928 = vmatmul.mubr.f32.gmra.mxu0 %v1746
      %v1929 = vpop.f32.mrf.mxu0
      %v1930 = vadd.f32 0.0, %v1929
      %v1931 = vpop.f32.mrf.mxu0
      %1932 = vmatprep.mubr.f32.mxu0 %v1749
      %1933 = vmatmul.mubr.f32.gmra.mxu0 %v1747
      %v1934 = vpop.f32.mrf.mxu0
      %v1935 = vadd.f32 0.0, %v1934
      %v1936 = vpop.f32.mrf.mxu0
      %1937 = vmatprep.mubr.f32.mxu0 %v1750
      %1938 = vmatmul.mubr.f32.gmra.mxu0 %v1748
      %v1939 = vpop.f32.mrf.mxu0
      %v1940 = vadd.f32 0.0, %v1939
      %v1941 = vpop.f32.mrf.mxu0
      %1942 = vmatprep.mubr.f32.mxu0 %v1751
      %1943 = vmatmul.mubr.f32.gmra.mxu0 %v1749
      %v1944 = vpop.f32.mrf.mxu0
      %v1945 = vadd.f32 0.0, %v1944
      %v1946 = vpop.f32.mrf.mxu0
      %1947 = vmatprep.mubr.f32.mxu0 %v1752
      %1948 = vmatmul.mubr.f32.gmra.mxu0 %v1750
      %v1949 = vpop.f32.mrf.mxu0
      %v1950 = vadd.f32 0.0, %v1949
      %v1951 = vpop.f32.mrf.mxu0
      %1952 = vmatprep.mubr.f32.mxu0 %v1753
      %1953 = vmatmul.mubr.f32.gmra.mxu0 %v1751
      %v1954 = vpop.f32.mrf.mxu0
      %v1955 = vadd.f32 0.0, %v1954
      %v1956 = vpop.f32.mrf.mxu0
      %1957 = vmatprep.mubr.f32.mxu0 %v1754
      %1958 = vmatmul.mubr.f32.gmra.mxu0 %v1752
      %v1959 = vpop.f32.mrf.mxu0
      %v1960 = vadd.f32 0.0, %v1959
      %v1961 = vpop.f32.mrf.mxu0
      %1962 = vmatprep.mubr.f32.mxu0 %v1755
      %1963 = vmatmul.mubr.f32.gmra.mxu0 %v1753
      %v1964 = vpop.f32.mrf.mxu0
      %v1965 = vadd.f32 0.0, %v1964
      %v1966 = vpop.f32.mrf.mxu0
      %1967 = vmatprep.mubr.f32.mxu0 %v1756
      %1968 = vmatmul.mubr.f32.gmra.mxu0 %v1754
      %v1969 = vpop.f32.mrf.mxu0
      %v1970 = vadd.f32 0.0, %v1969
      %v1971 = vpop.f32.mrf.mxu0
      %1972 = vmatprep.mubr.f32.mxu0 %v1757
      %1973 = vmatmul.mubr.f32.gmra.mxu0 %v1755
      %v1974 = vpop.f32.mrf.mxu0
      %v1975 = vadd.f32 0.0, %v1974
      %v1976 = vpop.f32.mrf.mxu0
      %1977 = vmatprep.mubr.f32.mxu0 %v1758
      %1978 = vmatmul.mubr.f32.gmra.mxu0 %v1756
      %v1979 = vpop.f32.mrf.mxu0
      %v1980 = vadd.f32 0.0, %v1979
      %v1981 = vpop.f32.mrf.mxu0
      %1982 = vmatprep.mubr.f32.mxu0 %v1759
      %1983 = vmatmul.mubr.f32.gmra.mxu0 %v1757
      %v1984 = vpop.f32.mrf.mxu0
      %v1985 = vadd.f32 0.0, %v1984
      %v1986 = vpop.f32.mrf.mxu0
      %1987 = vmatprep.mubr.f32.mxu0 %v1760
      %1988 = vmatmul.mubr.f32.gmra.mxu0 %v1758
      %v1989 = vpop.f32.mrf.mxu0
      %v1990 = vadd.f32 0.0, %v1989
      %v1991 = vpop.f32.mrf.mxu0
      %1992 = vmatprep.mubr.f32.mxu0 %v1761
      %1993 = vmatmul.mubr.f32.gmra.mxu0 %v1759
      %v1994 = vpop.f32.mrf.mxu0
      %v1995 = vadd.f32 0.0, %v1994
      %v1996 = vpop.f32.mrf.mxu0
      %1997 = vmatprep.mubr.f32.mxu0 %v1762
      %1998 = vmatmul.mubr.f32.gmra.mxu0 %v1760
      %v1999 = vpop.f32.mrf.mxu0
      %v2000 = vadd.f32 0.0, %v1999
      %v2001 = vpop.f32.mrf.mxu0
      %2002 = vmatprep.mubr.f32.mxu0 %v1763
      %2003 = vmatmul.mubr.f32.gmra.mxu0 %v1761
      %v2004 = vpop.f32.mrf.mxu0
      %v2005 = vadd.f32 0.0, %v2004
      %v2006 = vpop.f32.mrf.mxu0
      %2007 = vmatprep.mubr.f32.mxu0 %v1764
      %2008 = vmatmul.mubr.f32.gmra.mxu0 %v1762
      %v2009 = vpop.f32.mrf.mxu0
      %v2010 = vadd.f32 0.0, %v2009
      %v2011 = vpop.f32.mrf.mxu0
      %2012 = vmatprep.mubr.f32.mxu0 %v1765
      %2013 = vmatmul.mubr.f32.gmra.mxu0 %v1763
      %v2014 = vpop.f32.mrf.mxu0
      %v2015 = vadd.f32 0.0, %v2014
      %v2016 = vpop.f32.mrf.mxu0
      %2017 = vmatprep.mubr.f32.mxu0 %v1766
      %2018 = vmatmul.mubr.f32.gmra.mxu0 %v1764
      %v2019 = vpop.f32.mrf.mxu0
      %v2020 = vadd.f32 0.0, %v2019
      %v2021 = vpop.f32.mrf.mxu0
      %2022 = vmatprep.mubr.f32.mxu0 %v1767
      %2023 = vmatmul.mubr.f32.gmra.mxu0 %v1765
      %v2024 = vpop.f32.mrf.mxu0
      %v2025 = vadd.f32 0.0, %v2024
      %v2026 = vpop.f32.mrf.mxu0
      %2027 = vmatprep.mubr.f32.mxu0 %v1768
      %2028 = vmatmul.mubr.f32.gmra.mxu0 %v1766
      %v2029 = vpop.f32.mrf.mxu0
      %v2030 = vadd.f32 0.0, %v2029
      %v2031 = vpop.f32.mrf.mxu0
      %2032 = vmatprep.mubr.f32.mxu0 %v1769
      %2033 = vmatmul.mubr.f32.gmra.mxu0 %v1767
      %v2034 = vpop.f32.mrf.mxu0
      %v2035 = vadd.f32 0.0, %v2034
      %v2036 = vpop.f32.mrf.mxu0
      %2037 = vmatprep.mubr.f32.mxu0 %v1770
      %2038 = vmatmul.mubr.f32.gmra.mxu0 %v1768
      %v2039 = vpop.f32.mrf.mxu0
      %v2040 = vadd.f32 0.0, %v2039
      %v2041 = vpop.f32.mrf.mxu0
      %2042 = vmatprep.mubr.f32.mxu0 %v1771
      %2043 = vmatmul.mubr.f32.gmra.mxu0 %v1769
      %v2044 = vpop.f32.mrf.mxu0
      %v2045 = vadd.f32 0.0, %v2044
      %v2046 = vpop.f32.mrf.mxu0
      %2047 = vdwg.mxu0
      %2048 = vmatprep.subr.mxu0 0.0
      %2049 = vmatpush1.msra.mxu0 %v1822
      %2050 = vmatprep.subr.mxu0 0.0
      %2051 = vmatpush1.msra.mxu0 %v1821
      %2052 = vmatprep.subr.mxu0 0.0
      %2053 = vmatpush1.msra.mxu0 %v1820
      %2054 = vmatprep.subr.mxu0 0.0
      %2055 = vmatpush1.msra.mxu0 %v1819
      %2056 = vmatprep.subr.mxu0 0.0
      %2057 = vmatpush1.msra.mxu0 %v1818
      %2058 = vmatprep.subr.mxu0 0.0
      %2059 = vmatpush1.msra.mxu0 %v1817
      %2060 = vmatprep.subr.mxu0 0.0
      %2061 = vmatpush1.msra.mxu0 %v1816
      %2062 = vmatprep.subr.mxu0 0.0
      %2063 = vmatpush1.msra.mxu0 %v1815
      %2064 = vmatprep.subr.mxu0 0.0
      %2065 = vmatpush1.msra.mxu0 %v1814
      %2066 = vmatprep.subr.mxu0 0.0
      %2067 = vmatpush1.msra.mxu0 %v1813
      %2068 = vmatprep.subr.mxu0 0.0
      %2069 = vmatpush1.msra.mxu0 %v1812
      %2070 = vmatprep.subr.mxu0 0.0
      %2071 = vmatpush1.msra.mxu0 %v1811
      %2072 = vmatprep.subr.mxu0 0.0
      %2073 = vmatpush1.msra.mxu0 %v1810
      %2074 = vmatprep.subr.mxu0 0.0
      %2075 = vmatpush1.msra.mxu0 %v1809
      %2076 = vmatprep.subr.mxu0 0.0
      %2077 = vmatpush1.msra.mxu0 %v1808
      %2078 = vmatprep.subr.mxu0 0.0
      %2079 = vmatpush1.msra.mxu0 %v1807
      %2080 = vmatprep.subr.mxu0 0.0
      %2081 = vmatpush2.msra.mxu0 0.0
      %2082 = vmatprep.subr.mxu0 0.0
      %2083 = vmatpush2.msra.mxu0 0.0
      %2084 = vmatprep.subr.mxu0 0.0
      %2085 = vmatpush2.msra.mxu0 0.0
      %2086 = vmatprep.subr.mxu0 0.0
      %2087 = vmatpush2.msra.mxu0 0.0
      %2088 = vmatprep.subr.mxu0 0.0
      %2089 = vmatpush2.msra.mxu0 0.0
      %2090 = vmatprep.subr.mxu0 0.0
      %2091 = vmatpush2.msra.mxu0 0.0
      %2092 = vmatprep.subr.mxu0 0.0
      %2093 = vmatpush2.msra.mxu0 0.0
      %2094 = vmatprep.subr.mxu0 0.0
      %2095 = vmatpush2.msra.mxu0 0.0
      %2096 = vmatprep.subr.mxu0 0.0
      %2097 = vmatpush2.msra.mxu0 0.0
      %2098 = vmatprep.subr.mxu0 0.0
      %2099 = vmatpush2.msra.mxu0 0.0
      %2100 = vmatprep.subr.mxu0 0.0
      %2101 = vmatpush2.msra.mxu0 0.0
      %2102 = vmatprep.subr.mxu0 0.0
      %2103 = vmatpush2.msra.mxu0 0.0
      %2104 = vmatprep.subr.mxu0 0.0
      %2105 = vmatpush2.msra.mxu0 0.0
      %2106 = vmatprep.subr.mxu0 0.0
      %2107 = vmatpush2.msra.mxu0 0.0
      %2108 = vmatprep.subr.mxu0 0.0
      %2109 = vmatpush2.msra.mxu0 0.0
      %2110 = vmatprep.subr.mxu0 0.0
      %2111 = vmatpush2.msra.mxu0 0.0
      %2112 = vmatprep.mubr.f32.mxu0 0.0
      %2113 = vmatmul.mubr.f32.gmra.mxu0 %v1742
      %v2114 = vpop.f32.mrf.mxu0
      %v2115 = vadd.f32 %v1890, %v2114
      %v2116 = vpop.f32.mrf.mxu0
      %2117 = vmatprep.mubr.f32.mxu0 0.0
      %2118 = vmatmul.mubr.f32.gmra.mxu0 %v1743
      %v2119 = vpop.f32.mrf.mxu0
      %v2120 = vadd.f32 %v1895, %v2119
      %v2121 = vpop.f32.mrf.mxu0
      %2122 = vmatprep.mubr.f32.mxu0 0.0
      %2123 = vmatmul.mubr.f32.gmra.mxu0 %v1744
      %v2124 = vpop.f32.mrf.mxu0
      %v2125 = vadd.f32 %v1900, %v2124
      %v2126 = vpop.f32.mrf.mxu0
      %2127 = vmatprep.mubr.f32.mxu0 0.0
      %2128 = vmatmul.mubr.f32.gmra.mxu0 %v1745
      %v2129 = vpop.f32.mrf.mxu0
      %v2130 = vadd.f32 %v1905, %v2129
      %v2131 = vpop.f32.mrf.mxu0
      %2132 = vmatprep.mubr.f32.mxu0 0.0
      %2133 = vmatmul.mubr.f32.gmra.mxu0 %v1746
      %v2134 = vpop.f32.mrf.mxu0
      %v2135 = vadd.f32 %v1910, %v2134
      %v2136 = vpop.f32.mrf.mxu0
      %2137 = vmatprep.mubr.f32.mxu0 0.0
      %2138 = vmatmul.mubr.f32.gmra.mxu0 %v1747
      %v2139 = vpop.f32.mrf.mxu0
      %v2140 = vadd.f32 %v1915, %v2139
      %v2141 = vpop.f32.mrf.mxu0
      %2142 = vmatprep.mubr.f32.mxu0 0.0
      %2143 = vmatmul.mubr.f32.gmra.mxu0 %v1748
      %v2144 = vpop.f32.mrf.mxu0
      %v2145 = vadd.f32 %v1920, %v2144
      %v2146 = vpop.f32.mrf.mxu0
      %2147 = vmatprep.mubr.f32.mxu0 0.0
      %2148 = vmatmul.mubr.f32.gmra.mxu0 %v1749
      %v2149 = vpop.f32.mrf.mxu0
      %v2150 = vadd.f32 %v1925, %v2149
      %v2151 = vpop.f32.mrf.mxu0
      %2152 = vmatprep.mubr.f32.mxu0 0.0
      %2153 = vmatmul.mubr.f32.gmra.mxu0 %v1750
      %v2154 = vpop.f32.mrf.mxu0
      %v2155 = vadd.f32 %v1930, %v2154
      %v2156 = vpop.f32.mrf.mxu0
      %2157 = vmatprep.mubr.f32.mxu0 0.0
      %2158 = vmatmul.mubr.f32.gmra.mxu0 %v1751
      %v2159 = vpop.f32.mrf.mxu0
      %v2160 = vadd.f32 %v1935, %v2159
      %v2161 = vpop.f32.mrf.mxu0
      %2162 = vmatprep.mubr.f32.mxu0 0.0
      %2163 = vmatmul.mubr.f32.gmra.mxu0 %v1752
      %v2164 = vpop.f32.mrf.mxu0
      %v2165 = vadd.f32 %v1940, %v2164
      %v2166 = vpop.f32.mrf.mxu0
      %2167 = vmatprep.mubr.f32.mxu0 0.0
      %2168 = vmatmul.mubr.f32.gmra.mxu0 %v1753
      %v2169 = vpop.f32.mrf.mxu0
      %v2170 = vadd.f32 %v1945, %v2169
      %v2171 = vpop.f32.mrf.mxu0
      %2172 = vmatprep.mubr.f32.mxu0 0.0
      %2173 = vmatmul.mubr.f32.gmra.mxu0 %v1754
      %v2174 = vpop.f32.mrf.mxu0
      %v2175 = vadd.f32 %v1950, %v2174
      %v2176 = vpop.f32.mrf.mxu0
      %2177 = vmatprep.mubr.f32.mxu0 0.0
      %2178 = vmatmul.mubr.f32.gmra.mxu0 %v1755
      %v2179 = vpop.f32.mrf.mxu0
      %v2180 = vadd.f32 %v1955, %v2179
      %v2181 = vpop.f32.mrf.mxu0
      %2182 = vmatprep.mubr.f32.mxu0 0.0
      %2183 = vmatmul.mubr.f32.gmra.mxu0 %v1756
      %v2184 = vpop.f32.mrf.mxu0
      %v2185 = vadd.f32 %v1960, %v2184
      %v2186 = vpop.f32.mrf.mxu0
      %2187 = vmatprep.mubr.f32.mxu0 0.0
      %2188 = vmatmul.mubr.f32.gmra.mxu0 %v1757
      %v2189 = vpop.f32.mrf.mxu0
      %v2190 = vadd.f32 %v1965, %v2189
      %v2191 = vpop.f32.mrf.mxu0
      %2192 = vmatprep.mubr.f32.mxu0 0.0
      %2193 = vmatmul.mubr.f32.gmra.mxu0 %v1758
      %v2194 = vpop.f32.mrf.mxu0
      %v2195 = vadd.f32 %v1970, %v2194
      %v2196 = vpop.f32.mrf.mxu0
      %2197 = vmatprep.mubr.f32.mxu0 0.0
      %2198 = vmatmul.mubr.f32.gmra.mxu0 %v1759
      %v2199 = vpop.f32.mrf.mxu0
      %v2200 = vadd.f32 %v1975, %v2199
      %v2201 = vpop.f32.mrf.mxu0
      %2202 = vmatprep.mubr.f32.mxu0 0.0
      %2203 = vmatmul.mubr.f32.gmra.mxu0 %v1760
      %v2204 = vpop.f32.mrf.mxu0
      %v2205 = vadd.f32 %v1980, %v2204
      %v2206 = vpop.f32.mrf.mxu0
      %2207 = vmatprep.mubr.f32.mxu0 0.0
      %2208 = vmatmul.mubr.f32.gmra.mxu0 %v1761
      %v2209 = vpop.f32.mrf.mxu0
      %v2210 = vadd.f32 %v1985, %v2209
      %v2211 = vpop.f32.mrf.mxu0
      %2212 = vmatprep.mubr.f32.mxu0 0.0
      %2213 = vmatmul.mubr.f32.gmra.mxu0 %v1762
      %v2214 = vpop.f32.mrf.mxu0
      %v2215 = vadd.f32 %v1990, %v2214
      %v2216 = vpop.f32.mrf.mxu0
      %2217 = vmatprep.mubr.f32.mxu0 0.0
      %2218 = vmatmul.mubr.f32.gmra.mxu0 %v1763
      %v2219 = vpop.f32.mrf.mxu0
      %v2220 = vadd.f32 %v1995, %v2219
      %v2221 = vpop.f32.mrf.mxu0
      %2222 = vmatprep.mubr.f32.mxu0 0.0
      %2223 = vmatmul.mubr.f32.gmra.mxu0 %v1764
      %v2224 = vpop.f32.mrf.mxu0
      %v2225 = vadd.f32 %v2000, %v2224
      %v2226 = vpop.f32.mrf.mxu0
      %2227 = vmatprep.mubr.f32.mxu0 0.0
      %2228 = vmatmul.mubr.f32.gmra.mxu0 %v1765
      %v2229 = vpop.f32.mrf.mxu0
      %v2230 = vadd.f32 %v2005, %v2229
      %v2231 = vpop.f32.mrf.mxu0
      %2232 = vmatprep.mubr.f32.mxu0 0.0
      %2233 = vmatmul.mubr.f32.gmra.mxu0 %v1766
      %v2234 = vpop.f32.mrf.mxu0
      %v2235 = vadd.f32 %v2010, %v2234
      %v2236 = vpop.f32.mrf.mxu0
      %2237 = vmatprep.mubr.f32.mxu0 0.0
      %2238 = vmatmul.mubr.f32.gmra.mxu0 %v1767
      %v2239 = vpop.f32.mrf.mxu0
      %v2240 = vadd.f32 %v2015, %v2239
      %v2241 = vpop.f32.mrf.mxu0
      %2242 = vmatprep.mubr.f32.mxu0 0.0
      %2243 = vmatmul.mubr.f32.gmra.mxu0 %v1768
      %v2244 = vpop.f32.mrf.mxu0
      %v2245 = vadd.f32 %v2020, %v2244
      %v2246 = vpop.f32.mrf.mxu0
      %2247 = vmatprep.mubr.f32.mxu0 0.0
      %2248 = vmatmul.mubr.f32.gmra.mxu0 %v1769
      %v2249 = vpop.f32.mrf.mxu0
      %v2250 = vadd.f32 %v2025, %v2249
      %v2251 = vpop.f32.mrf.mxu0
      %2252 = vmatprep.mubr.f32.mxu0 0.0
      %2253 = vmatmul.mubr.f32.gmra.mxu0 %v1770
      %v2254 = vpop.f32.mrf.mxu0
      %v2255 = vadd.f32 %v2030, %v2254
      %v2256 = vpop.f32.mrf.mxu0
      %2257 = vmatprep.mubr.f32.mxu0 0.0
      %2258 = vmatmul.mubr.f32.gmra.mxu0 %v1771
      %v2259 = vpop.f32.mrf.mxu0
      %v2260 = vadd.f32 %v2035, %v2259
      %v2261 = vpop.f32.mrf.mxu0
      %2262 = vmatprep.mubr.f32.mxu0 0.0
      %2263 = vmatmul.mubr.f32.gmra.mxu0 %v1772
      %v2264 = vpop.f32.mrf.mxu0
      %v2265 = vadd.f32 %v2040, %v2264
      %v2266 = vpop.f32.mrf.mxu0
      %2267 = vmatprep.mubr.f32.mxu0 0.0
      %2268 = vmatmul.mubr.f32.gmra.mxu0 %v1773
      %v2269 = vpop.f32.mrf.mxu0
      %v2270 = vadd.f32 %v2045, %v2269
      %v2271 = vpop.f32.mrf.mxu0
      %2272 = vdwg.mxu0
      %v2273 = vadd.f32 %v1538, %v2115
      %v2274 = vadd.f32 %v1543, %v2120
      %v2275 = vadd.f32 %v1548, %v2125
      %v2276 = vadd.f32 %v1553, %v2130
      %v2277 = vadd.f32 %v1558, %v2135
      %v2278 = vadd.f32 %v1563, %v2140
      %v2279 = vadd.f32 %v1568, %v2145
      %v2280 = vadd.f32 %v1573, %v2150
      %v2281 = vadd.f32 %v1578, %v2155
      %v2282 = vadd.f32 %v1583, %v2160
      %v2283 = vadd.f32 %v1588, %v2165
      %v2284 = vadd.f32 %v1593, %v2170
      %v2285 = vadd.f32 %v1598, %v2175
      %v2286 = vadd.f32 %v1603, %v2180
      %v2287 = vadd.f32 %v1608, %v2185
      %v2288 = vadd.f32 %v1613, %v2190
      %v2289 = vadd.f32 %v1618, %v2195
      %v2290 = vadd.f32 %v1623, %v2200
      %v2291 = vadd.f32 %v1628, %v2205
      %v2292 = vadd.f32 %v1633, %v2210
      %v2293 = vadd.f32 %v1638, %v2215
      %v2294 = vadd.f32 %v1643, %v2220
      %v2295 = vadd.f32 %v1648, %v2225
      %v2296 = vadd.f32 %v1653, %v2230
      %v2297 = vadd.f32 %v1658, %v2235
      %v2298 = vadd.f32 %v1663, %v2240
      %v2299 = vadd.f32 %v1668, %v2245
      %v2300 = vadd.f32 %v1673, %v2250
      %v2301 = vadd.f32 %v1678, %v2255
      %v2302 = vadd.f32 %v1683, %v2260
      %v2303 = vadd.f32 %v1688, %v2265
      %v2304 = vadd.f32 %v1693, %v2270
      %2305 = vst [vmem:[%s475] sm:$0xff] %v2273
      %2306 = vst [vmem:[%s475 + $0x8] sm:$0xff] %v2274
      %2307 = vst [vmem:[%s475 + $0x10] sm:$0xff] %v2275
      %2308 = vst [vmem:[%s475 + $0x18] sm:$0xff] %v2276
      %2309 = vst [vmem:[%s475 + $0x20] sm:$0xff] %v2277
      %2310 = vst [vmem:[%s475 + $0x28] sm:$0xff] %v2278
      %2311 = vst [vmem:[%s475 + $0x30] sm:$0xff] %v2279
      %2312 = vst [vmem:[%s475 + $0x38] sm:$0xff] %v2280
      %2313 = vst [vmem:[%s475 + $0x40] sm:$0xff] %v2281
      %2314 = vst [vmem:[%s475 + $0x48] sm:$0xff] %v2282
      %2315 = vst [vmem:[%s475 + $0x50] sm:$0xff] %v2283
      %2316 = vst [vmem:[%s475 + $0x58] sm:$0xff] %v2284
      %2317 = vst [vmem:[%s475 + $0x60] sm:$0xff] %v2285
      %2318 = vst [vmem:[%s475 + $0x68] sm:$0xff] %v2286
      %2319 = vst [vmem:[%s475 + $0x70] sm:$0xff] %v2287
      %2320 = vst [vmem:[%s475 + $0x78] sm:$0xff] %v2288
      %2321 = vst [vmem:[%s475 + $0x80] sm:$0xff] %v2289
      %2322 = vst [vmem:[%s475 + $0x88] sm:$0xff] %v2290
      %2323 = vst [vmem:[%s475 + $0x90] sm:$0xff] %v2291
      %2324 = vst [vmem:[%s475 + $0x98] sm:$0xff] %v2292
      %2325 = vst [vmem:[%s475 + $0xa0] sm:$0xff] %v2293
      %2326 = vst [vmem:[%s475 + $0xa8] sm:$0xff] %v2294
      %2327 = vst [vmem:[%s475 + $0xb0] sm:$0xff] %v2295
      %2328 = vst [vmem:[%s475 + $0xb8] sm:$0xff] %v2296
      %2329 = vst [vmem:[%s475 + $0xc0] sm:$0xff] %v2297
      %2330 = vst [vmem:[%s475 + $0xc8] sm:$0xff] %v2298
      %2331 = vst [vmem:[%s475 + $0xd0] sm:$0xff] %v2299
      %2332 = vst [vmem:[%s475 + $0xd8] sm:$0xff] %v2300
      %2333 = vst [vmem:[%s475 + $0xe0] sm:$0xff] %v2301
      %2334 = vst [vmem:[%s475 + $0xe8] sm:$0xff] %v2302
      %2335 = vst [vmem:[%s475 + $0xf0] sm:$0xff] %v2303
      %2336 = vst [vmem:[%s475 + $0xf8] sm:$0xff] %v2304
      %v2337 = vadd.f32 %v2273, %v2274
      %v2338 = vadd.f32 %v2337, %v2275
      %v2339 = vadd.f32 %v2338, %v2276
      %v2340 = vadd.f32 %v2339, %v2277
      %v2341 = vadd.f32 %v2340, %v2278
      %v2342 = vadd.f32 %v2341, %v2279
      %v2343 = vadd.f32 %v2342, %v2280
      %v2344 = vadd.f32 %v2343, %v2281
      %v2345 = vadd.f32 %v2344, %v2282
      %v2346 = vadd.f32 %v2345, %v2283
      %v2347 = vadd.f32 %v2346, %v2284
      %v2348 = vadd.f32 %v2347, %v2285
      %v2349 = vadd.f32 %v2348, %v2286
      %v2350 = vadd.f32 %v2349, %v2287
      %v2351 = vadd.f32 %v2350, %v2288
      %v2352 = vadd.f32 %v2351, %v2289
      %v2353 = vadd.f32 %v2352, %v2290
      %v2354 = vadd.f32 %v2353, %v2291
      %v2355 = vadd.f32 %v2354, %v2292
      %v2356 = vadd.f32 %v2355, %v2293
      %v2357 = vadd.f32 %v2356, %v2294
      %v2358 = vadd.f32 %v2357, %v2295
      %v2359 = vadd.f32 %v2358, %v2296
      %v2360 = vadd.f32 %v2359, %v2297
      %v2361 = vadd.f32 %v2360, %v2298
      %v2362 = vadd.f32 %v2361, %v2299
      %v2363 = vadd.f32 %v2362, %v2300
      %v2364 = vadd.f32 %v2363, %v2301
      %v2365 = vadd.f32 %v2364, %v2302
      %v2366 = vadd.f32 %v2365, %v2303
      %v2367 = vadd.f32 %v2366, %v2304
      %v2368 = vrot.slane %v2367, 4
      %v2369 = vadd.f32 %v2367, %v2368
      %v2370 = vrot.slane %v2369, 2
      %v2371 = vadd.f32 %v2369, %v2370
      %v2372 = vrot.slane %v2371, 1
      %v2373 = vadd.f32 %v2371, %v2372
      %2374 = vst [vmem:[%s481] sm:$0x1] %v2373
      %v2375 = vmul.f32 %v2273, %v2273
      %v2376 = vmul.f32 %v2274, %v2274
      %v2377 = vmul.f32 %v2275, %v2275
      %v2378 = vmul.f32 %v2276, %v2276
      %v2379 = vmul.f32 %v2277, %v2277
      %v2380 = vmul.f32 %v2278, %v2278
      %v2381 = vmul.f32 %v2279, %v2279
      %v2382 = vmul.f32 %v2280, %v2280
      %v2383 = vmul.f32 %v2281, %v2281
      %v2384 = vmul.f32 %v2282, %v2282
      %v2385 = vmul.f32 %v2283, %v2283
      %v2386 = vmul.f32 %v2284, %v2284
      %v2387 = vmul.f32 %v2285, %v2285
      %v2388 = vmul.f32 %v2286, %v2286
      %v2389 = vmul.f32 %v2287, %v2287
      %v2390 = vmul.f32 %v2288, %v2288
      %v2391 = vmul.f32 %v2289, %v2289
      %v2392 = vmul.f32 %v2290, %v2290
      %v2393 = vmul.f32 %v2291, %v2291
      %v2394 = vmul.f32 %v2292, %v2292
      %v2395 = vmul.f32 %v2293, %v2293
      %v2396 = vmul.f32 %v2294, %v2294
      %v2397 = vmul.f32 %v2295, %v2295
      %v2398 = vmul.f32 %v2296, %v2296
      %v2399 = vmul.f32 %v2297, %v2297
      %v2400 = vmul.f32 %v2298, %v2298
      %v2401 = vmul.f32 %v2299, %v2299
      %v2402 = vmul.f32 %v2300, %v2300
      %v2403 = vmul.f32 %v2301, %v2301
      %v2404 = vmul.f32 %v2302, %v2302
      %v2405 = vmul.f32 %v2303, %v2303
      %v2406 = vmul.f32 %v2304, %v2304
      %v2407 = vadd.f32 %v2375, %v2376
      %v2408 = vadd.f32 %v2407, %v2377
      %v2409 = vadd.f32 %v2408, %v2378
      %v2410 = vadd.f32 %v2409, %v2379
      %v2411 = vadd.f32 %v2410, %v2380
      %v2412 = vadd.f32 %v2411, %v2381
      %v2413 = vadd.f32 %v2412, %v2382
      %v2414 = vadd.f32 %v2413, %v2383
      %v2415 = vadd.f32 %v2414, %v2384
      %v2416 = vadd.f32 %v2415, %v2385
      %v2417 = vadd.f32 %v2416, %v2386
      %v2418 = vadd.f32 %v2417, %v2387
      %v2419 = vadd.f32 %v2418, %v2388
      %v2420 = vadd.f32 %v2419, %v2389
      %v2421 = vadd.f32 %v2420, %v2390
      %v2422 = vadd.f32 %v2421, %v2391
      %v2423 = vadd.f32 %v2422, %v2392
      %v2424 = vadd.f32 %v2423, %v2393
      %v2425 = vadd.f32 %v2424, %v2394
      %v2426 = vadd.f32 %v2425, %v2395
      %v2427 = vadd.f32 %v2426, %v2396
      %v2428 = vadd.f32 %v2427, %v2397
      %v2429 = vadd.f32 %v2428, %v2398
      %v2430 = vadd.f32 %v2429, %v2399
      %v2431 = vadd.f32 %v2430, %v2400
      %v2432 = vadd.f32 %v2431, %v2401
      %v2433 = vadd.f32 %v2432, %v2402
      %v2434 = vadd.f32 %v2433, %v2403
      %v2435 = vadd.f32 %v2434, %v2404
      %v2436 = vadd.f32 %v2435, %v2405
      %v2437 = vadd.f32 %v2436, %v2406
      %v2438 = vrot.slane %v2437, 4
      %v2439 = vadd.f32 %v2437, %v2438
      %v2440 = vrot.slane %v2439, 2
      %v2441 = vadd.f32 %v2439, %v2440
      %v2442 = vrot.slane %v2441, 1
      %v2443 = vadd.f32 %v2441, %v2442
      %2444 = vst [vmem:[%s486] sm:$0x1] %v2443
      %s2445 = sadd.s32 %s24, %s25
      %s2446 = smul.u32 32, %s2445
      %p2447 = scmp.lt.s32.totalorder %s2446, 63
      %s2448 = scalar_select %p2447, %s2446, 63
      %s2449 = smul.addr %s2448, 8
      %s2450 = scalar_lea.vmem %s6, %s2449
      %s2451 = sadd.s32 %s24, %s25
      %p2452 = scmp.lt.s32.totalorder %s2451, 1
      %s2453 = scalar_select %p2452, %s2451, 1
      %s2454 = scalar_lea.vmem %s7, %s2453
      %s2455 = sadd.s32 %s24, %s25
      %p2456 = scmp.lt.s32.totalorder %s2455, 1
      %s2457 = scalar_select %p2456, %s2455, 1
      %s2458 = scalar_lea.vmem %s8, %s2457
      // Predicated region
      $region61: #{double_conv.2} parent=43 // pred_check
        %p2459 = pneg %p219
      $region62: #{double_conv.2} parent=43 // pred_check_branch
        %2461 = sbr.rel (%p2459) target = $region64
      $region63: #{double_conv.2} parent=43 // pred_region
        %s2462 = sadd.s32 %s24, %s25
        %s2463 = smul.u32 32, %s2462
      $region64: #{double_conv.2} parent=43 // pred_fallthru
        _
      // Predicated region
      $region65: #{double_conv.2} parent=43 // pred_check
        %p2464 = pneg %p247
      $region66: #{double_conv.2} parent=43 // pred_check_branch
        %2466 = sbr.rel (%p2464) target = $region68
      $region67: #{double_conv.2} parent=43 // pred_region
        %s2467 = sadd.s32 %s24, %s25
      $region68: #{double_conv.2} parent=43 // pred_fallthru
        _
      // Predicated region
      $region69: #{double_conv.2} parent=43 // pred_check
        %p2468 = pneg %p275
      $region70: #{double_conv.2} parent=43 // pred_check_branch
        %2470 = sbr.rel (%p2468) target = $region72
      $region71: #{double_conv.2} parent=43 // pred_region
        %s2471 = sadd.s32 %s24, %s25
      $region72: #{double_conv.2} parent=43 // pred_fallthru
        _
    $region44: #{double_conv.2} parent=5 // pred_fallthru
      _
    %p2472 = scmp.le.s32.totalorder 2, %s15
    // Predicated region
    $region73: #{double_conv.2} parent=5 // pred_check
      %p2473 = pneg %p2472
    $region74: #{double_conv.2} parent=5 // pred_check_branch
      %2475 = sbr.rel (%p2473) target = $region76
    $region75: #{double_conv.2} parent=5 // pred_region
      %s2476 = ssub.s32 %s15, 2
      // Predicated region
      $region77: #{double_conv.2} parent=75 // pred_check
        %p2477 = pneg %p225
      $region78: #{double_conv.2} parent=75 // pred_check_branch
        %2479 = sbr.rel (%p2477) target = $region80
      $region79: #{double_conv.2} parent=75 // pred_region
        %s2480 = sadd.s32 %s26, %s27
        %s2481 = smul.u32 32, %s2480
        %p2482 = scmp.lt.s32.totalorder %s2481, 63
        %s2483 = scalar_select %p2482, %s2481, 63
        %s2484 = smul.addr %s2483, 8
        %s2485 = scalar_lea.vmem %s6, %s2484
      $region80: #{double_conv.2} parent=75 // pred_fallthru
        _
      // Predicated region
      $region81: #{double_conv.2} parent=75 // pred_check
        %p2486 = pneg %p253
      $region82: #{double_conv.2} parent=75 // pred_check_branch
        %2488 = sbr.rel (%p2486) target = $region84
      $region83: #{double_conv.2} parent=75 // pred_region
        %s2489 = sadd.s32 %s26, %s27
        %p2490 = scmp.lt.s32.totalorder %s2489, 1
        %s2491 = scalar_select %p2490, %s2489, 1
        %s2492 = scalar_lea.vmem %s7, %s2491
      $region84: #{double_conv.2} parent=75 // pred_fallthru
        _
      // Predicated region
      $region85: #{double_conv.2} parent=75 // pred_check
        %p2493 = pneg %p281
      $region86: #{double_conv.2} parent=75 // pred_check_branch
        %2495 = sbr.rel (%p2493) target = $region88
      $region87: #{double_conv.2} parent=75 // pred_region
        %s2496 = sadd.s32 %s26, %s27
        %p2497 = scmp.lt.s32.totalorder %s2496, 1
        %s2498 = scalar_select %p2497, %s2496, 1
        %s2499 = scalar_lea.vmem %s8, %s2498
      $region88: #{double_conv.2} parent=75 // pred_fallthru
        _
    $region76: #{double_conv.2} parent=5 // pred_fallthru
      _
  $region6: #{double_conv.2} parent=0 // loop_footer
    %s19 = sadd.s32 1, %s15
  $region7: #{double_conv.2} parent=0 // loop_footer_branch
    %14 = sbr.rel target = $region3
  $region8: #{double_conv.2} parent=0 // loop_exit
    _

// kernel: double_conv.3
$region0: #{double_conv.3}
  #allocation0 [shape = 'u32[]', space=smem, size = 0x4, offset = 0x4, fixed_abs, tag = 'smem constant byte address 0x4 - core index']
  #allocation1 [shape = 'u32[144,128]{1,0:T(1,128)}', space=vmem, size = 0x12000, scoped, tag = 'internal scratch']
  #allocation2 [shape = 'f32[18,25,128]{2,1,0:T(8,128)}', space=vmem, size = 0x48000, scoped, tag = 'scratch operand']
  %s0 = inlined_call_operand.vmem [shape: f32[512,128], index: 0, kind: input, shape index: {}, may-alias: {0,1,2}]
  %s1 = inlined_call_operand.vmem [shape: f32[512,128], index: 1, kind: input, shape index: {}, may-alias: {0,1,2}]
  %s2 = inlined_call_operand.vmem [shape: f32[512,128], index: 2, kind: input, shape index: {}, may-alias: {0,1,2}]
  %s3 = inlined_call_operand.vmem [shape: f32[1,128], index: 3, kind: input, shape index: {}]
  %s4 = inlined_call_operand.vmem [shape: f32[1,128], index: 4, kind: input, shape index: {}]
  %s5 = inlined_call_operand.vmem [shape: f32[3,384,128], index: 5, kind: input, shape index: {}]
  %s6 = inlined_call_operand.vmem [shape: f32[512,128], index: 6, kind: output, shape index: {0}]
  %s7 = inlined_call_operand.vmem [shape: f32[2,1,128], index: 7, kind: output, shape index: {1}]
  %s8 = inlined_call_operand.vmem [shape: f32[2,1,128], index: 8, kind: output, shape index: {2}]
  %9 = xla_tuple %s6, %s7, %s8
  %s10 = sld [smem:[#allocation0]]
  $region89: #{double_conv.3} parent=0
    _
  %s12 = ssub.s32 1, %s10
  %s13 = scalar_select 0, %s12, %s10
  loop: start=0, step=1, limit=4
  $region2: #{double_conv.3} parent=0 // loop_pre_header
    _
  $region3: #{double_conv.3} parent=0 // loop_header
    %s15 = sphi 0, %s19
    %p16 = scmp.ge.s32.totalorder %s15, 4
    %s22 = sphi 0, %s34
    %s23 = sphi 0, %s30
    %s24 = sphi 0, %s22
    %s25 = sphi 0, %s23
    %s26 = sphi 0, %s24
    %s27 = sphi 0, %s25
    %s39 = sphi 0, %s41
    %s42 = sphi 0, %s39
    %s43 = sphi 0, %s42
    %s59 = sphi 0, %s43
    %s77 = sphi 0, %s79
    %s80 = sphi 0, %s77
    %s81 = sphi 0, %s80
    %s97 = sphi 0, %s81
    %s115 = sphi 0, %s117
    %s118 = sphi 0, %s115
    %s119 = sphi 0, %s118
    %s135 = sphi 0, %s119
    %s139 = sphi 0, %s139
    %s141 = sphi 0, %s139
    %s142 = sphi 0, %s141
    %s156 = sphi 0, %s142
    %s160 = sphi 0, %s160
    %s162 = sphi 0, %s160
    %s163 = sphi 0, %s162
    %s177 = sphi 0, %s163
    %s181 = sphi 0, %s181
    %s183 = sphi 0, %s181
    %s184 = sphi 0, %s183
    %s198 = sphi 0, %s184
    %s206 = sphi 0, %s208
    %s209 = sphi 0, %s206
    %s210 = sphi 0, %s209
    %s226 = sphi 0, %s210
    %s234 = sphi 0, %s236
    %s237 = sphi 0, %s234
    %s238 = sphi 0, %s237
    %s254 = sphi 0, %s238
    %s262 = sphi 0, %s264
    %s265 = sphi 0, %s262
    %s266 = sphi 0, %s265
    %s282 = sphi 0, %s266
  $region4: #{double_conv.3} parent=0 // loop_header_branch
    %18 = sbr.rel (%p16) target = $region8
  $region5: #{double_conv.3} parent=0 // loop_body
    %s20 = ssub.s32 %s15, 1
    %s21 = ssub.s32 %s15, 2
    %s28 = sadd.s32 1, %s23
    %p29 = scmp.ge.s32.totalorder %s28, 1
    %s30 = scalar_select %p29, 0, %s28
    %s31 = sadd.s32 1, %s22
    %s32 = scalar_select %p29, %s31, %s22
    %p33 = scmp.ge.s32.totalorder %s32, 2
    %s34 = scalar_select %p33, 0, %s32
    %s35 = sadd.s32 %s22, %s23
    %s36 = sadd.s32 %s34, %s30
    %s37 = ssub.s32 %s35, %s36
    %p38 = scmp.eq.s32.totalorder %s37, 0
    %s40 = sadd.s32 %s39, 1
    %s41 = scalar_select %p38, %s39, %s40
    %p44 = pneg %p38
    %p45 = scmp.eq.s32.totalorder %s15, 1
    %p46 = por %p44, %p45
    %p47 = scmp.ne.s32.totalorder %s39, %s42
    %p48 = scmp.eq.s32.totalorder %s15, 0
    %p49 = por %p47, %p48
    %p50 = scmp.ne.s32.totalorder %s39, %s42
    %p51 = scmp.eq.s32.totalorder %s20, 1
    %p52 = por %p50, %p51
    %p53 = scmp.ne.s32.totalorder %s42, %s43
    %p54 = scmp.eq.s32.totalorder %s20, 0
    %p55 = por %p53, %p54
    %p56 = scmp.ne.s32.totalorder %s42, %s43
    %p57 = scmp.eq.s32.totalorder %s21, 1
    %p58 = por %p56, %p57
    %p60 = scmp.ne.s32.totalorder %s43, %s59
    %p61 = scmp.eq.s32.totalorder %s21, 0
    %p62 = por %p60, %p61
    %s63 = smul.u32 %s22, 16
    %s64 = smul.u32 %s23, 16
    %s65 = ssub.s32 %s64, 1
    %p66 = scmp.gt.s32.totalorder %s65, 0
    %s67 = scalar_select %p66, %s65, 0
    %s68 = sadd.s32 %s63, %s67
    %s69 = smul.u32 %s34, 16
    %s70 = smul.u32 %s30, 16
    %s71 = ssub.s32 %s70, 1
    %p72 = scmp.gt.s32.totalorder %s71, 0
    %s73 = scalar_select %p72, %s71, 0
    %s74 = sadd.s32 %s69, %s73
    %s75 = ssub.s32 %s68, %s74
    %p76 = scmp.eq.s32.totalorder %s75, 0
    %s78 = sadd.s32 %s77, 1
    %s79 = scalar_select %p76, %s77, %s78
    %p82 = pneg %p76
    %p83 = scmp.eq.s32.totalorder %s15, 1
    %p84 = por %p82, %p83
    %p85 = scmp.ne.s32.totalorder %s77, %s80
    %p86 = scmp.eq.s32.totalorder %s15, 0
    %p87 = por %p85, %p86
    %p88 = scmp.ne.s32.totalorder %s77, %s80
    %p89 = scmp.eq.s32.totalorder %s20, 1
    %p90 = por %p88, %p89
    %p91 = scmp.ne.s32.totalorder %s80, %s81
    %p92 = scmp.eq.s32.totalorder %s20, 0
    %p93 = por %p91, %p92
    %p94 = scmp.ne.s32.totalorder %s80, %s81
    %p95 = scmp.eq.s32.totalorder %s21, 1
    %p96 = por %p94, %p95
    %p98 = scmp.ne.s32.totalorder %s81, %s97
    %p99 = scmp.eq.s32.totalorder %s21, 0
    %p100 = por %p98, %p99
    %s101 = smul.u32 %s22, 16
    %s102 = sadd.s32 %s23, 1
    %s103 = smul.u32 %s102, 16
    %p104 = scmp.lt.s32.totalorder %s103, 15
    %s105 = scalar_select %p104, %s103, 15
    %s106 = sadd.s32 %s101, %s105
    %s107 = smul.u32 %s34, 16
    %s108 = sadd.s32 %s30, 1
    %s109 = smul.u32 %s108, 16
    %p110 = scmp.lt.s32.totalorder %s109, 15
    %s111 = scalar_select %p110, %s109, 15
    %s112 = sadd.s32 %s107, %s111
    %s113 = ssub.s32 %s106, %s112
    %p114 = scmp.eq.s32.totalorder %s113, 0
    %s116 = sadd.s32 %s115, 1
    %s117 = scalar_select %p114, %s115, %s116
    %p120 = pneg %p114
    %p121 = scmp.eq.s32.totalorder %s15, 1
    %p122 = por %p120, %p121
    %p123 = scmp.ne.s32.totalorder %s115, %s118
    %p124 = scmp.eq.s32.totalorder %s15, 0
    %p125 = por %p123, %p124
    %p126 = scmp.ne.s32.totalorder %s115, %s118
    %p127 = scmp.eq.s32.totalorder %s20, 1
    %p128 = por %p126, %p127
    %p129 = scmp.ne.s32.totalorder %s118, %s119
    %p130 = scmp.eq.s32.totalorder %s20, 0
    %p131 = por %p129, %p130
    %p132 = scmp.ne.s32.totalorder %s118, %s119
    %p133 = scmp.eq.s32.totalorder %s21, 1
    %p134 = por %p132, %p133
    %p136 = scmp.ne.s32.totalorder %s119, %s135
    %p137 = scmp.eq.s32.totalorder %s21, 0
    %p138 = por %p136, %p137
    %s140 = sadd.s32 %s139, 1
    %p143 = scmp.eq.s32.totalorder %s15, 1
    %p144 = scmp.ne.s32.totalorder %s139, %s141
    %p145 = scmp.eq.s32.totalorder %s15, 0
    %p146 = por %p144, %p145
    %p147 = scmp.ne.s32.totalorder %s139, %s141
    %p148 = scmp.eq.s32.totalorder %s20, 1
    %p149 = por %p147, %p148
    %p150 = scmp.ne.s32.totalorder %s141, %s142
    %p151 = scmp.eq.s32.totalorder %s20, 0
    %p152 = por %p150, %p151
    %p153 = scmp.ne.s32.totalorder %s141, %s142
    %p154 = scmp.eq.s32.totalorder %s21, 1
    %p155 = por %p153, %p154
    %p157 = scmp.ne.s32.totalorder %s142, %s156
    %p158 = scmp.eq.s32.totalorder %s21, 0
    %p159 = por %p157, %p158
    %s161 = sadd.s32 %s160, 1
    %p164 = scmp.eq.s32.totalorder %s15, 1
    %p165 = scmp.ne.s32.totalorder %s160, %s162
    %p166 = scmp.eq.s32.totalorder %s15, 0
    %p167 = por %p165, %p166
    %p168 = scmp.ne.s32.totalorder %s160, %s162
    %p169 = scmp.eq.s32.totalorder %s20, 1
    %p170 = por %p168, %p169
    %p171 = scmp.ne.s32.totalorder %s162, %s163
    %p172 = scmp.eq.s32.totalorder %s20, 0
    %p173 = por %p171, %p172
    %p174 = scmp.ne.s32.totalorder %s162, %s163
    %p175 = scmp.eq.s32.totalorder %s21, 1
    %p176 = por %p174, %p175
    %p178 = scmp.ne.s32.totalorder %s163, %s177
    %p179 = scmp.eq.s32.totalorder %s21, 0
    %p180 = por %p178, %p179
    %s182 = sadd.s32 %s181, 1
    %p185 = scmp.eq.s32.totalorder %s15, 1
    %p186 = scmp.ne.s32.totalorder %s181, %s183
    %p187 = scmp.eq.s32.totalorder %s15, 0
    %p188 = por %p186, %p187
    %p189 = scmp.ne.s32.totalorder %s181, %s183
    %p190 = scmp.eq.s32.totalorder %s20, 1
    %p191 = por %p189, %p190
    %p192 = scmp.ne.s32.totalorder %s183, %s184
    %p193 = scmp.eq.s32.totalorder %s20, 0
    %p194 = por %p192, %p193
    %p195 = scmp.ne.s32.totalorder %s183, %s184
    %p196 = scmp.eq.s32.totalorder %s21, 1
    %p197 = por %p195, %p196
    %p199 = scmp.ne.s32.totalorder %s184, %s198
    %p200 = scmp.eq.s32.totalorder %s21, 0
    %p201 = por %p199, %p200
    %s202 = sadd.s32 %s22, %s23
    %s203 = sadd.s32 %s34, %s30
    %s204 = ssub.s32 %s202, %s203
    %p205 = scmp.eq.s32.totalorder %s204, 0
    %s207 = sadd.s32 %s206, 1
    %s208 = scalar_select %p205, %s206, %s207
    %p211 = pneg %p205
    %p212 = scmp.eq.s32.totalorder %s15, 1
    %p213 = por %p211, %p212
    %p214 = scmp.ne.s32.totalorder %s206, %s209
    %p215 = scmp.eq.s32.totalorder %s15, 0
    %p216 = por %p214, %p215
    %p217 = scmp.ne.s32.totalorder %s206, %s209
    %p218 = scmp.eq.s32.totalorder %s20, 1
    %p219 = por %p217, %p218
    %p220 = scmp.ne.s32.totalorder %s209, %s210
    %p221 = scmp.eq.s32.totalorder %s20, 0
    %p222 = por %p220, %p221
    %p223 = scmp.ne.s32.totalorder %s209, %s210
    %p224 = scmp.eq.s32.totalorder %s21, 1
    %p225 = por %p223, %p224
    %p227 = scmp.ne.s32.totalorder %s210, %s226
    %p228 = scmp.eq.s32.totalorder %s21, 0
    %p229 = por %p227, %p228
    %s230 = sadd.s32 %s22, %s23
    %s231 = sadd.s32 %s34, %s30
    %s232 = ssub.s32 %s230, %s231
    %p233 = scmp.eq.s32.totalorder %s232, 0
    %s235 = sadd.s32 %s234, 1
    %s236 = scalar_select %p233, %s234, %s235
    %p239 = pneg %p233
    %p240 = scmp.eq.s32.totalorder %s15, 1
    %p241 = por %p239, %p240
    %p242 = scmp.ne.s32.totalorder %s234, %s237
    %p243 = scmp.eq.s32.totalorder %s15, 0
    %p244 = por %p242, %p243
    %p245 = scmp.ne.s32.totalorder %s234, %s237
    %p246 = scmp.eq.s32.totalorder %s20, 1
    %p247 = por %p245, %p246
    %p248 = scmp.ne.s32.totalorder %s237, %s238
    %p249 = scmp.eq.s32.totalorder %s20, 0
    %p250 = por %p248, %p249
    %p251 = scmp.ne.s32.totalorder %s237, %s238
    %p252 = scmp.eq.s32.totalorder %s21, 1
    %p253 = por %p251, %p252
    %p255 = scmp.ne.s32.totalorder %s238, %s254
    %p256 = scmp.eq.s32.totalorder %s21, 0
    %p257 = por %p255, %p256
    %s258 = sadd.s32 %s22, %s23
    %s259 = sadd.s32 %s34, %s30
    %s260 = ssub.s32 %s258, %s259
    %p261 = scmp.eq.s32.totalorder %s260, 0
    %s263 = sadd.s32 %s262, 1
    %s264 = scalar_select %p261, %s262, %s263
    %p267 = pneg %p261
    %p268 = scmp.eq.s32.totalorder %s15, 1
    %p269 = por %p267, %p268
    %p270 = scmp.ne.s32.totalorder %s262, %s265
    %p271 = scmp.eq.s32.totalorder %s15, 0
    %p272 = por %p270, %p271
    %p273 = scmp.ne.s32.totalorder %s262, %s265
    %p274 = scmp.eq.s32.totalorder %s20, 1
    %p275 = por %p273, %p274
    %p276 = scmp.ne.s32.totalorder %s265, %s266
    %p277 = scmp.eq.s32.totalorder %s20, 0
    %p278 = por %p276, %p277
    %p279 = scmp.ne.s32.totalorder %s265, %s266
    %p280 = scmp.eq.s32.totalorder %s21, 1
    %p281 = por %p279, %p280
    %p283 = scmp.ne.s32.totalorder %s266, %s282
    %p284 = scmp.eq.s32.totalorder %s21, 0
    %p285 = por %p283, %p284
    %p286 = scmp.le.s32.totalorder 1, %s15
    %p287 = scmp.lt.s32.totalorder %s15, 3
    %p288 = pnand %p286, %p287
    %p289 = pneg %p288
    // Predicated region
    $region9: #{double_conv.3} parent=5 // pred_check
      _
    $region10: #{double_conv.3} parent=5 // pred_check_branch
      %291 = sbr.rel (%p288) target = $region12
    $region11: #{double_conv.3} parent=5 // pred_region
      %s292 = ssub.s32 %s15, 1
      // Predicated region
      $region13: #{double_conv.3} parent=11 // pred_check
        %p293 = pneg %p152
      $region14: #{double_conv.3} parent=11 // pred_check_branch
        %295 = sbr.rel (%p293) target = $region16
      $region15: #{double_conv.3} parent=11 // pred_region
        _
      $region16: #{double_conv.3} parent=11 // pred_fallthru
        _
      // Predicated region
      $region17: #{double_conv.3} parent=11 // pred_check
        %p296 = pneg %p173
      $region18: #{double_conv.3} parent=11 // pred_check_branch
        %298 = sbr.rel (%p296) target = $region20
      $region19: #{double_conv.3} parent=11 // pred_region
        _
      $region20: #{double_conv.3} parent=11 // pred_fallthru
        _
      // Predicated region
      $region21: #{double_conv.3} parent=11 // pred_check
        %p299 = pneg %p194
      $region22: #{double_conv.3} parent=11 // pred_check_branch
        %301 = sbr.rel (%p299) target = $region24
      $region23: #{double_conv.3} parent=11 // pred_region
        _
      $region24: #{double_conv.3} parent=11 // pred_fallthru
        _
    $region12: #{double_conv.3} parent=5 // pred_fallthru
      _
    %p302 = scmp.lt.s32.totalorder %s15, 2
    // Predicated region
    $region25: #{double_conv.3} parent=5 // pred_check
      %p303 = pneg %p302
    $region26: #{double_conv.3} parent=5 // pred_check_branch
      %305 = sbr.rel (%p303) target = $region28
    $region27: #{double_conv.3} parent=5 // pred_region
      // Predicated region
      $region29: #{double_conv.3} parent=27 // pred_check
        %p306 = pneg %p49
      $region30: #{double_conv.3} parent=27 // pred_check_branch
        %308 = sbr.rel (%p306) target = $region32
      $region31: #{double_conv.3} parent=27 // pred_region
        %s309 = sadd.s32 %s22, %s23
        %s310 = smul.u32 32, %s309
        %p311 = scmp.lt.s32.totalorder %s310, 63
        %s312 = scalar_select %p311, %s310, 63
        %s313 = smul.addr %s312, 8
        %s314 = scalar_lea.vmem %s0, %s313
        %s315 = sadd.s32 %s22, %s23
        %s316 = smul.u32 32, %s315
      $region32: #{double_conv.3} parent=27 // pred_fallthru
        _
      // Predicated region
      $region33: #{double_conv.3} parent=27 // pred_check
        %p317 = pneg %p87
      $region34: #{double_conv.3} parent=27 // pred_check_branch
        %319 = sbr.rel (%p317) target = $region36
      $region35: #{double_conv.3} parent=27 // pred_region
        %s320 = smul.u32 %s22, 16
        %s321 = smul.u32 %s23, 16
        %s322 = ssub.s32 %s321, 1
        %p323 = scmp.gt.s32.totalorder %s322, 0
        %s324 = scalar_select %p323, %s322, 0
        %s325 = sadd.s32 %s320, %s324
        %s326 = smul.u32 2, %s325
        %p327 = scmp.lt.s32.totalorder %s326, 63
        %s328 = scalar_select %p327, %s326, 63
        %s329 = smul.addr %s328, 8
        %s330 = scalar_lea.vmem %s1, %s329
        %s331 = smul.u32 %s22, 16
        %s332 = smul.u32 %s23, 16
        %s333 = ssub.s32 %s332, 1
        %p334 = scmp.gt.s32.totalorder %s333, 0
        %s335 = scalar_select %p334, %s333, 0
        %s336 = sadd.s32 %s331, %s335
        %s337 = smul.u32 2, %s336
      $region36: #{double_conv.3} parent=27 // pred_fallthru
        _
      // Predicated region
      $region37: #{double_conv.3} parent=27 // pred_check
        %p338 = pneg %p125
      $region38: #{double_conv.3} parent=27 // pred_check_branch
        %340 = sbr.rel (%p338) target = $region40
      $region39: #{double_conv.3} parent=27 // pred_region
        %s341 = smul.u32 %s22, 16
        %s342 = sadd.s32 %s23, 1
        %s343 = smul.u32 %s342, 16
        %p344 = scmp.lt.s32.totalorder %s343, 15
        %s345 = scalar_select %p344, %s343, 15
        %s346 = sadd.s32 %s341, %s345
        %s347 = smul.u32 2, %s346
        %p348 = scmp.lt.s32.totalorder %s347, 63
        %s349 = scalar_select %p348, %s347, 63
        %s350 = smul.addr %s349, 8
        %s351 = scalar_lea.vmem %s2, %s350
        %s352 = smul.u32 %s22, 16
        %s353 = sadd.s32 %s23, 1
        %s354 = smul.u32 %s353, 16
        %p355 = scmp.lt.s32.totalorder %s354, 15
        %s356 = scalar_select %p355, %s354, 15
        %s357 = sadd.s32 %s352, %s356
        %s358 = smul.u32 2, %s357
      $region40: #{double_conv.3} parent=27 // pred_fallthru
        _
    $region28: #{double_conv.3} parent=5 // pred_fallthru
      _
    %p359 = scmp.le.s32.totalorder 1, %s15
    %p360 = scmp.lt.s32.totalorder %s15, 3
    %p361 = pnand %p359, %p360
    %p362 = pneg %p361
    // Predicated region
    $region41: #{double_conv.3} parent=5 // pred_check
      _
    $region42: #{double_conv.3} parent=5 // pred_check_branch
      %364 = sbr.rel (%p361) target = $region44
    $region43: #{double_conv.3} parent=5 // pred_region
      %s365 = ssub.s32 %s15, 1
      %s366 = sadd.s32 %s24, %s25
      %s367 = smul.u32 32, %s366
      %p368 = scmp.lt.s32.totalorder %s367, 63
      %s369 = scalar_select %p368, %s367, 63
      %s370 = smul.addr %s369, 8
      %s371 = scalar_lea.vmem %s0, %s370
      %p372 = pneg %p55
      %p373 = pneg %p52
      %s374 = smul.u32 %s24, 16
      %s375 = smul.u32 %s25, 16
      %s376 = ssub.s32 %s375, 1
      %p377 = scmp.gt.s32.totalorder %s376, 0
      %s378 = scalar_select %p377, %s376, 0
      %s379 = sadd.s32 %s374, %s378
      %s380 = smul.u32 2, %s379
      %p381 = scmp.lt.s32.totalorder %s380, 63
      %s382 = scalar_select %p381, %s380, 63
      %s383 = smul.addr %s382, 8
      %s384 = scalar_lea.vmem %s1, %s383
      %p385 = pneg %p93
      %p386 = pneg %p90
      %s387 = smul.u32 %s24, 16
      %s388 = sadd.s32 %s25, 1
      %s389 = smul.u32 %s388, 16
      %p390 = scmp.lt.s32.totalorder %s389, 15
      %s391 = scalar_select %p390, %s389, 15
      %s392 = sadd.s32 %s387, %s391
      %s393 = smul.u32 2, %s392
      %p394 = scmp.lt.s32.totalorder %s393, 63
      %s395 = scalar_select %p394, %s393, 63
      %s396 = smul.addr %s395, 8
      %s397 = scalar_lea.vmem %s2, %s396
      %p398 = pneg %p131
      %p399 = pneg %p128
      %p400 = pneg %p152
      %p401 = pneg %p149
      %p402 = pneg %p173
      %p403 = pneg %p170
      %p404 = pneg %p194
      %p405 = pneg %p191
      %p406 = pneg %p222
      %p407 = pneg %p219
      %s408 = sadd.s32 %s24, %s25
      %s409 = smul.u32 32, %s408
      %p410 = scmp.lt.s32.totalorder %s409, 63
      %s411 = scalar_select %p410, %s409, 63
      %s412 = smul.addr %s411, 8
      %s413 = scalar_lea.vmem %s6, %s412
      %p414 = pneg %p250
      %p415 = pneg %p247
      %s416 = sadd.s32 %s24, %s25
      %p417 = scmp.lt.s32.totalorder %s416, 1
      %s418 = scalar_select %p417, %s416, 1
      %s419 = scalar_lea.vmem %s7, %s418
      %p420 = pneg %p278
      %p421 = pneg %p275
      %s422 = sadd.s32 %s24, %s25
      %p423 = scmp.lt.s32.totalorder %s422, 1
      %s424 = scalar_select %p423, %s422, 1
      %s425 = scalar_lea.vmem %s8, %s424
      %s426 = sadd.s32 %s24, %s25
      %s427 = smul.u32 32, %s426
      %p428 = scmp.lt.s32.totalorder %s427, 63
      %s429 = scalar_select %p428, %s427, 63
      %s430 = smul.addr %s429, 8
      %s431 = scalar_lea.vmem %s0, %s430
      %s432 = sadd.s32 %s24, %s25
      %s433 = smul.u32 32, %s432
      %s434 = smul.u32 %s24, 16
      %s435 = smul.u32 %s25, 16
      %s436 = ssub.s32 %s435, 1
      %p437 = scmp.gt.s32.totalorder %s436, 0
      %s438 = scalar_select %p437, %s436, 0
      %s439 = sadd.s32 %s434, %s438
      %s440 = smul.u32 2, %s439
      %p441 = scmp.lt.s32.totalorder %s440, 63
      %s442 = scalar_select %p441, %s440, 63
      %s443 = smul.addr %s442, 8
      %s444 = scalar_lea.vmem %s1, %s443
      %s445 = smul.u32 %s24, 16
      %s446 = smul.u32 %s25, 16
      %s447 = ssub.s32 %s446, 1
      %p448 = scmp.gt.s32.totalorder %s447, 0
      %s449 = scalar_select %p448, %s447, 0
      %s450 = sadd.s32 %s445, %s449
      %s451 = smul.u32 2, %s450
      %s452 = smul.u32 %s24, 16
      %s453 = sadd.s32 %s25, 1
      %s454 = smul.u32 %s453, 16
      %p455 = scmp.lt.s32.totalorder %s454, 15
      %s456 = scalar_select %p455, %s454, 15
      %s457 = sadd.s32 %s452, %s456
      %s458 = smul.u32 2, %s457
      %p459 = scmp.lt.s32.totalorder %s458, 63
      %s460 = scalar_select %p459, %s458, 63
      %s461 = smul.addr %s460, 8
      %s462 = scalar_lea.vmem %s2, %s461
      %s463 = smul.u32 %s24, 16
      %s464 = sadd.s32 %s25, 1
      %s465 = smul.u32 %s464, 16
      %p466 = scmp.lt.s32.totalorder %s465, 15
      %s467 = scalar_select %p466, %s465, 15
      %s468 = sadd.s32 %s463, %s467
      %s469 = smul.u32 2, %s468
      %s470 = sadd.s32 %s24, %s25
      %s471 = smul.u32 32, %s470
      %p472 = scmp.lt.s32.totalorder %s471, 63
      %s473 = scalar_select %p472, %s471, 63
      %s474 = smul.addr %s473, 8
      %s475 = scalar_lea.vmem %s6, %s474
      %s476 = sadd.s32 %s24, %s25
      %s477 = smul.u32 32, %s476
      %s478 = sadd.s32 %s24, %s25
      %p479 = scmp.lt.s32.totalorder %s478, 1
      %s480 = scalar_select %p479, %s478, 1
      %s481 = scalar_lea.vmem %s7, %s480
      %s482 = sadd.s32 %s24, %s25
      %s483 = sadd.s32 %s24, %s25
      %p484 = scmp.lt.s32.totalorder %s483, 1
      %s485 = scalar_select %p484, %s483, 1
      %s486 = scalar_lea.vmem %s8, %s485
      %s487 = sadd.s32 %s24, %s25
      %v488 = vld [vmem:[%s431] sm:$0xff]
      %v489 = vld [vmem:[%s431 + $0x8] sm:$0xff]
      %v490 = vld [vmem:[%s431 + $0x10] sm:$0xff]
      %v491 = vld [vmem:[%s431 + $0x18] sm:$0xff]
      %v492 = vld [vmem:[%s431 + $0x20] sm:$0xff]
      %v493 = vld [vmem:[%s431 + $0x28] sm:$0xff]
      %v494 = vld [vmem:[%s431 + $0x30] sm:$0xff]
      %v495 = vld [vmem:[%s431 + $0x38] sm:$0xff]
      %v496 = vld [vmem:[%s431 + $0x40] sm:$0xff]
      %v497 = vld [vmem:[%s431 + $0x48] sm:$0xff]
      %v498 = vld [vmem:[%s431 + $0x50] sm:$0xff]
      %v499 = vld [vmem:[%s431 + $0x58] sm:$0xff]
      %v500 = vld [vmem:[%s431 + $0x60] sm:$0xff]
      %v501 = vld [vmem:[%s431 + $0x68] sm:$0xff]
      %v502 = vld [vmem:[%s431 + $0x70] sm:$0xff]
      %v503 = vld [vmem:[%s431 + $0x78] sm:$0xff]
      %v504 = vld [vmem:[%s431 + $0x80] sm:$0xff]
      %v505 = vld [vmem:[%s431 + $0x88] sm:$0xff]
      %v506 = vld [vmem:[%s431 + $0x90] sm:$0xff]
      %v507 = vld [vmem:[%s431 + $0x98] sm:$0xff]
      %v508 = vld [vmem:[%s431 + $0xa0] sm:$0xff]
      %v509 = vld [vmem:[%s431 + $0xa8] sm:$0xff]
      %v510 = vld [vmem:[%s431 + $0xb0] sm:$0xff]
      %v511 = vld [vmem:[%s431 + $0xb8] sm:$0xff]
      %v512 = vld [vmem:[%s431 + $0xc0] sm:$0xff]
      %v513 = vld [vmem:[%s431 + $0xc8] sm:$0xff]
      %v514 = vld [vmem:[%s431 + $0xd0] sm:$0xff]
      %v515 = vld [vmem:[%s431 + $0xd8] sm:$0xff]
      %v516 = vld [vmem:[%s431 + $0xe0] sm:$0xff]
      %v517 = vld [vmem:[%s431 + $0xe8] sm:$0xff]
      %v518 = vld [vmem:[%s431 + $0xf0] sm:$0xff]
      %v519 = vld [vmem:[%s431 + $0xf8] sm:$0xff]
      %v520 = vld [vmem:[%s3] sm:$0x1]
      %v522 = vlaneseq
      %v523 = vshrl.u32 %v522, 7
      %v524 = vsub.s32 0, %v523
      %v525 = vrot.slane %v520, %v524
      %v527 = vmul.f32 %v488, %v525
      %v528 = vmul.f32 %v489, %v525
      %v529 = vmul.f32 %v490, %v525
      %v530 = vmul.f32 %v491, %v525
      %v531 = vmul.f32 %v492, %v525
      %v532 = vmul.f32 %v493, %v525
      %v533 = vmul.f32 %v494, %v525
      %v534 = vmul.f32 %v495, %v525
      %v535 = vmul.f32 %v496, %v525
      %v536 = vmul.f32 %v497, %v525
      %v537 = vmul.f32 %v498, %v525
      %v538 = vmul.f32 %v499, %v525
      %v539 = vmul.f32 %v500, %v525
      %v540 = vmul.f32 %v501, %v525
      %v541 = vmul.f32 %v502, %v525
      %v542 = vmul.f32 %v503, %v525
      %v543 = vmul.f32 %v504, %v525
      %v544 = vmul.f32 %v505, %v525
      %v545 = vmul.f32 %v506, %v525
      %v546 = vmul.f32 %v507, %v525
      %v547 = vmul.f32 %v508, %v525
      %v548 = vmul.f32 %v509, %v525
      %v549 = vmul.f32 %v510, %v525
      %v550 = vmul.f32 %v511, %v525
      %v551 = vmul.f32 %v512, %v525
      %v552 = vmul.f32 %v513, %v525
      %v553 = vmul.f32 %v514, %v525
      %v554 = vmul.f32 %v515, %v525
      %v555 = vmul.f32 %v516, %v525
      %v556 = vmul.f32 %v517, %v525
      %v557 = vmul.f32 %v518, %v525
      %v558 = vmul.f32 %v519, %v525
      %v559 = vld [vmem:[%s4] sm:$0x1]
      %v561 = vlaneseq
      %v562 = vshrl.u32 %v561, 7
      %v563 = vsub.s32 0, %v562
      %v564 = vrot.slane %v559, %v563
      %v566 = vadd.f32 %v527, %v564
      %v567 = vadd.f32 %v528, %v564
      %v568 = vadd.f32 %v529, %v564
      %v569 = vadd.f32 %v530, %v564
      %v570 = vadd.f32 %v531, %v564
      %v571 = vadd.f32 %v532, %v564
      %v572 = vadd.f32 %v533, %v564
      %v573 = vadd.f32 %v534, %v564
      %v574 = vadd.f32 %v535, %v564
      %v575 = vadd.f32 %v536, %v564
      %v576 = vadd.f32 %v537, %v564
      %v577 = vadd.f32 %v538, %v564
      %v578 = vadd.f32 %v539, %v564
      %v579 = vadd.f32 %v540, %v564
      %v580 = vadd.f32 %v541, %v564
      %v581 = vadd.f32 %v542, %v564
      %v582 = vadd.f32 %v543, %v564
      %v583 = vadd.f32 %v544, %v564
      %v584 = vadd.f32 %v545, %v564
      %v585 = vadd.f32 %v546, %v564
      %v586 = vadd.f32 %v547, %v564
      %v587 = vadd.f32 %v548, %v564
      %v588 = vadd.f32 %v549, %v564
      %v589 = vadd.f32 %v550, %v564
      %v590 = vadd.f32 %v551, %v564
      %v591 = vadd.f32 %v552, %v564
      %v592 = vadd.f32 %v553, %v564
      %v593 = vadd.f32 %v554, %v564
      %v594 = vadd.f32 %v555, %v564
      %v595 = vadd.f32 %v556, %v564
      %v596 = vadd.f32 %v557, %v564
      %v597 = vadd.f32 %v558, %v564
      %v598 = vmax.f32 %v566, 0.0
      %v599 = vmax.f32 %v567, 0.0
      %v600 = vmax.f32 %v568, 0.0
      %v601 = vmax.f32 %v569, 0.0
      %v602 = vmax.f32 %v570, 0.0
      %v603 = vmax.f32 %v571, 0.0
      %v604 = vmax.f32 %v572, 0.0
      %v605 = vmax.f32 %v573, 0.0
      %v606 = vmax.f32 %v574, 0.0
      %v607 = vmax.f32 %v575, 0.0
      %v608 = vmax.f32 %v576, 0.0
      %v609 = vmax.f32 %v577, 0.0
      %v610 = vmax.f32 %v578, 0.0
      %v611 = vmax.f32 %v579, 0.0
      %v612 = vmax.f32 %v580, 0.0
      %v613 = vmax.f32 %v581, 0.0
      %v614 = vmax.f32 %v582, 0.0
      %v615 = vmax.f32 %v583, 0.0
      %v616 = vmax.f32 %v584, 0.0
      %v617 = vmax.f32 %v585, 0.0
      %v618 = vmax.f32 %v586, 0.0
      %v619 = vmax.f32 %v587, 0.0
      %v620 = vmax.f32 %v588, 0.0
      %v621 = vmax.f32 %v589, 0.0
      %v622 = vmax.f32 %v590, 0.0
      %v623 = vmax.f32 %v591, 0.0
      %v624 = vmax.f32 %v592, 0.0
      %v625 = vmax.f32 %v593, 0.0
      %v626 = vmax.f32 %v594, 0.0
      %v627 = vmax.f32 %v595, 0.0
      %v628 = vmax.f32 %v596, 0.0
      %v629 = vmax.f32 %v597, 0.0
      %s630 = scalar_lea.vmem [#allocation2], 32
      %631 = vst [vmem:[%s630 + $0x8] sm:$0xff] %v598
      %632 = vst [vmem:[%s630 + $0x10] sm:$0xff] %v599
      %633 = vst [vmem:[%s630 + $0x28] sm:$0xff] %v600
      %634 = vst [vmem:[%s630 + $0x30] sm:$0xff] %v601
      %635 = vst [vmem:[%s630 + $0x48] sm:$0xff] %v602
      %636 = vst [vmem:[%s630 + $0x50] sm:$0xff] %v603
      %637 = vst [vmem:[%s630 + $0x68] sm:$0xff] %v604
      %638 = vst [vmem:[%s630 + $0x70] sm:$0xff] %v605
      %639 = vst [vmem:[%s630 + $0x88] sm:$0xff] %v606
      %640 = vst [vmem:[%s630 + $0x90] sm:$0xff] %v607
      %641 = vst [vmem:[%s630 + $0xa8] sm:$0xff] %v608
      %642 = vst [vmem:[%s630 + $0xb0] sm:$0xff] %v609
      %643 = vst [vmem:[%s630 + $0xc8] sm:$0xff] %v610
      %644 = vst [vmem:[%s630 + $0xd0] sm:$0xff] %v611
      %645 = vst [vmem:[%s630 + $0xe8] sm:$0xff] %v612
      %646 = vst [vmem:[%s630 + $0xf0] sm:$0xff] %v613
      %647 = vst [vmem:[%s630 + $0x108] sm:$0xff] %v614
      %648 = vst [vmem:[%s630 + $0x110] sm:$0xff] %v615
      %649 = vst [vmem:[%s630 + $0x128] sm:$0xff] %v616
      %650 = vst [vmem:[%s630 + $0x130] sm:$0xff] %v617
      %651 = vst [vmem:[%s630 + $0x148] sm:$0xff] %v618
      %652 = vst [vmem:[%s630 + $0x150] sm:$0xff] %v619
      %653 = vst [vmem:[%s630 + $0x168] sm:$0xff] %v620
      %654 = vst [vmem:[%s630 + $0x170] sm:$0xff] %v621
      %655 = vst [vmem:[%s630 + $0x188] sm:$0xff] %v622
      %656 = vst [vmem:[%s630 + $0x190] sm:$0xff] %v623
      %657 = vst [vmem:[%s630 + $0x1a8] sm:$0xff] %v624
      %658 = vst [vmem:[%s630 + $0x1b0] sm:$0xff] %v625
      %659 = vst [vmem:[%s630 + $0x1c8] sm:$0xff] %v626
      %660 = vst [vmem:[%s630 + $0x1d0] sm:$0xff] %v627
      %661 = vst [vmem:[%s630 + $0x1e8] sm:$0xff] %v628
      %662 = vst [vmem:[%s630 + $0x1f0] sm:$0xff] %v629
      %p663 = scmp.eq.s32.totalorder %s25, 0
      // Predicated region
      $region45: #{double_conv.3} parent=43 // pred_check
        %p664 = pneg %p663
      $region46: #{double_conv.3} parent=43 // pred_check_branch
        %666 = sbr.rel (%p664) target = $region48
      $region47: #{double_conv.3} parent=43 // pred_region
        %667 = vst [vmem:[#allocation2 + $0x8] sm:$0xff] 0.0
        %668 = vst [vmem:[#allocation2 + $0x10] sm:$0xff] 0.0
      $region48: #{double_conv.3} parent=43 // pred_fallthru
        _
      %p669 = scmp.gt.s32.totalorder %s25, 0
      // Predicated region
      $region49: #{double_conv.3} parent=43 // pred_check
        %p670 = pneg %p669
      $region50: #{double_conv.3} parent=43 // pred_check_branch
        %672 = sbr.rel (%p670) target = $region52
      $region51: #{double_conv.3} parent=43 // pred_region
        %v673 = vld [vmem:[%s444] sm:$0xff]
        %v674 = vld [vmem:[%s444 + $0x8] sm:$0xff]
        %v675 = vld [vmem:[%s3] sm:$0x1]
        %v677 = vlaneseq
        %v678 = vshrl.u32 %v677, 7
        %v679 = vsub.s32 0, %v678
        %v680 = vrot.slane %v675, %v679
        %v682 = vmul.f32 %v673, %v680
        %v683 = vmul.f32 %v674, %v680
        %v684 = vld [vmem:[%s4] sm:$0x1]
        %v686 = vlaneseq
        %v687 = vshrl.u32 %v686, 7
        %v688 = vsub.s32 0, %v687
        %v689 = vrot.slane %v684, %v688
        %v691 = vadd.f32 %v682, %v689
        %v692 = vadd.f32 %v683, %v689
        %v693 = vmax.f32 %v691, 0.0
        %v694 = vmax.f32 %v692, 0.0
        %695 = vst [vmem:[#allocation2 + $0x8] sm:$0xff] %v693
        %696 = vst [vmem:[#allocation2 + $0x10] sm:$0xff] %v694
      $region52: #{double_conv.3} parent=43 // pred_fallthru
        _
      // Predicated region
      $region53: #{double_conv.3} parent=43 // pred_check
        %p697 = pneg %p663
      $region54: #{double_conv.3} parent=43 // pred_check_branch
        %699 = sbr.rel (%p697) target = $region56
      $region55: #{double_conv.3} parent=43 // pred_region
        %s700 = scalar_lea.vmem [#allocation2], 544
        %701 = vst [vmem:[%s700 + $0x8] sm:$0xff] 0.0
        %702 = vst [vmem:[%s700 + $0x10] sm:$0xff] 0.0
      $region56: #{double_conv.3} parent=43 // pred_fallthru
        _
      %p703 = scmp.lt.s32.totalorder %s25, 0
      // Predicated region
      $region57: #{double_conv.3} parent=43 // pred_check
        %p704 = pneg %p703
      $region58: #{double_conv.3} parent=43 // pred_check_branch
        %706 = sbr.rel (%p704) target = $region60
      $region59: #{double_conv.3} parent=43 // pred_region
        %v707 = vld [vmem:[%s462] sm:$0xff]
        %v708 = vld [vmem:[%s462 + $0x8] sm:$0xff]
        %v709 = vld [vmem:[%s3] sm:$0x1]
        %v711 = vlaneseq
        %v712 = vshrl.u32 %v711, 7
        %v713 = vsub.s32 0, %v712
        %v714 = vrot.slane %v709, %v713
        %v716 = vmul.f32 %v707, %v714
        %v717 = vmul.f32 %v708, %v714
        %v718 = vld [vmem:[%s4] sm:$0x1]
        %v720 = vlaneseq
        %v721 = vshrl.u32 %v720, 7
        %v722 = vsub.s32 0, %v721
        %v723 = vrot.slane %v718, %v722
        %v725 = vadd.f32 %v716, %v723
        %v726 = vadd.f32 %v717, %v723
        %v727 = vmax.f32 %v725, 0.0
        %v728 = vmax.f32 %v726, 0.0
        %s729 = scalar_lea.vmem [#allocation2], 544
        %730 = vst [vmem:[%s729 + $0x8] sm:$0xff] %v727
        %731 = vst [vmem:[%s729 + $0x10] sm:$0xff] %v728
      $region60: #{double_conv.3} parent=43 // pred_fallthru
        _
      %v732 = vld [vmem:[#allocation2 + $0x7] sm:$0xff]
      %v733 = vld [vmem:[#allocation2 + $0xf] sm:$0xff]
      %v734 = vld [vmem:[#allocation2 + $0x27] sm:$0xff]
      %v735 = vld [vmem:[#allocation2 + $0x2f] sm:$0xff]
      %v736 = vld [vmem:[#allocation2 + $0x47] sm:$0xff]
      %v737 = vld [vmem:[#allocation2 + $0x4f] sm:$0xff]
      %v738 = vld [vmem:[#allocation2 + $0x67] sm:$0xff]
      %v739 = vld [vmem:[#allocation2 + $0x6f] sm:$0xff]
      %v740 = vld [vmem:[#allocation2 + $0x87] sm:$0xff]
      %v741 = vld [vmem:[#allocation2 + $0x8f] sm:$0xff]
      %v742 = vld [vmem:[#allocation2 + $0xa7] sm:$0xff]
      %v743 = vld [vmem:[#allocation2 + $0xaf] sm:$0xff]
      %v744 = vld [vmem:[#allocation2 + $0xc7] sm:$0xff]
      %v745 = vld [vmem:[#allocation2 + $0xcf] sm:$0xff]
      %v746 = vld [vmem:[#allocation2 + $0xe7] sm:$0xff]
      %v747 = vld [vmem:[#allocation2 + $0xef] sm:$0xff]
      %v748 = vld [vmem:[#allocation2 + $0x107] sm:$0xff]
      %v749 = vld [vmem:[#allocation2 + $0x10f] sm:$0xff]
      %v750 = vld [vmem:[#allocation2 + $0x127] sm:$0xff]
      %v751 = vld [vmem:[#allocation2 + $0x12f] sm:$0xff]
      %v752 = vld [vmem:[#allocation2 + $0x147] sm:$0xff]
      %v753 = vld [vmem:[#allocation2 + $0x14f] sm:$0xff]
      %v754 = vld [vmem:[#allocation2 + $0x167] sm:$0xff]
      %v755 = vld [vmem:[#allocation2 + $0x16f] sm:$0xff]
      %v756 = vld [vmem:[#allocation2 + $0x187] sm:$0xff]
      %v757 = vld [vmem:[#allocation2 + $0x18f] sm:$0xff]
      %v758 = vld [vmem:[#allocation2 + $0x1a7] sm:$0xff]
      %v759 = vld [vmem:[#allocation2 + $0x1af] sm:$0xff]
      %v760 = vld [vmem:[#allocation2 + $0x1c7] sm:$0xff]
      %v761 = vld [vmem:[#allocation2 + $0x1cf] sm:$0xff]
      %v762 = vld [vmem:[#allocation2 + $0x1e7] sm:$0xff]
      %v763 = vld [vmem:[#allocation2 + $0x1ef] sm:$0xff]
      %v764 = vld [vmem:[#allocation2 + $0x207] sm:$0xff]
      %v765 = vld [vmem:[#allocation2 + $0x20f] sm:$0xff]
      %v766 = vld [vmem:[#allocation2 + $0x227] sm:$0xff]
      %v767 = vld [vmem:[#allocation2 + $0x22f] sm:$0xff]
      %v768 = vlaneseq
      %v769 = vshrl.u32 %v768, 7
      %v770 = vadd.s32 %v769, 8
      %vm771 = vcmp.eq.s32.totalorder %v769, 0
      %vm772 = vcmp.eq.s32.totalorder %v770, 0
      %v773 = vsel %vm771, 1, 0
      %v774 = vsel %vm772, 1, 0
      %vm775 = vcmp.eq.s32.totalorder %v773, 1
      %vm776 = vcmp.eq.s32.totalorder %v774, 1
      %v777 = vsel %vm775, 0.0, %v732
      %v778 = vsel %vm776, 0.0, %v733
      %v779 = vsel %vm775, 0.0, %v734
      %v780 = vsel %vm776, 0.0, %v735
      %v781 = vsel %vm775, 0.0, %v736
      %v782 = vsel %vm776, 0.0, %v737
      %v783 = vsel %vm775, 0.0, %v738
      %v784 = vsel %vm776, 0.0, %v739
      %v785 = vsel %vm775, 0.0, %v740
      %v786 = vsel %vm776, 0.0, %v741
      %v787 = vsel %vm775, 0.0, %v742
      %v788 = vsel %vm776, 0.0, %v743
      %v789 = vsel %vm775, 0.0, %v744
      %v790 = vsel %vm776, 0.0, %v745
      %v791 = vsel %vm775, 0.0, %v746
      %v792 = vsel %vm776, 0.0, %v747
      %v793 = vsel %vm775, 0.0, %v748
      %v794 = vsel %vm776, 0.0, %v749
      %v795 = vsel %vm775, 0.0, %v750
      %v796 = vsel %vm776, 0.0, %v751
      %v797 = vsel %vm775, 0.0, %v752
      %v798 = vsel %vm776, 0.0, %v753
      %v799 = vsel %vm775, 0.0, %v754
      %v800 = vsel %vm776, 0.0, %v755
      %v801 = vsel %vm775, 0.0, %v756
      %v802 = vsel %vm776, 0.0, %v757
      %v803 = vsel %vm775, 0.0, %v758
      %v804 = vsel %vm776, 0.0, %v759
      %v805 = vsel %vm775, 0.0, %v760
      %v806 = vsel %vm776, 0.0, %v761
      %v807 = vsel %vm775, 0.0, %v762
      %v808 = vsel %vm776, 0.0, %v763
      %v809 = vsel %vm775, 0.0, %v764
      %v810 = vsel %vm776, 0.0, %v765
      %v811 = vsel %vm775, 0.0, %v766
      %v812 = vsel %vm776, 0.0, %v767
      %v813 = vld [vmem:[%s5] sm:$0xff]
      %v814 = vld [vmem:[%s5 + $0x8] sm:$0xff]
      %v815 = vld [vmem:[%s5 + $0x10] sm:$0xff]
      %v816 = vld [vmem:[%s5 + $0x18] sm:$0xff]
      %v817 = vld [vmem:[%s5 + $0x20] sm:$0xff]
      %v818 = vld [vmem:[%s5 + $0x28] sm:$0xff]
      %v819 = vld [vmem:[%s5 + $0x30] sm:$0xff]
      %v820 = vld [vmem:[%s5 + $0x38] sm:$0xff]
      %v821 = vld [vmem:[%s5 + $0x40] sm:$0xff]
      %v822 = vld [vmem:[%s5 + $0x48] sm:$0xff]
      %v823 = vld [vmem:[%s5 + $0x50] sm:$0xff]
      %v824 = vld [vmem:[%s5 + $0x58] sm:$0xff]
      %v825 = vld [vmem:[%s5 + $0x60] sm:$0xff]
      %v826 = vld [vmem:[%s5 + $0x68] sm:$0xff]
      %v827 = vld [vmem:[%s5 + $0x70] sm:$0xff]
      %v828 = vld [vmem:[%s5 + $0x78] sm:$0xff]
      %v829 = vld [vmem:[%s5 + $0x80] sm:$0xff]
      %v830 = vld [vmem:[%s5 + $0x88] sm:$0xff]
      %v831 = vld [vmem:[%s5 + $0x90] sm:$0xff]
      %v832 = vld [vmem:[%s5 + $0x98] sm:$0xff]
      %v833 = vld [vmem:[%s5 + $0xa0] sm:$0xff]
      %v834 = vld [vmem:[%s5 + $0xa8] sm:$0xff]
      %v835 = vld [vmem:[%s5 + $0xb0] sm:$0xff]
      %v836 = vld [vmem:[%s5 + $0xb8] sm:$0xff]
      %v837 = vld [vmem:[%s5 + $0xc0] sm:$0xff]
      %v838 = vld [vmem:[%s5 + $0xc8] sm:$0xff]
      %v839 = vld [vmem:[%s5 + $0xd0] sm:$0xff]
      %v840 = vld [vmem:[%s5 + $0xd8] sm:$0xff]
      %v841 = vld [vmem:[%s5 + $0xe0] sm:$0xff]
      %v842 = vld [vmem:[%s5 + $0xe8] sm:$0xff]
      %v843 = vld [vmem:[%s5 + $0xf0] sm:$0xff]
      %v844 = vld [vmem:[%s5 + $0xf8] sm:$0xff]
      %v845 = vld [vmem:[%s5 + $0x100] sm:$0xff]
      %v846 = vld [vmem:[%s5 + $0x108] sm:$0xff]
      %v847 = vld [vmem:[%s5 + $0x110] sm:$0xff]
      %v848 = vld [vmem:[%s5 + $0x118] sm:$0xff]
      %v849 = vld [vmem:[%s5 + $0x120] sm:$0xff]
      %v850 = vld [vmem:[%s5 + $0x128] sm:$0xff]
      %v851 = vld [vmem:[%s5 + $0x130] sm:$0xff]
      %v852 = vld [vmem:[%s5 + $0x138] sm:$0xff]
      %v853 = vld [vmem:[%s5 + $0x140] sm:$0xff]
      %v854 = vld [vmem:[%s5 + $0x148] sm:$0xff]
      %v855 = vld [vmem:[%s5 + $0x150] sm:$0xff]
      %v856 = vld [vmem:[%s5 + $0x158] sm:$0xff]
      %v857 = vld [vmem:[%s5 + $0x160] sm:$0xff]
      %v858 = vld [vmem:[%s5 + $0x168] sm:$0xff]
      %v859 = vld [vmem:[%s5 + $0x170] sm:$0xff]
      %v860 = vld [vmem:[%s5 + $0x178] sm:$0xff]
      %v861 = vld [vmem:[#allocation2 + $0x8] sm:$0xff]
      %v862 = vld [vmem:[#allocation2 + $0x10] sm:$0xff]
      %v863 = vld [vmem:[#allocation2 + $0x28] sm:$0xff]
      %v864 = vld [vmem:[#allocation2 + $0x30] sm:$0xff]
      %v865 = vld [vmem:[#allocation2 + $0x48] sm:$0xff]
      %v866 = vld [vmem:[#allocation2 + $0x50] sm:$0xff]
      %v867 = vld [vmem:[#allocation2 + $0x68] sm:$0xff]
      %v868 = vld [vmem:[#allocation2 + $0x70] sm:$0xff]
      %v869 = vld [vmem:[#allocation2 + $0x88] sm:$0xff]
      %v870 = vld [vmem:[#allocation2 + $0x90] sm:$0xff]
      %v871 = vld [vmem:[#allocation2 + $0xa8] sm:$0xff]
      %v872 = vld [vmem:[#allocation2 + $0xb0] sm:$0xff]
      %v873 = vld [vmem:[#allocation2 + $0xc8] sm:$0xff]
      %v874 = vld [vmem:[#allocation2 + $0xd0] sm:$0xff]
      %v875 = vld [vmem:[#allocation2 + $0xe8] sm:$0xff]
      %v876 = vld [vmem:[#allocation2 + $0xf0] sm:$0xff]
      %v877 = vld [vmem:[#allocation2 + $0x108] sm:$0xff]
      %v878 = vld [vmem:[#allocation2 + $0x110] sm:$0xff]
      %v879 = vld [vmem:[#allocation2 + $0x128] sm:$0xff]
      %v880 = vld [vmem:[#allocation2 + $0x130] sm:$0xff]
      %v881 = vld [vmem:[#allocation2 + $0x148] sm:$0xff]
      %v882 = vld [vmem:[#allocation2 + $0x150] sm:$0xff]
      %v883 = vld [vmem:[#allocation2 + $0x168] sm:$0xff]
      %v884 = vld [vmem:[#allocation2 + $0x170] sm:$0xff]
      %v885 = vld [vmem:[#allocation2 + $0x188] sm:$0xff]
      %v886 = vld [vmem:[#allocation2 + $0x190] sm:$0xff]
      %v887 = vld [vmem:[#allocation2 + $0x1a8] sm:$0xff]
      %v888 = vld [vmem:[#allocation2 + $0x1b0] sm:$0xff]
      %v889 = vld [vmem:[#allocation2 + $0x1c8] sm:$0xff]
      %v890 = vld [vmem:[#allocation2 + $0x1d0] sm:$0xff]
      %v891 = vld [vmem:[#allocation2 + $0x1e8] sm:$0xff]
      %v892 = vld [vmem:[#allocation2 + $0x1f0] sm:$0xff]
      %v893 = vld [vmem:[#allocation2 + $0x208] sm:$0xff]
      %v894 = vld [vmem:[#allocation2 + $0x210] sm:$0xff]
      %v895 = vld [vmem:[#allocation2 + $0x228] sm:$0xff]
      %v896 = vld [vmem:[#allocation2 + $0x230] sm:$0xff]
      %s897 = scalar_lea.vmem %s5, 384
      %v898 = vld [vmem:[%s897] sm:$0xff]
      %v899 = vld [vmem:[%s897 + $0x8] sm:$0xff]
      %v900 = vld [vmem:[%s897 + $0x10] sm:$0xff]
      %v901 = vld [vmem:[%s897 + $0x18] sm:$0xff]
      %v902 = vld [vmem:[%s897 + $0x20] sm:$0xff]
      %v903 = vld [vmem:[%s897 + $0x28] sm:$0xff]
      %v904 = vld [vmem:[%s897 + $0x30] sm:$0xff]
      %v905 = vld [vmem:[%s897 + $0x38] sm:$0xff]
      %v906 = vld [vmem:[%s897 + $0x40] sm:$0xff]
      %v907 = vld [vmem:[%s897 + $0x48] sm:$0xff]
      %v908 = vld [vmem:[%s897 + $0x50] sm:$0xff]
      %v909 = vld [vmem:[%s897 + $0x58] sm:$0xff]
      %v910 = vld [vmem:[%s897 + $0x60] sm:$0xff]
      %v911 = vld [vmem:[%s897 + $0x68] sm:$0xff]
      %v912 = vld [vmem:[%s897 + $0x70] sm:$0xff]
      %v913 = vld [vmem:[%s897 + $0x78] sm:$0xff]
      %v914 = vld [vmem:[%s897 + $0x80] sm:$0xff]
      %v915 = vld [vmem:[%s897 + $0x88] sm:$0xff]
      %v916 = vld [vmem:[%s897 + $0x90] sm:$0xff]
      %v917 = vld [vmem:[%s897 + $0x98] sm:$0xff]
      %v918 = vld [vmem:[%s897 + $0xa0] sm:$0xff]
      %v919 = vld [vmem:[%s897 + $0xa8] sm:$0xff]
      %v920 = vld [vmem:[%s897 + $0xb0] sm:$0xff]
      %v921 = vld [vmem:[%s897 + $0xb8] sm:$0xff]
      %v922 = vld [vmem:[%s897 + $0xc0] sm:$0xff]
      %v923 = vld [vmem:[%s897 + $0xc8] sm:$0xff]
      %v924 = vld [vmem:[%s897 + $0xd0] sm:$0xff]
      %v925 = vld [vmem:[%s897 + $0xd8] sm:$0xff]
      %v926 = vld [vmem:[%s897 + $0xe0] sm:$0xff]
      %v927 = vld [vmem:[%s897 + $0xe8] sm:$0xff]
      %v928 = vld [vmem:[%s897 + $0xf0] sm:$0xff]
      %v929 = vld [vmem:[%s897 + $0xf8] sm:$0xff]
      %v930 = vld [vmem:[%s897 + $0x100] sm:$0xff]
      %v931 = vld [vmem:[%s897 + $0x108] sm:$0xff]
      %v932 = vld [vmem:[%s897 + $0x110] sm:$0xff]
      %v933 = vld [vmem:[%s897 + $0x118] sm:$0xff]
      %v934 = vld [vmem:[%s897 + $0x120] sm:$0xff]
      %v935 = vld [vmem:[%s897 + $0x128] sm:$0xff]
      %v936 = vld [vmem:[%s897 + $0x130] sm:$0xff]
      %v937 = vld [vmem:[%s897 + $0x138] sm:$0xff]
      %v938 = vld [vmem:[%s897 + $0x140] sm:$0xff]
      %v939 = vld [vmem:[%s897 + $0x148] sm:$0xff]
      %v940 = vld [vmem:[%s897 + $0x150] sm:$0xff]
      %v941 = vld [vmem:[%s897 + $0x158] sm:$0xff]
      %v942 = vld [vmem:[%s897 + $0x160] sm:$0xff]
      %v943 = vld [vmem:[%s897 + $0x168] sm:$0xff]
      %v944 = vld [vmem:[%s897 + $0x170] sm:$0xff]
      %v945 = vld [vmem:[%s897 + $0x178] sm:$0xff]
      %946 = vmatprep.subr.mxu0 0.0
      %947 = vmatpush1.msra.mxu0 %v913
      %948 = vmatprep.subr.mxu0 0.0
      %949 = vmatpush1.msra.mxu0 %v912
      %950 = vmatprep.subr.mxu0 0.0
      %951 = vmatpush1.msra.mxu0 %v911
      %952 = vmatprep.subr.mxu0 0.0
      %953 = vmatpush1.msra.mxu0 %v910
      %954 = vmatprep.subr.mxu0 0.0
      %955 = vmatpush1.msra.mxu0 %v909
      %956 = vmatprep.subr.mxu0 0.0
      %957 = vmatpush1.msra.mxu0 %v908
      %958 = vmatprep.subr.mxu0 0.0
      %959 = vmatpush1.msra.mxu0 %v907
      %960 = vmatprep.subr.mxu0 0.0
      %961 = vmatpush1.msra.mxu0 %v906
      %962 = vmatprep.subr.mxu0 0.0
      %963 = vmatpush1.msra.mxu0 %v905
      %964 = vmatprep.subr.mxu0 0.0
      %965 = vmatpush1.msra.mxu0 %v904
      %966 = vmatprep.subr.mxu0 0.0
      %967 = vmatpush1.msra.mxu0 %v903
      %968 = vmatprep.subr.mxu0 0.0
      %969 = vmatpush1.msra.mxu0 %v902
      %970 = vmatprep.subr.mxu0 0.0
      %971 = vmatpush1.msra.mxu0 %v901
      %972 = vmatprep.subr.mxu0 0.0
      %973 = vmatpush1.msra.mxu0 %v900
      %974 = vmatprep.subr.mxu0 0.0
      %975 = vmatpush1.msra.mxu0 %v899
      %976 = vmatprep.subr.mxu0 0.0
      %977 = vmatpush1.msra.mxu0 %v898
      %978 = vmatprep.subr.mxu0 0.0
      %979 = vmatpush2.msra.mxu0 %v929
      %980 = vmatprep.subr.mxu0 0.0
      %981 = vmatpush2.msra.mxu0 %v928
      %982 = vmatprep.subr.mxu0 0.0
      %983 = vmatpush2.msra.mxu0 %v927
      %984 = vmatprep.subr.mxu0 0.0
      %985 = vmatpush2.msra.mxu0 %v926
      %986 = vmatprep.subr.mxu0 0.0
      %987 = vmatpush2.msra.mxu0 %v925
      %988 = vmatprep.subr.mxu0 0.0
      %989 = vmatpush2.msra.mxu0 %v924
      %990 = vmatprep.subr.mxu0 0.0
      %991 = vmatpush2.msra.mxu0 %v923
      %992 = vmatprep.subr.mxu0 0.0
      %993 = vmatpush2.msra.mxu0 %v922
      %994 = vmatprep.subr.mxu0 0.0
      %995 = vmatpush2.msra.mxu0 %v921
      %996 = vmatprep.subr.mxu0 0.0
      %997 = vmatpush2.msra.mxu0 %v920
      %998 = vmatprep.subr.mxu0 0.0
      %999 = vmatpush2.msra.mxu0 %v919
      %1000 = vmatprep.subr.mxu0 0.0
      %1001 = vmatpush2.msra.mxu0 %v918
      %1002 = vmatprep.subr.mxu0 0.0
      %1003 = vmatpush2.msra.mxu0 %v917
      %1004 = vmatprep.subr.mxu0 0.0
      %1005 = vmatpush2.msra.mxu0 %v916
      %1006 = vmatprep.subr.mxu0 0.0
      %1007 = vmatpush2.msra.mxu0 %v915
      %1008 = vmatprep.subr.mxu0 0.0
      %1009 = vmatpush2.msra.mxu0 %v914
      %1010 = vmatprep.mubr.f32.mxu0 %v863
      %1011 = vmatmul.mubr.f32.gmra.mxu0 %v861
      %v1012 = vpop.f32.mrf.mxu0
      %v1013 = vadd.f32 0.0, %v1012
      %v1014 = vpop.f32.mrf.mxu0
      %1015 = vmatprep.mubr.f32.mxu0 %v864
      %1016 = vmatmul.mubr.f32.gmra.mxu0 %v862
      %v1017 = vpop.f32.mrf.mxu0
      %v1018 = vadd.f32 0.0, %v1017
      %v1019 = vpop.f32.mrf.mxu0
      %1020 = vmatprep.mubr.f32.mxu0 %v865
      %1021 = vmatmul.mubr.f32.gmra.mxu0 %v863
      %v1022 = vpop.f32.mrf.mxu0
      %v1023 = vadd.f32 0.0, %v1022
      %v1024 = vpop.f32.mrf.mxu0
      %1025 = vmatprep.mubr.f32.mxu0 %v866
      %1026 = vmatmul.mubr.f32.gmra.mxu0 %v864
      %v1027 = vpop.f32.mrf.mxu0
      %v1028 = vadd.f32 0.0, %v1027
      %v1029 = vpop.f32.mrf.mxu0
      %1030 = vmatprep.mubr.f32.mxu0 %v867
      %1031 = vmatmul.mubr.f32.gmra.mxu0 %v865
      %v1032 = vpop.f32.mrf.mxu0
      %v1033 = vadd.f32 0.0, %v1032
      %v1034 = vpop.f32.mrf.mxu0
      %1035 = vmatprep.mubr.f32.mxu0 %v868
      %1036 = vmatmul.mubr.f32.gmra.mxu0 %v866
      %v1037 = vpop.f32.mrf.mxu0
      %v1038 = vadd.f32 0.0, %v1037
      %v1039 = vpop.f32.mrf.mxu0
      %1040 = vmatprep.mubr.f32.mxu0 %v869
      %1041 = vmatmul.mubr.f32.gmra.mxu0 %v867
      %v1042 = vpop.f32.mrf.mxu0
      %v1043 = vadd.f32 0.0, %v1042
      %v1044 = vpop.f32.mrf.mxu0
      %1045 = vmatprep.mubr.f32.mxu0 %v870
      %1046 = vmatmul.mubr.f32.gmra.mxu0 %v868
      %v1047 = vpop.f32.mrf.mxu0
      %v1048 = vadd.f32 0.0, %v1047
      %v1049 = vpop.f32.mrf.mxu0
      %1050 = vmatprep.mubr.f32.mxu0 %v871
      %1051 = vmatmul.mubr.f32.gmra.mxu0 %v869
      %v1052 = vpop.f32.mrf.mxu0
      %v1053 = vadd.f32 0.0, %v1052
      %v1054 = vpop.f32.mrf.mxu0
      %1055 = vmatprep.mubr.f32.mxu0 %v872
      %1056 = vmatmul.mubr.f32.gmra.mxu0 %v870
      %v1057 = vpop.f32.mrf.mxu0
      %v1058 = vadd.f32 0.0, %v1057
      %v1059 = vpop.f32.mrf.mxu0
      %1060 = vmatprep.mubr.f32.mxu0 %v873
      %1061 = vmatmul.mubr.f32.gmra.mxu0 %v871
      %v1062 = vpop.f32.mrf.mxu0
      %v1063 = vadd.f32 0.0, %v1062
      %v1064 = vpop.f32.mrf.mxu0
      %1065 = vmatprep.mubr.f32.mxu0 %v874
      %1066 = vmatmul.mubr.f32.gmra.mxu0 %v872
      %v1067 = vpop.f32.mrf.mxu0
      %v1068 = vadd.f32 0.0, %v1067
      %v1069 = vpop.f32.mrf.mxu0
      %1070 = vmatprep.mubr.f32.mxu0 %v875
      %1071 = vmatmul.mubr.f32.gmra.mxu0 %v873
      %v1072 = vpop.f32.mrf.mxu0
      %v1073 = vadd.f32 0.0, %v1072
      %v1074 = vpop.f32.mrf.mxu0
      %1075 = vmatprep.mubr.f32.mxu0 %v876
      %1076 = vmatmul.mubr.f32.gmra.mxu0 %v874
      %v1077 = vpop.f32.mrf.mxu0
      %v1078 = vadd.f32 0.0, %v1077
      %v1079 = vpop.f32.mrf.mxu0
      %1080 = vmatprep.mubr.f32.mxu0 %v877
      %1081 = vmatmul.mubr.f32.gmra.mxu0 %v875
      %v1082 = vpop.f32.mrf.mxu0
      %v1083 = vadd.f32 0.0, %v1082
      %v1084 = vpop.f32.mrf.mxu0
      %1085 = vmatprep.mubr.f32.mxu0 %v878
      %1086 = vmatmul.mubr.f32.gmra.mxu0 %v876
      %v1087 = vpop.f32.mrf.mxu0
      %v1088 = vadd.f32 0.0, %v1087
      %v1089 = vpop.f32.mrf.mxu0
      %1090 = vmatprep.mubr.f32.mxu0 %v879
      %1091 = vmatmul.mubr.f32.gmra.mxu0 %v877
      %v1092 = vpop.f32.mrf.mxu0
      %v1093 = vadd.f32 0.0, %v1092
      %v1094 = vpop.f32.mrf.mxu0
      %1095 = vmatprep.mubr.f32.mxu0 %v880
      %1096 = vmatmul.mubr.f32.gmra.mxu0 %v878
      %v1097 = vpop.f32.mrf.mxu0
      %v1098 = vadd.f32 0.0, %v1097
      %v1099 = vpop.f32.mrf.mxu0
      %1100 = vmatprep.mubr.f32.mxu0 %v881
      %1101 = vmatmul.mubr.f32.gmra.mxu0 %v879
      %v1102 = vpop.f32.mrf.mxu0
      %v1103 = vadd.f32 0.0, %v1102
      %v1104 = vpop.f32.mrf.mxu0
      %1105 = vmatprep.mubr.f32.mxu0 %v882
      %1106 = vmatmul.mubr.f32.gmra.mxu0 %v880
      %v1107 = vpop.f32.mrf.mxu0
      %v1108 = vadd.f32 0.0, %v1107
      %v1109 = vpop.f32.mrf.mxu0
      %1110 = vmatprep.mubr.f32.mxu0 %v883
      %1111 = vmatmul.mubr.f32.gmra.mxu0 %v881
      %v1112 = vpop.f32.mrf.mxu0
      %v1113 = vadd.f32 0.0, %v1112
      %v1114 = vpop.f32.mrf.mxu0
      %1115 = vmatprep.mubr.f32.mxu0 %v884
      %1116 = vmatmul.mubr.f32.gmra.mxu0 %v882
      %v1117 = vpop.f32.mrf.mxu0
      %v1118 = vadd.f32 0.0, %v1117
      %v1119 = vpop.f32.mrf.mxu0
      %1120 = vmatprep.mubr.f32.mxu0 %v885
      %1121 = vmatmul.mubr.f32.gmra.mxu0 %v883
      %v1122 = vpop.f32.mrf.mxu0
      %v1123 = vadd.f32 0.0, %v1122
      %v1124 = vpop.f32.mrf.mxu0
      %1125 = vmatprep.mubr.f32.mxu0 %v886
      %1126 = vmatmul.mubr.f32.gmra.mxu0 %v884
      %v1127 = vpop.f32.mrf.mxu0
      %v1128 = vadd.f32 0.0, %v1127
      %v1129 = vpop.f32.mrf.mxu0
      %1130 = vmatprep.mubr.f32.mxu0 %v887
      %1131 = vmatmul.mubr.f32.gmra.mxu0 %v885
      %v1132 = vpop.f32.mrf.mxu0
      %v1133 = vadd.f32 0.0, %v1132
      %v1134 = vpop.f32.mrf.mxu0
      %1135 = vmatprep.mubr.f32.mxu0 %v888
      %1136 = vmatmul.mubr.f32.gmra.mxu0 %v886
      %v1137 = vpop.f32.mrf.mxu0
      %v1138 = vadd.f32 0.0, %v1137
      %v1139 = vpop.f32.mrf.mxu0
      %1140 = vmatprep.mubr.f32.mxu0 %v889
      %1141 = vmatmul.mubr.f32.gmra.mxu0 %v887
      %v1142 = vpop.f32.mrf.mxu0
      %v1143 = vadd.f32 0.0, %v1142
      %v1144 = vpop.f32.mrf.mxu0
      %1145 = vmatprep.mubr.f32.mxu0 %v890
      %1146 = vmatmul.mubr.f32.gmra.mxu0 %v888
      %v1147 = vpop.f32.mrf.mxu0
      %v1148 = vadd.f32 0.0, %v1147
      %v1149 = vpop.f32.mrf.mxu0
      %1150 = vmatprep.mubr.f32.mxu0 %v891
      %1151 = vmatmul.mubr.f32.gmra.mxu0 %v889
      %v1152 = vpop.f32.mrf.mxu0
      %v1153 = vadd.f32 0.0, %v1152
      %v1154 = vpop.f32.mrf.mxu0
      %1155 = vmatprep.mubr.f32.mxu0 %v892
      %1156 = vmatmul.mubr.f32.gmra.mxu0 %v890
      %v1157 = vpop.f32.mrf.mxu0
      %v1158 = vadd.f32 0.0, %v1157
      %v1159 = vpop.f32.mrf.mxu0
      %1160 = vmatprep.mubr.f32.mxu0 %v893
      %1161 = vmatmul.mubr.f32.gmra.mxu0 %v891
      %v1162 = vpop.f32.mrf.mxu0
      %v1163 = vadd.f32 0.0, %v1162
      %v1164 = vpop.f32.mrf.mxu0
      %1165 = vmatprep.mubr.f32.mxu0 %v894
      %1166 = vmatmul.mubr.f32.gmra.mxu0 %v892
      %v1167 = vpop.f32.mrf.mxu0
      %v1168 = vadd.f32 0.0, %v1167
      %v1169 = vpop.f32.mrf.mxu0
      %1170 = vdwg.mxu0
      %1171 = vmatprep.subr.mxu0 0.0
      %1172 = vmatpush1.msra.mxu0 %v945
      %1173 = vmatprep.subr.mxu0 0.0
      %1174 = vmatpush1.msra.mxu0 %v944
      %1175 = vmatprep.subr.mxu0 0.0
      %1176 = vmatpush1.msra.mxu0 %v943
      %1177 = vmatprep.subr.mxu0 0.0
      %1178 = vmatpush1.msra.mxu0 %v942
      %1179 = vmatprep.subr.mxu0 0.0
      %1180 = vmatpush1.msra.mxu0 %v941
      %1181 = vmatprep.subr.mxu0 0.0
      %1182 = vmatpush1.msra.mxu0 %v940
      %1183 = vmatprep.subr.mxu0 0.0
      %1184 = vmatpush1.msra.mxu0 %v939
      %1185 = vmatprep.subr.mxu0 0.0
      %1186 = vmatpush1.msra.mxu0 %v938
      %1187 = vmatprep.subr.mxu0 0.0
      %1188 = vmatpush1.msra.mxu0 %v937
      %1189 = vmatprep.subr.mxu0 0.0
      %1190 = vmatpush1.msra.mxu0 %v936
      %1191 = vmatprep.subr.mxu0 0.0
      %1192 = vmatpush1.msra.mxu0 %v935
      %1193 = vmatprep.subr.mxu0 0.0
      %1194 = vmatpush1.msra.mxu0 %v934
      %1195 = vmatprep.subr.mxu0 0.0
      %1196 = vmatpush1.msra.mxu0 %v933
      %1197 = vmatprep.subr.mxu0 0.0
      %1198 = vmatpush1.msra.mxu0 %v932
      %1199 = vmatprep.subr.mxu0 0.0
      %1200 = vmatpush1.msra.mxu0 %v931
      %1201 = vmatprep.subr.mxu0 0.0
      %1202 = vmatpush1.msra.mxu0 %v930
      %1203 = vmatprep.subr.mxu0 0.0
      %1204 = vmatpush2.msra.mxu0 0.0
      %1205 = vmatprep.subr.mxu0 0.0
      %1206 = vmatpush2.msra.mxu0 0.0
      %1207 = vmatprep.subr.mxu0 0.0
      %1208 = vmatpush2.msra.mxu0 0.0
      %1209 = vmatprep.subr.mxu0 0.0
      %1210 = vmatpush2.msra.mxu0 0.0
      %1211 = vmatprep.subr.mxu0 0.0
      %1212 = vmatpush2.msra.mxu0 0.0
      %1213 = vmatprep.subr.mxu0 0.0
      %1214 = vmatpush2.msra.mxu0 0.0
      %1215 = vmatprep.subr.mxu0 0.0
      %1216 = vmatpush2.msra.mxu0 0.0
      %1217 = vmatprep.subr.mxu0 0.0
      %1218 = vmatpush2.msra.mxu0 0.0
      %1219 = vmatprep.subr.mxu0 0.0
      %1220 = vmatpush2.msra.mxu0 0.0
      %1221 = vmatprep.subr.mxu0 0.0
      %1222 = vmatpush2.msra.mxu0 0.0
      %1223 = vmatprep.subr.mxu0 0.0
      %1224 = vmatpush2.msra.mxu0 0.0
      %1225 = vmatprep.subr.mxu0 0.0
      %1226 = vmatpush2.msra.mxu0 0.0
      %1227 = vmatprep.subr.mxu0 0.0
      %1228 = vmatpush2.msra.mxu0 0.0
      %1229 = vmatprep.subr.mxu0 0.0
      %1230 = vmatpush2.msra.mxu0 0.0
      %1231 = vmatprep.subr.mxu0 0.0
      %1232 = vmatpush2.msra.mxu0 0.0
      %1233 = vmatprep.subr.mxu0 0.0
      %1234 = vmatpush2.msra.mxu0 0.0
      %1235 = vmatprep.mubr.f32.mxu0 0.0
      %1236 = vmatmul.mubr.f32.gmra.mxu0 %v865
      %v1237 = vpop.f32.mrf.mxu0
      %v1238 = vadd.f32 %v1013, %v1237
      %v1239 = vpop.f32.mrf.mxu0
      %1240 = vmatprep.mubr.f32.mxu0 0.0
      %1241 = vmatmul.mubr.f32.gmra.mxu0 %v866
      %v1242 = vpop.f32.mrf.mxu0
      %v1243 = vadd.f32 %v1018, %v1242
      %v1244 = vpop.f32.mrf.mxu0
      %1245 = vmatprep.mubr.f32.mxu0 0.0
      %1246 = vmatmul.mubr.f32.gmra.mxu0 %v867
      %v1247 = vpop.f32.mrf.mxu0
      %v1248 = vadd.f32 %v1023, %v1247
      %v1249 = vpop.f32.mrf.mxu0
      %1250 = vmatprep.mubr.f32.mxu0 0.0
      %1251 = vmatmul.mubr.f32.gmra.mxu0 %v868
      %v1252 = vpop.f32.mrf.mxu0
      %v1253 = vadd.f32 %v1028, %v1252
      %v1254 = vpop.f32.mrf.mxu0
      %1255 = vmatprep.mubr.f32.mxu0 0.0
      %1256 = vmatmul.mubr.f32.gmra.mxu0 %v869
      %v1257 = vpop.f32.mrf.mxu0
      %v1258 = vadd.f32 %v1033, %v1257
      %v1259 = vpop.f32.mrf.mxu0
      %1260 = vmatprep.mubr.f32.mxu0 0.0
      %1261 = vmatmul.mubr.f32.gmra.mxu0 %v870
      %v1262 = vpop.f32.mrf.mxu0
      %v1263 = vadd.f32 %v1038, %v1262
      %v1264 = vpop.f32.mrf.mxu0
      %1265 = vmatprep.mubr.f32.mxu0 0.0
      %1266 = vmatmul.mubr.f32.gmra.mxu0 %v871
      %v1267 = vpop.f32.mrf.mxu0
      %v1268 = vadd.f32 %v1043, %v1267
      %v1269 = vpop.f32.mrf.mxu0
      %1270 = vmatprep.mubr.f32.mxu0 0.0
      %1271 = vmatmul.mubr.f32.gmra.mxu0 %v872
      %v1272 = vpop.f32.mrf.mxu0
      %v1273 = vadd.f32 %v1048, %v1272
      %v1274 = vpop.f32.mrf.mxu0
      %1275 = vmatprep.mubr.f32.mxu0 0.0
      %1276 = vmatmul.mubr.f32.gmra.mxu0 %v873
      %v1277 = vpop.f32.mrf.mxu0
      %v1278 = vadd.f32 %v1053, %v1277
      %v1279 = vpop.f32.mrf.mxu0
      %1280 = vmatprep.mubr.f32.mxu0 0.0
      %1281 = vmatmul.mubr.f32.gmra.mxu0 %v874
      %v1282 = vpop.f32.mrf.mxu0
      %v1283 = vadd.f32 %v1058, %v1282
      %v1284 = vpop.f32.mrf.mxu0
      %1285 = vmatprep.mubr.f32.mxu0 0.0
      %1286 = vmatmul.mubr.f32.gmra.mxu0 %v875
      %v1287 = vpop.f32.mrf.mxu0
      %v1288 = vadd.f32 %v1063, %v1287
      %v1289 = vpop.f32.mrf.mxu0
      %1290 = vmatprep.mubr.f32.mxu0 0.0
      %1291 = vmatmul.mubr.f32.gmra.mxu0 %v876
      %v1292 = vpop.f32.mrf.mxu0
      %v1293 = vadd.f32 %v1068, %v1292
      %v1294 = vpop.f32.mrf.mxu0
      %1295 = vmatprep.mubr.f32.mxu0 0.0
      %1296 = vmatmul.mubr.f32.gmra.mxu0 %v877
      %v1297 = vpop.f32.mrf.mxu0
      %v1298 = vadd.f32 %v1073, %v1297
      %v1299 = vpop.f32.mrf.mxu0
      %1300 = vmatprep.mubr.f32.mxu0 0.0
      %1301 = vmatmul.mubr.f32.gmra.mxu0 %v878
      %v1302 = vpop.f32.mrf.mxu0
      %v1303 = vadd.f32 %v1078, %v1302
      %v1304 = vpop.f32.mrf.mxu0
      %1305 = vmatprep.mubr.f32.mxu0 0.0
      %1306 = vmatmul.mubr.f32.gmra.mxu0 %v879
      %v1307 = vpop.f32.mrf.mxu0
      %v1308 = vadd.f32 %v1083, %v1307
      %v1309 = vpop.f32.mrf.mxu0
      %1310 = vmatprep.mubr.f32.mxu0 0.0
      %1311 = vmatmul.mubr.f32.gmra.mxu0 %v880
      %v1312 = vpop.f32.mrf.mxu0
      %v1313 = vadd.f32 %v1088, %v1312
      %v1314 = vpop.f32.mrf.mxu0
      %1315 = vmatprep.mubr.f32.mxu0 0.0
      %1316 = vmatmul.mubr.f32.gmra.mxu0 %v881
      %v1317 = vpop.f32.mrf.mxu0
      %v1318 = vadd.f32 %v1093, %v1317
      %v1319 = vpop.f32.mrf.mxu0
      %1320 = vmatprep.mubr.f32.mxu0 0.0
      %1321 = vmatmul.mubr.f32.gmra.mxu0 %v882
      %v1322 = vpop.f32.mrf.mxu0
      %v1323 = vadd.f32 %v1098, %v1322
      %v1324 = vpop.f32.mrf.mxu0
      %1325 = vmatprep.mubr.f32.mxu0 0.0
      %1326 = vmatmul.mubr.f32.gmra.mxu0 %v883
      %v1327 = vpop.f32.mrf.mxu0
      %v1328 = vadd.f32 %v1103, %v1327
      %v1329 = vpop.f32.mrf.mxu0
      %1330 = vmatprep.mubr.f32.mxu0 0.0
      %1331 = vmatmul.mubr.f32.gmra.mxu0 %v884
      %v1332 = vpop.f32.mrf.mxu0
      %v1333 = vadd.f32 %v1108, %v1332
      %v1334 = vpop.f32.mrf.mxu0
      %1335 = vmatprep.mubr.f32.mxu0 0.0
      %1336 = vmatmul.mubr.f32.gmra.mxu0 %v885
      %v1337 = vpop.f32.mrf.mxu0
      %v1338 = vadd.f32 %v1113, %v1337
      %v1339 = vpop.f32.mrf.mxu0
      %1340 = vmatprep.mubr.f32.mxu0 0.0
      %1341 = vmatmul.mubr.f32.gmra.mxu0 %v886
      %v1342 = vpop.f32.mrf.mxu0
      %v1343 = vadd.f32 %v1118, %v1342
      %v1344 = vpop.f32.mrf.mxu0
      %1345 = vmatprep.mubr.f32.mxu0 0.0
      %1346 = vmatmul.mubr.f32.gmra.mxu0 %v887
      %v1347 = vpop.f32.mrf.mxu0
      %v1348 = vadd.f32 %v1123, %v1347
      %v1349 = vpop.f32.mrf.mxu0
      %1350 = vmatprep.mubr.f32.mxu0 0.0
      %1351 = vmatmul.mubr.f32.gmra.mxu0 %v888
      %v1352 = vpop.f32.mrf.mxu0
      %v1353 = vadd.f32 %v1128, %v1352
      %v1354 = vpop.f32.mrf.mxu0
      %1355 = vmatprep.mubr.f32.mxu0 0.0
      %1356 = vmatmul.mubr.f32.gmra.mxu0 %v889
      %v1357 = vpop.f32.mrf.mxu0
      %v1358 = vadd.f32 %v1133, %v1357
      %v1359 = vpop.f32.mrf.mxu0
      %1360 = vmatprep.mubr.f32.mxu0 0.0
      %1361 = vmatmul.mubr.f32.gmra.mxu0 %v890
      %v1362 = vpop.f32.mrf.mxu0
      %v1363 = vadd.f32 %v1138, %v1362
      %v1364 = vpop.f32.mrf.mxu0
      %1365 = vmatprep.mubr.f32.mxu0 0.0
      %1366 = vmatmul.mubr.f32.gmra.mxu0 %v891
      %v1367 = vpop.f32.mrf.mxu0
      %v1368 = vadd.f32 %v1143, %v1367
      %v1369 = vpop.f32.mrf.mxu0
      %1370 = vmatprep.mubr.f32.mxu0 0.0
      %1371 = vmatmul.mubr.f32.gmra.mxu0 %v892
      %v1372 = vpop.f32.mrf.mxu0
      %v1373 = vadd.f32 %v1148, %v1372
      %v1374 = vpop.f32.mrf.mxu0
      %1375 = vmatprep.mubr.f32.mxu0 0.0
      %1376 = vmatmul.mubr.f32.gmra.mxu0 %v893
      %v1377 = vpop.f32.mrf.mxu0
      %v1378 = vadd.f32 %v1153, %v1377
      %v1379 = vpop.f32.mrf.mxu0
      %1380 = vmatprep.mubr.f32.mxu0 0.0
      %1381 = vmatmul.mubr.f32.gmra.mxu0 %v894
      %v1382 = vpop.f32.mrf.mxu0
      %v1383 = vadd.f32 %v1158, %v1382
      %v1384 = vpop.f32.mrf.mxu0
      %1385 = vmatprep.mubr.f32.mxu0 0.0
      %1386 = vmatmul.mubr.f32.gmra.mxu0 %v895
      %v1387 = vpop.f32.mrf.mxu0
      %v1388 = vadd.f32 %v1163, %v1387
      %v1389 = vpop.f32.mrf.mxu0
      %1390 = vmatprep.mubr.f32.mxu0 0.0
      %1391 = vmatmul.mubr.f32.gmra.mxu0 %v896
      %v1392 = vpop.f32.mrf.mxu0
      %v1393 = vadd.f32 %v1168, %v1392
      %v1394 = vpop.f32.mrf.mxu0
      %1395 = vdwg.mxu0
      %1396 = vmatprep.subr.mxu0 0.0
      %1397 = vmatpush1.msra.mxu0 %v828
      %1398 = vmatprep.subr.mxu0 0.0
      %1399 = vmatpush1.msra.mxu0 %v827
      %1400 = vmatprep.subr.mxu0 0.0
      %1401 = vmatpush1.msra.mxu0 %v826
      %1402 = vmatprep.subr.mxu0 0.0
      %1403 = vmatpush1.msra.mxu0 %v825
      %1404 = vmatprep.subr.mxu0 0.0
      %1405 = vmatpush1.msra.mxu0 %v824
      %1406 = vmatprep.subr.mxu0 0.0
      %1407 = vmatpush1.msra.mxu0 %v823
      %1408 = vmatprep.subr.mxu0 0.0
      %1409 = vmatpush1.msra.mxu0 %v822
      %1410 = vmatprep.subr.mxu0 0.0
      %1411 = vmatpush1.msra.mxu0 %v821
      %1412 = vmatprep.subr.mxu0 0.0
      %1413 = vmatpush1.msra.mxu0 %v820
      %1414 = vmatprep.subr.mxu0 0.0
      %1415 = vmatpush1.msra.mxu0 %v819
      %1416 = vmatprep.subr.mxu0 0.0
      %1417 = vmatpush1.msra.mxu0 %v818
      %1418 = vmatprep.subr.mxu0 0.0
      %1419 = vmatpush1.msra.mxu0 %v817
      %1420 = vmatprep.subr.mxu0 0.0
      %1421 = vmatpush1.msra.mxu0 %v816
      %1422 = vmatprep.subr.mxu0 0.0
      %1423 = vmatpush1.msra.mxu0 %v815
      %1424 = vmatprep.subr.mxu0 0.0
      %1425 = vmatpush1.msra.mxu0 %v814
      %1426 = vmatprep.subr.mxu0 0.0
      %1427 = vmatpush1.msra.mxu0 %v813
      %1428 = vmatprep.subr.mxu0 0.0
      %1429 = vmatpush2.msra.mxu0 %v844
      %1430 = vmatprep.subr.mxu0 0.0
      %1431 = vmatpush2.msra.mxu0 %v843
      %1432 = vmatprep.subr.mxu0 0.0
      %1433 = vmatpush2.msra.mxu0 %v842
      %1434 = vmatprep.subr.mxu0 0.0
      %1435 = vmatpush2.msra.mxu0 %v841
      %1436 = vmatprep.subr.mxu0 0.0
      %1437 = vmatpush2.msra.mxu0 %v840
      %1438 = vmatprep.subr.mxu0 0.0
      %1439 = vmatpush2.msra.mxu0 %v839
      %1440 = vmatprep.subr.mxu0 0.0
      %1441 = vmatpush2.msra.mxu0 %v838
      %1442 = vmatprep.subr.mxu0 0.0
      %1443 = vmatpush2.msra.mxu0 %v837
      %1444 = vmatprep.subr.mxu0 0.0
      %1445 = vmatpush2.msra.mxu0 %v836
      %1446 = vmatprep.subr.mxu0 0.0
      %1447 = vmatpush2.msra.mxu0 %v835
      %1448 = vmatprep.subr.mxu0 0.0
      %1449 = vmatpush2.msra.mxu0 %v834
      %1450 = vmatprep.subr.mxu0 0.0
      %1451 = vmatpush2.msra.mxu0 %v833
      %1452 = vmatprep.subr.mxu0 0.0
      %1453 = vmatpush2.msra.mxu0 %v832
      %1454 = vmatprep.subr.mxu0 0.0
      %1455 = vmatpush2.msra.mxu0 %v831
      %1456 = vmatprep.subr.mxu0 0.0
      %1457 = vmatpush2.msra.mxu0 %v830
      %1458 = vmatprep.subr.mxu0 0.0
      %1459 = vmatpush2.msra.mxu0 %v829
      %1460 = vmatprep.mubr.f32.mxu0 %v779
      %1461 = vmatmul.mubr.f32.gmra.mxu0 %v777
      %v1462 = vpop.f32.mrf.mxu0
      %v1463 = vadd.f32 %v1238, %v1462
      %v1464 = vpop.f32.mrf.mxu0
      %1465 = vmatprep.mubr.f32.mxu0 %v780
      %1466 = vmatmul.mubr.f32.gmra.mxu0 %v778
      %v1467 = vpop.f32.mrf.mxu0
      %v1468 = vadd.f32 %v1243, %v1467
      %v1469 = vpop.f32.mrf.mxu0
      %1470 = vmatprep.mubr.f32.mxu0 %v781
      %1471 = vmatmul.mubr.f32.gmra.mxu0 %v779
      %v1472 = vpop.f32.mrf.mxu0
      %v1473 = vadd.f32 %v1248, %v1472
      %v1474 = vpop.f32.mrf.mxu0
      %1475 = vmatprep.mubr.f32.mxu0 %v782
      %1476 = vmatmul.mubr.f32.gmra.mxu0 %v780
      %v1477 = vpop.f32.mrf.mxu0
      %v1478 = vadd.f32 %v1253, %v1477
      %v1479 = vpop.f32.mrf.mxu0
      %1480 = vmatprep.mubr.f32.mxu0 %v783
      %1481 = vmatmul.mubr.f32.gmra.mxu0 %v781
      %v1482 = vpop.f32.mrf.mxu0
      %v1483 = vadd.f32 %v1258, %v1482
      %v1484 = vpop.f32.mrf.mxu0
      %1485 = vmatprep.mubr.f32.mxu0 %v784
      %1486 = vmatmul.mubr.f32.gmra.mxu0 %v782
      %v1487 = vpop.f32.mrf.mxu0
      %v1488 = vadd.f32 %v1263, %v1487
      %v1489 = vpop.f32.mrf.mxu0
      %1490 = vmatprep.mubr.f32.mxu0 %v785
      %1491 = vmatmul.mubr.f32.gmra.mxu0 %v783
      %v1492 = vpop.f32.mrf.mxu0
      %v1493 = vadd.f32 %v1268, %v1492
      %v1494 = vpop.f32.mrf.mxu0
      %1495 = vmatprep.mubr.f32.mxu0 %v786
      %1496 = vmatmul.mubr.f32.gmra.mxu0 %v784
      %v1497 = vpop.f32.mrf.mxu0
      %v1498 = vadd.f32 %v1273, %v1497
      %v1499 = vpop.f32.mrf.mxu0
      %1500 = vmatprep.mubr.f32.mxu0 %v787
      %1501 = vmatmul.mubr.f32.gmra.mxu0 %v785
      %v1502 = vpop.f32.mrf.mxu0
      %v1503 = vadd.f32 %v1278, %v1502
      %v1504 = vpop.f32.mrf.mxu0
      %1505 = vmatprep.mubr.f32.mxu0 %v788
      %1506 = vmatmul.mubr.f32.gmra.mxu0 %v786
      %v1507 = vpop.f32.mrf.mxu0
      %v1508 = vadd.f32 %v1283, %v1507
      %v1509 = vpop.f32.mrf.mxu0
      %1510 = vmatprep.mubr.f32.mxu0 %v789
      %1511 = vmatmul.mubr.f32.gmra.mxu0 %v787
      %v1512 = vpop.f32.mrf.mxu0
      %v1513 = vadd.f32 %v1288, %v1512
      %v1514 = vpop.f32.mrf.mxu0
      %1515 = vmatprep.mubr.f32.mxu0 %v790
      %1516 = vmatmul.mubr.f32.gmra.mxu0 %v788
      %v1517 = vpop.f32.mrf.mxu0
      %v1518 = vadd.f32 %v1293, %v1517
      %v1519 = vpop.f32.mrf.mxu0
      %1520 = vmatprep.mubr.f32.mxu0 %v791
      %1521 = vmatmul.mubr.f32.gmra.mxu0 %v789
      %v1522 = vpop.f32.mrf.mxu0
      %v1523 = vadd.f32 %v1298, %v1522
      %v1524 = vpop.f32.mrf.mxu0
      %1525 = vmatprep.mubr.f32.mxu0 %v792
      %1526 = vmatmul.mubr.f32.gmra.mxu0 %v790
      %v1527 = vpop.f32.mrf.mxu0
      %v1528 = vadd.f32 %v1303, %v1527
      %v1529 = vpop.f32.mrf.mxu0
      %1530 = vmatprep.mubr.f32.mxu0 %v793
      %1531 = vmatmul.mubr.f32.gmra.mxu0 %v791
      %v1532 = vpop.f32.mrf.mxu0
      %v1533 = vadd.f32 %v1308, %v1532
      %v1534 = vpop.f32.mrf.mxu0
      %1535 = vmatprep.mubr.f32.mxu0 %v794
      %1536 = vmatmul.mubr.f32.gmra.mxu0 %v792
      %v1537 = vpop.f32.mrf.mxu0
      %v1538 = vadd.f32 %v1313, %v1537
      %v1539 = vpop.f32.mrf.mxu0
      %1540 = vmatprep.mubr.f32.mxu0 %v795
      %1541 = vmatmul.mubr.f32.gmra.mxu0 %v793
      %v1542 = vpop.f32.mrf.mxu0
      %v1543 = vadd.f32 %v1318, %v1542
      %v1544 = vpop.f32.mrf.mxu0
      %1545 = vmatprep.mubr.f32.mxu0 %v796
      %1546 = vmatmul.mubr.f32.gmra.mxu0 %v794
      %v1547 = vpop.f32.mrf.mxu0
      %v1548 = vadd.f32 %v1323, %v1547
      %v1549 = vpop.f32.mrf.mxu0
      %1550 = vmatprep.mubr.f32.mxu0 %v797
      %1551 = vmatmul.mubr.f32.gmra.mxu0 %v795
      %v1552 = vpop.f32.mrf.mxu0
      %v1553 = vadd.f32 %v1328, %v1552
      %v1554 = vpop.f32.mrf.mxu0
      %1555 = vmatprep.mubr.f32.mxu0 %v798
      %1556 = vmatmul.mubr.f32.gmra.mxu0 %v796
      %v1557 = vpop.f32.mrf.mxu0
      %v1558 = vadd.f32 %v1333, %v1557
      %v1559 = vpop.f32.mrf.mxu0
      %1560 = vmatprep.mubr.f32.mxu0 %v799
      %1561 = vmatmul.mubr.f32.gmra.mxu0 %v797
      %v1562 = vpop.f32.mrf.mxu0
      %v1563 = vadd.f32 %v1338, %v1562
      %v1564 = vpop.f32.mrf.mxu0
      %1565 = vmatprep.mubr.f32.mxu0 %v800
      %1566 = vmatmul.mubr.f32.gmra.mxu0 %v798
      %v1567 = vpop.f32.mrf.mxu0
      %v1568 = vadd.f32 %v1343, %v1567
      %v1569 = vpop.f32.mrf.mxu0
      %1570 = vmatprep.mubr.f32.mxu0 %v801
      %1571 = vmatmul.mubr.f32.gmra.mxu0 %v799
      %v1572 = vpop.f32.mrf.mxu0
      %v1573 = vadd.f32 %v1348, %v1572
      %v1574 = vpop.f32.mrf.mxu0
      %1575 = vmatprep.mubr.f32.mxu0 %v802
      %1576 = vmatmul.mubr.f32.gmra.mxu0 %v800
      %v1577 = vpop.f32.mrf.mxu0
      %v1578 = vadd.f32 %v1353, %v1577
      %v1579 = vpop.f32.mrf.mxu0
      %1580 = vmatprep.mubr.f32.mxu0 %v803
      %1581 = vmatmul.mubr.f32.gmra.mxu0 %v801
      %v1582 = vpop.f32.mrf.mxu0
      %v1583 = vadd.f32 %v1358, %v1582
      %v1584 = vpop.f32.mrf.mxu0
      %1585 = vmatprep.mubr.f32.mxu0 %v804
      %1586 = vmatmul.mubr.f32.gmra.mxu0 %v802
      %v1587 = vpop.f32.mrf.mxu0
      %v1588 = vadd.f32 %v1363, %v1587
      %v1589 = vpop.f32.mrf.mxu0
      %1590 = vmatprep.mubr.f32.mxu0 %v805
      %1591 = vmatmul.mubr.f32.gmra.mxu0 %v803
      %v1592 = vpop.f32.mrf.mxu0
      %v1593 = vadd.f32 %v1368, %v1592
      %v1594 = vpop.f32.mrf.mxu0
      %1595 = vmatprep.mubr.f32.mxu0 %v806
      %1596 = vmatmul.mubr.f32.gmra.mxu0 %v804
      %v1597 = vpop.f32.mrf.mxu0
      %v1598 = vadd.f32 %v1373, %v1597
      %v1599 = vpop.f32.mrf.mxu0
      %1600 = vmatprep.mubr.f32.mxu0 %v807
      %1601 = vmatmul.mubr.f32.gmra.mxu0 %v805
      %v1602 = vpop.f32.mrf.mxu0
      %v1603 = vadd.f32 %v1378, %v1602
      %v1604 = vpop.f32.mrf.mxu0
      %1605 = vmatprep.mubr.f32.mxu0 %v808
      %1606 = vmatmul.mubr.f32.gmra.mxu0 %v806
      %v1607 = vpop.f32.mrf.mxu0
      %v1608 = vadd.f32 %v1383, %v1607
      %v1609 = vpop.f32.mrf.mxu0
      %1610 = vmatprep.mubr.f32.mxu0 %v809
      %1611 = vmatmul.mubr.f32.gmra.mxu0 %v807
      %v1612 = vpop.f32.mrf.mxu0
      %v1613 = vadd.f32 %v1388, %v1612
      %v1614 = vpop.f32.mrf.mxu0
      %1615 = vmatprep.mubr.f32.mxu0 %v810
      %1616 = vmatmul.mubr.f32.gmra.mxu0 %v808
      %v1617 = vpop.f32.mrf.mxu0
      %v1618 = vadd.f32 %v1393, %v1617
      %v1619 = vpop.f32.mrf.mxu0
      %1620 = vdwg.mxu0
      %1621 = vmatprep.subr.mxu0 0.0
      %1622 = vmatpush1.msra.mxu0 %v860
      %1623 = vmatprep.subr.mxu0 0.0
      %1624 = vmatpush1.msra.mxu0 %v859
      %1625 = vmatprep.subr.mxu0 0.0
      %1626 = vmatpush1.msra.mxu0 %v858
      %1627 = vmatprep.subr.mxu0 0.0
      %1628 = vmatpush1.msra.mxu0 %v857
      %1629 = vmatprep.subr.mxu0 0.0
      %1630 = vmatpush1.msra.mxu0 %v856
      %1631 = vmatprep.subr.mxu0 0.0
      %1632 = vmatpush1.msra.mxu0 %v855
      %1633 = vmatprep.subr.mxu0 0.0
      %1634 = vmatpush1.msra.mxu0 %v854
      %1635 = vmatprep.subr.mxu0 0.0
      %1636 = vmatpush1.msra.mxu0 %v853
      %1637 = vmatprep.subr.mxu0 0.0
      %1638 = vmatpush1.msra.mxu0 %v852
      %1639 = vmatprep.subr.mxu0 0.0
      %1640 = vmatpush1.msra.mxu0 %v851
      %1641 = vmatprep.subr.mxu0 0.0
      %1642 = vmatpush1.msra.mxu0 %v850
      %1643 = vmatprep.subr.mxu0 0.0
      %1644 = vmatpush1.msra.mxu0 %v849
      %1645 = vmatprep.subr.mxu0 0.0
      %1646 = vmatpush1.msra.mxu0 %v848
      %1647 = vmatprep.subr.mxu0 0.0
      %1648 = vmatpush1.msra.mxu0 %v847
      %1649 = vmatprep.subr.mxu0 0.0
      %1650 = vmatpush1.msra.mxu0 %v846
      %1651 = vmatprep.subr.mxu0 0.0
      %1652 = vmatpush1.msra.mxu0 %v845
      %1653 = vmatprep.subr.mxu0 0.0
      %1654 = vmatpush2.msra.mxu0 0.0
      %1655 = vmatprep.subr.mxu0 0.0
      %1656 = vmatpush2.msra.mxu0 0.0
      %1657 = vmatprep.subr.mxu0 0.0
      %1658 = vmatpush2.msra.mxu0 0.0
      %1659 = vmatprep.subr.mxu0 0.0
      %1660 = vmatpush2.msra.mxu0 0.0
      %1661 = vmatprep.subr.mxu0 0.0
      %1662 = vmatpush2.msra.mxu0 0.0
      %1663 = vmatprep.subr.mxu0 0.0
      %1664 = vmatpush2.msra.mxu0 0.0
      %1665 = vmatprep.subr.mxu0 0.0
      %1666 = vmatpush2.msra.mxu0 0.0
      %1667 = vmatprep.subr.mxu0 0.0
      %1668 = vmatpush2.msra.mxu0 0.0
      %1669 = vmatprep.subr.mxu0 0.0
      %1670 = vmatpush2.msra.mxu0 0.0
      %1671 = vmatprep.subr.mxu0 0.0
      %1672 = vmatpush2.msra.mxu0 0.0
      %1673 = vmatprep.subr.mxu0 0.0
      %1674 = vmatpush2.msra.mxu0 0.0
      %1675 = vmatprep.subr.mxu0 0.0
      %1676 = vmatpush2.msra.mxu0 0.0
      %1677 = vmatprep.subr.mxu0 0.0
      %1678 = vmatpush2.msra.mxu0 0.0
      %1679 = vmatprep.subr.mxu0 0.0
      %1680 = vmatpush2.msra.mxu0 0.0
      %1681 = vmatprep.subr.mxu0 0.0
      %1682 = vmatpush2.msra.mxu0 0.0
      %1683 = vmatprep.subr.mxu0 0.0
      %1684 = vmatpush2.msra.mxu0 0.0
      %1685 = vmatprep.mubr.f32.mxu0 0.0
      %1686 = vmatmul.mubr.f32.gmra.mxu0 %v781
      %v1687 = vpop.f32.mrf.mxu0
      %v1688 = vadd.f32 %v1463, %v1687
      %v1689 = vpop.f32.mrf.mxu0
      %1690 = vmatprep.mubr.f32.mxu0 0.0
      %1691 = vmatmul.mubr.f32.gmra.mxu0 %v782
      %v1692 = vpop.f32.mrf.mxu0
      %v1693 = vadd.f32 %v1468, %v1692
      %v1694 = vpop.f32.mrf.mxu0
      %1695 = vmatprep.mubr.f32.mxu0 0.0
      %1696 = vmatmul.mubr.f32.gmra.mxu0 %v783
      %v1697 = vpop.f32.mrf.mxu0
      %v1698 = vadd.f32 %v1473, %v1697
      %v1699 = vpop.f32.mrf.mxu0
      %1700 = vmatprep.mubr.f32.mxu0 0.0
      %1701 = vmatmul.mubr.f32.gmra.mxu0 %v784
      %v1702 = vpop.f32.mrf.mxu0
      %v1703 = vadd.f32 %v1478, %v1702
      %v1704 = vpop.f32.mrf.mxu0
      %1705 = vmatprep.mubr.f32.mxu0 0.0
      %1706 = vmatmul.mubr.f32.gmra.mxu0 %v785
      %v1707 = vpop.f32.mrf.mxu0
      %v1708 = vadd.f32 %v1483, %v1707
      %v1709 = vpop.f32.mrf.mxu0
      %1710 = vmatprep.mubr.f32.mxu0 0.0
      %1711 = vmatmul.mubr.f32.gmra.mxu0 %v786
      %v1712 = vpop.f32.mrf.mxu0
      %v1713 = vadd.f32 %v1488, %v1712
      %v1714 = vpop.f32.mrf.mxu0
      %1715 = vmatprep.mubr.f32.mxu0 0.0
      %1716 = vmatmul.mubr.f32.gmra.mxu0 %v787
      %v1717 = vpop.f32.mrf.mxu0
      %v1718 = vadd.f32 %v1493, %v1717
      %v1719 = vpop.f32.mrf.mxu0
      %1720 = vmatprep.mubr.f32.mxu0 0.0
      %1721 = vmatmul.mubr.f32.gmra.mxu0 %v788
      %v1722 = vpop.f32.mrf.mxu0
      %v1723 = vadd.f32 %v1498, %v1722
      %v1724 = vpop.f32.mrf.mxu0
      %1725 = vmatprep.mubr.f32.mxu0 0.0
      %1726 = vmatmul.mubr.f32.gmra.mxu0 %v789
      %v1727 = vpop.f32.mrf.mxu0
      %v1728 = vadd.f32 %v1503, %v1727
      %v1729 = vpop.f32.mrf.mxu0
      %1730 = vmatprep.mubr.f32.mxu0 0.0
      %1731 = vmatmul.mubr.f32.gmra.mxu0 %v790
      %v1732 = vpop.f32.mrf.mxu0
      %v1733 = vadd.f32 %v1508, %v1732
      %v1734 = vpop.f32.mrf.mxu0
      %1735 = vmatprep.mubr.f32.mxu0 0.0
      %1736 = vmatmul.mubr.f32.gmra.mxu0 %v791
      %v1737 = vpop.f32.mrf.mxu0
      %v1738 = vadd.f32 %v1513, %v1737
      %v1739 = vpop.f32.mrf.mxu0
      %1740 = vmatprep.mubr.f32.mxu0 0.0
      %1741 = vmatmul.mubr.f32.gmra.mxu0 %v792
      %v1742 = vpop.f32.mrf.mxu0
      %v1743 = vadd.f32 %v1518, %v1742
      %v1744 = vpop.f32.mrf.mxu0
      %1745 = vmatprep.mubr.f32.mxu0 0.0
      %1746 = vmatmul.mubr.f32.gmra.mxu0 %v793
      %v1747 = vpop.f32.mrf.mxu0
      %v1748 = vadd.f32 %v1523, %v1747
      %v1749 = vpop.f32.mrf.mxu0
      %1750 = vmatprep.mubr.f32.mxu0 0.0
      %1751 = vmatmul.mubr.f32.gmra.mxu0 %v794
      %v1752 = vpop.f32.mrf.mxu0
      %v1753 = vadd.f32 %v1528, %v1752
      %v1754 = vpop.f32.mrf.mxu0
      %1755 = vmatprep.mubr.f32.mxu0 0.0
      %1756 = vmatmul.mubr.f32.gmra.mxu0 %v795
      %v1757 = vpop.f32.mrf.mxu0
      %v1758 = vadd.f32 %v1533, %v1757
      %v1759 = vpop.f32.mrf.mxu0
      %1760 = vmatprep.mubr.f32.mxu0 0.0
      %1761 = vmatmul.mubr.f32.gmra.mxu0 %v796
      %v1762 = vpop.f32.mrf.mxu0
      %v1763 = vadd.f32 %v1538, %v1762
      %v1764 = vpop.f32.mrf.mxu0
      %1765 = vmatprep.mubr.f32.mxu0 0.0
      %1766 = vmatmul.mubr.f32.gmra.mxu0 %v797
      %v1767 = vpop.f32.mrf.mxu0
      %v1768 = vadd.f32 %v1543, %v1767
      %v1769 = vpop.f32.mrf.mxu0
      %1770 = vmatprep.mubr.f32.mxu0 0.0
      %1771 = vmatmul.mubr.f32.gmra.mxu0 %v798
      %v1772 = vpop.f32.mrf.mxu0
      %v1773 = vadd.f32 %v1548, %v1772
      %v1774 = vpop.f32.mrf.mxu0
      %1775 = vmatprep.mubr.f32.mxu0 0.0
      %1776 = vmatmul.mubr.f32.gmra.mxu0 %v799
      %v1777 = vpop.f32.mrf.mxu0
      %v1778 = vadd.f32 %v1553, %v1777
      %v1779 = vpop.f32.mrf.mxu0
      %1780 = vmatprep.mubr.f32.mxu0 0.0
      %1781 = vmatmul.mubr.f32.gmra.mxu0 %v800
      %v1782 = vpop.f32.mrf.mxu0
      %v1783 = vadd.f32 %v1558, %v1782
      %v1784 = vpop.f32.mrf.mxu0
      %1785 = vmatprep.mubr.f32.mxu0 0.0
      %1786 = vmatmul.mubr.f32.gmra.mxu0 %v801
      %v1787 = vpop.f32.mrf.mxu0
      %v1788 = vadd.f32 %v1563, %v1787
      %v1789 = vpop.f32.mrf.mxu0
      %1790 = vmatprep.mubr.f32.mxu0 0.0
      %1791 = vmatmul.mubr.f32.gmra.mxu0 %v802
      %v1792 = vpop.f32.mrf.mxu0
      %v1793 = vadd.f32 %v1568, %v1792
      %v1794 = vpop.f32.mrf.mxu0
      %1795 = vmatprep.mubr.f32.mxu0 0.0
      %1796 = vmatmul.mubr.f32.gmra.mxu0 %v803
      %v1797 = vpop.f32.mrf.mxu0
      %v1798 = vadd.f32 %v1573, %v1797
      %v1799 = vpop.f32.mrf.mxu0
      %1800 = vmatprep.mubr.f32.mxu0 0.0
      %1801 = vmatmul.mubr.f32.gmra.mxu0 %v804
      %v1802 = vpop.f32.mrf.mxu0
      %v1803 = vadd.f32 %v1578, %v1802
      %v1804 = vpop.f32.mrf.mxu0
      %1805 = vmatprep.mubr.f32.mxu0 0.0
      %1806 = vmatmul.mubr.f32.gmra.mxu0 %v805
      %v1807 = vpop.f32.mrf.mxu0
      %v1808 = vadd.f32 %v1583, %v1807
      %v1809 = vpop.f32.mrf.mxu0
      %1810 = vmatprep.mubr.f32.mxu0 0.0
      %1811 = vmatmul.mubr.f32.gmra.mxu0 %v806
      %v1812 = vpop.f32.mrf.mxu0
      %v1813 = vadd.f32 %v1588, %v1812
      %v1814 = vpop.f32.mrf.mxu0
      %1815 = vmatprep.mubr.f32.mxu0 0.0
      %1816 = vmatmul.mubr.f32.gmra.mxu0 %v807
      %v1817 = vpop.f32.mrf.mxu0
      %v1818 = vadd.f32 %v1593, %v1817
      %v1819 = vpop.f32.mrf.mxu0
      %1820 = vmatprep.mubr.f32.mxu0 0.0
      %1821 = vmatmul.mubr.f32.gmra.mxu0 %v808
      %v1822 = vpop.f32.mrf.mxu0
      %v1823 = vadd.f32 %v1598, %v1822
      %v1824 = vpop.f32.mrf.mxu0
      %1825 = vmatprep.mubr.f32.mxu0 0.0
      %1826 = vmatmul.mubr.f32.gmra.mxu0 %v809
      %v1827 = vpop.f32.mrf.mxu0
      %v1828 = vadd.f32 %v1603, %v1827
      %v1829 = vpop.f32.mrf.mxu0
      %1830 = vmatprep.mubr.f32.mxu0 0.0
      %1831 = vmatmul.mubr.f32.gmra.mxu0 %v810
      %v1832 = vpop.f32.mrf.mxu0
      %v1833 = vadd.f32 %v1608, %v1832
      %v1834 = vpop.f32.mrf.mxu0
      %1835 = vmatprep.mubr.f32.mxu0 0.0
      %1836 = vmatmul.mubr.f32.gmra.mxu0 %v811
      %v1837 = vpop.f32.mrf.mxu0
      %v1838 = vadd.f32 %v1613, %v1837
      %v1839 = vpop.f32.mrf.mxu0
      %1840 = vmatprep.mubr.f32.mxu0 0.0
      %1841 = vmatmul.mubr.f32.gmra.mxu0 %v812
      %v1842 = vpop.f32.mrf.mxu0
      %v1843 = vadd.f32 %v1618, %v1842
      %v1844 = vpop.f32.mrf.mxu0
      %1845 = vdwg.mxu0
      %v1846 = vld [vmem:[#allocation2 + $0x9] sm:$0xff]
      %v1847 = vld [vmem:[#allocation2 + $0x11] sm:$0xff]
      %v1848 = vld [vmem:[#allocation2 + $0x29] sm:$0xff]
      %v1849 = vld [vmem:[#allocation2 + $0x31] sm:$0xff]
      %v1850 = vld [vmem:[#allocation2 + $0x49] sm:$0xff]
      %v1851 = vld [vmem:[#allocation2 + $0x51] sm:$0xff]
      %v1852 = vld [vmem:[#allocation2 + $0x69] sm:$0xff]
      %v1853 = vld [vmem:[#allocation2 + $0x71] sm:$0xff]
      %v1854 = vld [vmem:[#allocation2 + $0x89] sm:$0xff]
      %v1855 = vld [vmem:[#allocation2 + $0x91] sm:$0xff]
      %v1856 = vld [vmem:[#allocation2 + $0xa9] sm:$0xff]
      %v1857 = vld [vmem:[#allocation2 + $0xb1] sm:$0xff]
      %v1858 = vld [vmem:[#allocation2 + $0xc9] sm:$0xff]
      %v1859 = vld [vmem:[#allocation2 + $0xd1] sm:$0xff]
      %v1860 = vld [vmem:[#allocation2 + $0xe9] sm:$0xff]
      %v1861 = vld [vmem:[#allocation2 + $0xf1] sm:$0xff]
      %v1862 = vld [vmem:[#allocation2 + $0x109] sm:$0xff]
      %v1863 = vld [vmem:[#allocation2 + $0x111] sm:$0xff]
      %v1864 = vld [vmem:[#allocation2 + $0x129] sm:$0xff]
      %v1865 = vld [vmem:[#allocation2 + $0x131] sm:$0xff]
      %v1866 = vld [vmem:[#allocation2 + $0x149] sm:$0xff]
      %v1867 = vld [vmem:[#allocation2 + $0x151] sm:$0xff]
      %v1868 = vld [vmem:[#allocation2 + $0x169] sm:$0xff]
      %v1869 = vld [vmem:[#allocation2 + $0x171] sm:$0xff]
      %v1870 = vld [vmem:[#allocation2 + $0x189] sm:$0xff]
      %v1871 = vld [vmem:[#allocation2 + $0x191] sm:$0xff]
      %v1872 = vld [vmem:[#allocation2 + $0x1a9] sm:$0xff]
      %v1873 = vld [vmem:[#allocation2 + $0x1b1] sm:$0xff]
      %v1874 = vld [vmem:[#allocation2 + $0x1c9] sm:$0xff]
      %v1875 = vld [vmem:[#allocation2 + $0x1d1] sm:$0xff]
      %v1876 = vld [vmem:[#allocation2 + $0x1e9] sm:$0xff]
      %v1877 = vld [vmem:[#allocation2 + $0x1f1] sm:$0xff]
      %v1878 = vld [vmem:[#allocation2 + $0x209] sm:$0xff]
      %v1879 = vld [vmem:[#allocation2 + $0x211] sm:$0xff]
      %v1880 = vld [vmem:[#allocation2 + $0x229] sm:$0xff]
      %v1881 = vld [vmem:[#allocation2 + $0x231] sm:$0xff]
      %vm1882 = vcmp.eq.s32.totalorder %v769, 15
      %vm1883 = vcmp.eq.s32.totalorder %v770, 15
      %v1884 = vsel %vm1882, 1, 0
      %v1885 = vsel %vm1883, 1, 0
      %vm1886 = vcmp.eq.s32.totalorder %v1884, 1
      %vm1887 = vcmp.eq.s32.totalorder %v1885, 1
      %v1888 = vsel %vm1886, 0.0, %v1846
      %v1889 = vsel %vm1887, 0.0, %v1847
      %v1890 = vsel %vm1886, 0.0, %v1848
      %v1891 = vsel %vm1887, 0.0, %v1849
      %v1892 = vsel %vm1886, 0.0, %v1850
      %v1893 = vsel %vm1887, 0.0, %v1851
      %v1894 = vsel %vm1886, 0.0, %v1852
      %v1895 = vsel %vm1887, 0.0, %v1853
      %v1896 = vsel %vm1886, 0.0, %v1854
      %v1897 = vsel %vm1887, 0.0, %v1855
      %v1898 = vsel %vm1886, 0.0, %v1856
      %v1899 = vsel %vm1887, 0.0, %v1857
      %v1900 = vsel %vm1886, 0.0, %v1858
      %v1901 = vsel %vm1887, 0.0, %v1859
      %v1902 = vsel %vm1886, 0.0, %v1860
      %v1903 = vsel %vm1887, 0.0, %v1861
      %v1904 = vsel %vm1886, 0.0, %v1862
      %v1905 = vsel %vm1887, 0.0, %v1863
      %v1906 = vsel %vm1886, 0.0, %v1864
      %v1907 = vsel %vm1887, 0.0, %v1865
      %v1908 = vsel %vm1886, 0.0, %v1866
      %v1909 = vsel %vm1887, 0.0, %v1867
      %v1910 = vsel %vm1886, 0.0, %v1868
      %v1911 = vsel %vm1887, 0.0, %v1869
      %v1912 = vsel %vm1886, 0.0, %v1870
      %v1913 = vsel %vm1887, 0.0, %v1871
      %v1914 = vsel %vm1886, 0.0, %v1872
      %v1915 = vsel %vm1887, 0.0, %v1873
      %v1916 = vsel %vm1886, 0.0, %v1874
      %v1917 = vsel %vm1887, 0.0, %v1875
      %v1918 = vsel %vm1886, 0.0, %v1876
      %v1919 = vsel %vm1887, 0.0, %v1877
      %v1920 = vsel %vm1886, 0.0, %v1878
      %v1921 = vsel %vm1887, 0.0, %v1879
      %v1922 = vsel %vm1886, 0.0, %v1880
      %v1923 = vsel %vm1887, 0.0, %v1881
      %s1924 = scalar_lea.vmem %s5, 768
      %v1925 = vld [vmem:[%s1924] sm:$0xff]
      %v1926 = vld [vmem:[%s1924 + $0x8] sm:$0xff]
      %v1927 = vld [vmem:[%s1924 + $0x10] sm:$0xff]
      %v1928 = vld [vmem:[%s1924 + $0x18] sm:$0xff]
      %v1929 = vld [vmem:[%s1924 + $0x20] sm:$0xff]
      %v1930 = vld [vmem:[%s1924 + $0x28] sm:$0xff]
      %v1931 = vld [vmem:[%s1924 + $0x30] sm:$0xff]
      %v1932 = vld [vmem:[%s1924 + $0x38] sm:$0xff]
      %v1933 = vld [vmem:[%s1924 + $0x40] sm:$0xff]
      %v1934 = vld [vmem:[%s1924 + $0x48] sm:$0xff]
      %v1935 = vld [vmem:[%s1924 + $0x50] sm:$0xff]
      %v1936 = vld [vmem:[%s1924 + $0x58] sm:$0xff]
      %v1937 = vld [vmem:[%s1924 + $0x60] sm:$0xff]
      %v1938 = vld [vmem:[%s1924 + $0x68] sm:$0xff]
      %v1939 = vld [vmem:[%s1924 + $0x70] sm:$0xff]
      %v1940 = vld [vmem:[%s1924 + $0x78] sm:$0xff]
      %v1941 = vld [vmem:[%s1924 + $0x80] sm:$0xff]
      %v1942 = vld [vmem:[%s1924 + $0x88] sm:$0xff]
      %v1943 = vld [vmem:[%s1924 + $0x90] sm:$0xff]
      %v1944 = vld [vmem:[%s1924 + $0x98] sm:$0xff]
      %v1945 = vld [vmem:[%s1924 + $0xa0] sm:$0xff]
      %v1946 = vld [vmem:[%s1924 + $0xa8] sm:$0xff]
      %v1947 = vld [vmem:[%s1924 + $0xb0] sm:$0xff]
      %v1948 = vld [vmem:[%s1924 + $0xb8] sm:$0xff]
      %v1949 = vld [vmem:[%s1924 + $0xc0] sm:$0xff]
      %v1950 = vld [vmem:[%s1924 + $0xc8] sm:$0xff]
      %v1951 = vld [vmem:[%s1924 + $0xd0] sm:$0xff]
      %v1952 = vld [vmem:[%s1924 + $0xd8] sm:$0xff]
      %v1953 = vld [vmem:[%s1924 + $0xe0] sm:$0xff]
      %v1954 = vld [vmem:[%s1924 + $0xe8] sm:$0xff]
      %v1955 = vld [vmem:[%s1924 + $0xf0] sm:$0xff]
      %v1956 = vld [vmem:[%s1924 + $0xf8] sm:$0xff]
      %v1957 = vld [vmem:[%s1924 + $0x100] sm:$0xff]
      %v1958 = vld [vmem:[%s1924 + $0x108] sm:$0xff]
      %v1959 = vld [vmem:[%s1924 + $0x110] sm:$0xff]
      %v1960 = vld [vmem:[%s1924 + $0x118] sm:$0xff]
      %v1961 = vld [vmem:[%s1924 + $0x120] sm:$0xff]
      %v1962 = vld [vmem:[%s1924 + $0x128] sm:$0xff]
      %v1963 = vld [vmem:[%s1924 + $0x130] sm:$0xff]
      %v1964 = vld [vmem:[%s1924 + $0x138] sm:$0xff]
      %v1965 = vld [vmem:[%s1924 + $0x140] sm:$0xff]
      %v1966 = vld [vmem:[%s1924 + $0x148] sm:$0xff]
      %v1967 = vld [vmem:[%s1924 + $0x150] sm:$0xff]
      %v1968 = vld [vmem:[%s1924 + $0x158] sm:$0xff]
      %v1969 = vld [vmem:[%s1924 + $0x160] sm:$0xff]
      %v1970 = vld [vmem:[%s1924 + $0x168] sm:$0xff]
      %v1971 = vld [vmem:[%s1924 + $0x170] sm:$0xff]
      %v1972 = vld [vmem:[%s1924 + $0x178] sm:$0xff]
      %1973 = vmatprep.subr.mxu0 0.0
      %1974 = vmatpush1.msra.mxu0 %v1940
      %1975 = vmatprep.subr.mxu0 0.0
      %1976 = vmatpush1.msra.mxu0 %v1939
      %1977 = vmatprep.subr.mxu0 0.0
      %1978 = vmatpush1.msra.mxu0 %v1938
      %1979 = vmatprep.subr.mxu0 0.0
      %1980 = vmatpush1.msra.mxu0 %v1937
      %1981 = vmatprep.subr.mxu0 0.0
      %1982 = vmatpush1.msra.mxu0 %v1936
      %1983 = vmatprep.subr.mxu0 0.0
      %1984 = vmatpush1.msra.mxu0 %v1935
      %1985 = vmatprep.subr.mxu0 0.0
      %1986 = vmatpush1.msra.mxu0 %v1934
      %1987 = vmatprep.subr.mxu0 0.0
      %1988 = vmatpush1.msra.mxu0 %v1933
      %1989 = vmatprep.subr.mxu0 0.0
      %1990 = vmatpush1.msra.mxu0 %v1932
      %1991 = vmatprep.subr.mxu0 0.0
      %1992 = vmatpush1.msra.mxu0 %v1931
      %1993 = vmatprep.subr.mxu0 0.0
      %1994 = vmatpush1.msra.mxu0 %v1930
      %1995 = vmatprep.subr.mxu0 0.0
      %1996 = vmatpush1.msra.mxu0 %v1929
      %1997 = vmatprep.subr.mxu0 0.0
      %1998 = vmatpush1.msra.mxu0 %v1928
      %1999 = vmatprep.subr.mxu0 0.0
      %2000 = vmatpush1.msra.mxu0 %v1927
      %2001 = vmatprep.subr.mxu0 0.0
      %2002 = vmatpush1.msra.mxu0 %v1926
      %2003 = vmatprep.subr.mxu0 0.0
      %2004 = vmatpush1.msra.mxu0 %v1925
      %2005 = vmatprep.subr.mxu0 0.0
      %2006 = vmatpush2.msra.mxu0 %v1956
      %2007 = vmatprep.subr.mxu0 0.0
      %2008 = vmatpush2.msra.mxu0 %v1955
      %2009 = vmatprep.subr.mxu0 0.0
      %2010 = vmatpush2.msra.mxu0 %v1954
      %2011 = vmatprep.subr.mxu0 0.0
      %2012 = vmatpush2.msra.mxu0 %v1953
      %2013 = vmatprep.subr.mxu0 0.0
      %2014 = vmatpush2.msra.mxu0 %v1952
      %2015 = vmatprep.subr.mxu0 0.0
      %2016 = vmatpush2.msra.mxu0 %v1951
      %2017 = vmatprep.subr.mxu0 0.0
      %2018 = vmatpush2.msra.mxu0 %v1950
      %2019 = vmatprep.subr.mxu0 0.0
      %2020 = vmatpush2.msra.mxu0 %v1949
      %2021 = vmatprep.subr.mxu0 0.0
      %2022 = vmatpush2.msra.mxu0 %v1948
      %2023 = vmatprep.subr.mxu0 0.0
      %2024 = vmatpush2.msra.mxu0 %v1947
      %2025 = vmatprep.subr.mxu0 0.0
      %2026 = vmatpush2.msra.mxu0 %v1946
      %2027 = vmatprep.subr.mxu0 0.0
      %2028 = vmatpush2.msra.mxu0 %v1945
      %2029 = vmatprep.subr.mxu0 0.0
      %2030 = vmatpush2.msra.mxu0 %v1944
      %2031 = vmatprep.subr.mxu0 0.0
      %2032 = vmatpush2.msra.mxu0 %v1943
      %2033 = vmatprep.subr.mxu0 0.0
      %2034 = vmatpush2.msra.mxu0 %v1942
      %2035 = vmatprep.subr.mxu0 0.0
      %2036 = vmatpush2.msra.mxu0 %v1941
      %2037 = vmatprep.mubr.f32.mxu0 %v1890
      %2038 = vmatmul.mubr.f32.gmra.mxu0 %v1888
      %v2039 = vpop.f32.mrf.mxu0
      %v2040 = vadd.f32 0.0, %v2039
      %v2041 = vpop.f32.mrf.mxu0
      %2042 = vmatprep.mubr.f32.mxu0 %v1891
      %2043 = vmatmul.mubr.f32.gmra.mxu0 %v1889
      %v2044 = vpop.f32.mrf.mxu0
      %v2045 = vadd.f32 0.0, %v2044
      %v2046 = vpop.f32.mrf.mxu0
      %2047 = vmatprep.mubr.f32.mxu0 %v1892
      %2048 = vmatmul.mubr.f32.gmra.mxu0 %v1890
      %v2049 = vpop.f32.mrf.mxu0
      %v2050 = vadd.f32 0.0, %v2049
      %v2051 = vpop.f32.mrf.mxu0
      %2052 = vmatprep.mubr.f32.mxu0 %v1893
      %2053 = vmatmul.mubr.f32.gmra.mxu0 %v1891
      %v2054 = vpop.f32.mrf.mxu0
      %v2055 = vadd.f32 0.0, %v2054
      %v2056 = vpop.f32.mrf.mxu0
      %2057 = vmatprep.mubr.f32.mxu0 %v1894
      %2058 = vmatmul.mubr.f32.gmra.mxu0 %v1892
      %v2059 = vpop.f32.mrf.mxu0
      %v2060 = vadd.f32 0.0, %v2059
      %v2061 = vpop.f32.mrf.mxu0
      %2062 = vmatprep.mubr.f32.mxu0 %v1895
      %2063 = vmatmul.mubr.f32.gmra.mxu0 %v1893
      %v2064 = vpop.f32.mrf.mxu0
      %v2065 = vadd.f32 0.0, %v2064
      %v2066 = vpop.f32.mrf.mxu0
      %2067 = vmatprep.mubr.f32.mxu0 %v1896
      %2068 = vmatmul.mubr.f32.gmra.mxu0 %v1894
      %v2069 = vpop.f32.mrf.mxu0
      %v2070 = vadd.f32 0.0, %v2069
      %v2071 = vpop.f32.mrf.mxu0
      %2072 = vmatprep.mubr.f32.mxu0 %v1897
      %2073 = vmatmul.mubr.f32.gmra.mxu0 %v1895
      %v2074 = vpop.f32.mrf.mxu0
      %v2075 = vadd.f32 0.0, %v2074
      %v2076 = vpop.f32.mrf.mxu0
      %2077 = vmatprep.mubr.f32.mxu0 %v1898
      %2078 = vmatmul.mubr.f32.gmra.mxu0 %v1896
      %v2079 = vpop.f32.mrf.mxu0
      %v2080 = vadd.f32 0.0, %v2079
      %v2081 = vpop.f32.mrf.mxu0
      %2082 = vmatprep.mubr.f32.mxu0 %v1899
      %2083 = vmatmul.mubr.f32.gmra.mxu0 %v1897
      %v2084 = vpop.f32.mrf.mxu0
      %v2085 = vadd.f32 0.0, %v2084
      %v2086 = vpop.f32.mrf.mxu0
      %2087 = vmatprep.mubr.f32.mxu0 %v1900
      %2088 = vmatmul.mubr.f32.gmra.mxu0 %v1898
      %v2089 = vpop.f32.mrf.mxu0
      %v2090 = vadd.f32 0.0, %v2089
      %v2091 = vpop.f32.mrf.mxu0
      %2092 = vmatprep.mubr.f32.mxu0 %v1901
      %2093 = vmatmul.mubr.f32.gmra.mxu0 %v1899
      %v2094 = vpop.f32.mrf.mxu0
      %v2095 = vadd.f32 0.0, %v2094
      %v2096 = vpop.f32.mrf.mxu0
      %2097 = vmatprep.mubr.f32.mxu0 %v1902
      %2098 = vmatmul.mubr.f32.gmra.mxu0 %v1900
      %v2099 = vpop.f32.mrf.mxu0
      %v2100 = vadd.f32 0.0, %v2099
      %v2101 = vpop.f32.mrf.mxu0
      %2102 = vmatprep.mubr.f32.mxu0 %v1903
      %2103 = vmatmul.mubr.f32.gmra.mxu0 %v1901
      %v2104 = vpop.f32.mrf.mxu0
      %v2105 = vadd.f32 0.0, %v2104
      %v2106 = vpop.f32.mrf.mxu0
      %2107 = vmatprep.mubr.f32.mxu0 %v1904
      %2108 = vmatmul.mubr.f32.gmra.mxu0 %v1902
      %v2109 = vpop.f32.mrf.mxu0
      %v2110 = vadd.f32 0.0, %v2109
      %v2111 = vpop.f32.mrf.mxu0
      %2112 = vmatprep.mubr.f32.mxu0 %v1905
      %2113 = vmatmul.mubr.f32.gmra.mxu0 %v1903
      %v2114 = vpop.f32.mrf.mxu0
      %v2115 = vadd.f32 0.0, %v2114
      %v2116 = vpop.f32.mrf.mxu0
      %2117 = vmatprep.mubr.f32.mxu0 %v1906
      %2118 = vmatmul.mubr.f32.gmra.mxu0 %v1904
      %v2119 = vpop.f32.mrf.mxu0
      %v2120 = vadd.f32 0.0, %v2119
      %v2121 = vpop.f32.mrf.mxu0
      %2122 = vmatprep.mubr.f32.mxu0 %v1907
      %2123 = vmatmul.mubr.f32.gmra.mxu0 %v1905
      %v2124 = vpop.f32.mrf.mxu0
      %v2125 = vadd.f32 0.0, %v2124
      %v2126 = vpop.f32.mrf.mxu0
      %2127 = vmatprep.mubr.f32.mxu0 %v1908
      %2128 = vmatmul.mubr.f32.gmra.mxu0 %v1906
      %v2129 = vpop.f32.mrf.mxu0
      %v2130 = vadd.f32 0.0, %v2129
      %v2131 = vpop.f32.mrf.mxu0
      %2132 = vmatprep.mubr.f32.mxu0 %v1909
      %2133 = vmatmul.mubr.f32.gmra.mxu0 %v1907
      %v2134 = vpop.f32.mrf.mxu0
      %v2135 = vadd.f32 0.0, %v2134
      %v2136 = vpop.f32.mrf.mxu0
      %2137 = vmatprep.mubr.f32.mxu0 %v1910
      %2138 = vmatmul.mubr.f32.gmra.mxu0 %v1908
      %v2139 = vpop.f32.mrf.mxu0
      %v2140 = vadd.f32 0.0, %v2139
      %v2141 = vpop.f32.mrf.mxu0
      %2142 = vmatprep.mubr.f32.mxu0 %v1911
      %2143 = vmatmul.mubr.f32.gmra.mxu0 %v1909
      %v2144 = vpop.f32.mrf.mxu0
      %v2145 = vadd.f32 0.0, %v2144
      %v2146 = vpop.f32.mrf.mxu0
      %2147 = vmatprep.mubr.f32.mxu0 %v1912
      %2148 = vmatmul.mubr.f32.gmra.mxu0 %v1910
      %v2149 = vpop.f32.mrf.mxu0
      %v2150 = vadd.f32 0.0, %v2149
      %v2151 = vpop.f32.mrf.mxu0
      %2152 = vmatprep.mubr.f32.mxu0 %v1913
      %2153 = vmatmul.mubr.f32.gmra.mxu0 %v1911
      %v2154 = vpop.f32.mrf.mxu0
      %v2155 = vadd.f32 0.0, %v2154
      %v2156 = vpop.f32.mrf.mxu0
      %2157 = vmatprep.mubr.f32.mxu0 %v1914
      %2158 = vmatmul.mubr.f32.gmra.mxu0 %v1912
      %v2159 = vpop.f32.mrf.mxu0
      %v2160 = vadd.f32 0.0, %v2159
      %v2161 = vpop.f32.mrf.mxu0
      %2162 = vmatprep.mubr.f32.mxu0 %v1915
      %2163 = vmatmul.mubr.f32.gmra.mxu0 %v1913
      %v2164 = vpop.f32.mrf.mxu0
      %v2165 = vadd.f32 0.0, %v2164
      %v2166 = vpop.f32.mrf.mxu0
      %2167 = vmatprep.mubr.f32.mxu0 %v1916
      %2168 = vmatmul.mubr.f32.gmra.mxu0 %v1914
      %v2169 = vpop.f32.mrf.mxu0
      %v2170 = vadd.f32 0.0, %v2169
      %v2171 = vpop.f32.mrf.mxu0
      %2172 = vmatprep.mubr.f32.mxu0 %v1917
      %2173 = vmatmul.mubr.f32.gmra.mxu0 %v1915
      %v2174 = vpop.f32.mrf.mxu0
      %v2175 = vadd.f32 0.0, %v2174
      %v2176 = vpop.f32.mrf.mxu0
      %2177 = vmatprep.mubr.f32.mxu0 %v1918
      %2178 = vmatmul.mubr.f32.gmra.mxu0 %v1916
      %v2179 = vpop.f32.mrf.mxu0
      %v2180 = vadd.f32 0.0, %v2179
      %v2181 = vpop.f32.mrf.mxu0
      %2182 = vmatprep.mubr.f32.mxu0 %v1919
      %2183 = vmatmul.mubr.f32.gmra.mxu0 %v1917
      %v2184 = vpop.f32.mrf.mxu0
      %v2185 = vadd.f32 0.0, %v2184
      %v2186 = vpop.f32.mrf.mxu0
      %2187 = vmatprep.mubr.f32.mxu0 %v1920
      %2188 = vmatmul.mubr.f32.gmra.mxu0 %v1918
      %v2189 = vpop.f32.mrf.mxu0
      %v2190 = vadd.f32 0.0, %v2189
      %v2191 = vpop.f32.mrf.mxu0
      %2192 = vmatprep.mubr.f32.mxu0 %v1921
      %2193 = vmatmul.mubr.f32.gmra.mxu0 %v1919
      %v2194 = vpop.f32.mrf.mxu0
      %v2195 = vadd.f32 0.0, %v2194
      %v2196 = vpop.f32.mrf.mxu0
      %2197 = vdwg.mxu0
      %2198 = vmatprep.subr.mxu0 0.0
      %2199 = vmatpush1.msra.mxu0 %v1972
      %2200 = vmatprep.subr.mxu0 0.0
      %2201 = vmatpush1.msra.mxu0 %v1971
      %2202 = vmatprep.subr.mxu0 0.0
      %2203 = vmatpush1.msra.mxu0 %v1970
      %2204 = vmatprep.subr.mxu0 0.0
      %2205 = vmatpush1.msra.mxu0 %v1969
      %2206 = vmatprep.subr.mxu0 0.0
      %2207 = vmatpush1.msra.mxu0 %v1968
      %2208 = vmatprep.subr.mxu0 0.0
      %2209 = vmatpush1.msra.mxu0 %v1967
      %2210 = vmatprep.subr.mxu0 0.0
      %2211 = vmatpush1.msra.mxu0 %v1966
      %2212 = vmatprep.subr.mxu0 0.0
      %2213 = vmatpush1.msra.mxu0 %v1965
      %2214 = vmatprep.subr.mxu0 0.0
      %2215 = vmatpush1.msra.mxu0 %v1964
      %2216 = vmatprep.subr.mxu0 0.0
      %2217 = vmatpush1.msra.mxu0 %v1963
      %2218 = vmatprep.subr.mxu0 0.0
      %2219 = vmatpush1.msra.mxu0 %v1962
      %2220 = vmatprep.subr.mxu0 0.0
      %2221 = vmatpush1.msra.mxu0 %v1961
      %2222 = vmatprep.subr.mxu0 0.0
      %2223 = vmatpush1.msra.mxu0 %v1960
      %2224 = vmatprep.subr.mxu0 0.0
      %2225 = vmatpush1.msra.mxu0 %v1959
      %2226 = vmatprep.subr.mxu0 0.0
      %2227 = vmatpush1.msra.mxu0 %v1958
      %2228 = vmatprep.subr.mxu0 0.0
      %2229 = vmatpush1.msra.mxu0 %v1957
      %2230 = vmatprep.subr.mxu0 0.0
      %2231 = vmatpush2.msra.mxu0 0.0
      %2232 = vmatprep.subr.mxu0 0.0
      %2233 = vmatpush2.msra.mxu0 0.0
      %2234 = vmatprep.subr.mxu0 0.0
      %2235 = vmatpush2.msra.mxu0 0.0
      %2236 = vmatprep.subr.mxu0 0.0
      %2237 = vmatpush2.msra.mxu0 0.0
      %2238 = vmatprep.subr.mxu0 0.0
      %2239 = vmatpush2.msra.mxu0 0.0
      %2240 = vmatprep.subr.mxu0 0.0
      %2241 = vmatpush2.msra.mxu0 0.0
      %2242 = vmatprep.subr.mxu0 0.0
      %2243 = vmatpush2.msra.mxu0 0.0
      %2244 = vmatprep.subr.mxu0 0.0
      %2245 = vmatpush2.msra.mxu0 0.0
      %2246 = vmatprep.subr.mxu0 0.0
      %2247 = vmatpush2.msra.mxu0 0.0
      %2248 = vmatprep.subr.mxu0 0.0
      %2249 = vmatpush2.msra.mxu0 0.0
      %2250 = vmatprep.subr.mxu0 0.0
      %2251 = vmatpush2.msra.mxu0 0.0
      %2252 = vmatprep.subr.mxu0 0.0
      %2253 = vmatpush2.msra.mxu0 0.0
      %2254 = vmatprep.subr.mxu0 0.0
      %2255 = vmatpush2.msra.mxu0 0.0
      %2256 = vmatprep.subr.mxu0 0.0
      %2257 = vmatpush2.msra.mxu0 0.0
      %2258 = vmatprep.subr.mxu0 0.0
      %2259 = vmatpush2.msra.mxu0 0.0
      %2260 = vmatprep.subr.mxu0 0.0
      %2261 = vmatpush2.msra.mxu0 0.0
      %2262 = vmatprep.mubr.f32.mxu0 0.0
      %2263 = vmatmul.mubr.f32.gmra.mxu0 %v1892
      %v2264 = vpop.f32.mrf.mxu0
      %v2265 = vadd.f32 %v2040, %v2264
      %v2266 = vpop.f32.mrf.mxu0
      %2267 = vmatprep.mubr.f32.mxu0 0.0
      %2268 = vmatmul.mubr.f32.gmra.mxu0 %v1893
      %v2269 = vpop.f32.mrf.mxu0
      %v2270 = vadd.f32 %v2045, %v2269
      %v2271 = vpop.f32.mrf.mxu0
      %2272 = vmatprep.mubr.f32.mxu0 0.0
      %2273 = vmatmul.mubr.f32.gmra.mxu0 %v1894
      %v2274 = vpop.f32.mrf.mxu0
      %v2275 = vadd.f32 %v2050, %v2274
      %v2276 = vpop.f32.mrf.mxu0
      %2277 = vmatprep.mubr.f32.mxu0 0.0
      %2278 = vmatmul.mubr.f32.gmra.mxu0 %v1895
      %v2279 = vpop.f32.mrf.mxu0
      %v2280 = vadd.f32 %v2055, %v2279
      %v2281 = vpop.f32.mrf.mxu0
      %2282 = vmatprep.mubr.f32.mxu0 0.0
      %2283 = vmatmul.mubr.f32.gmra.mxu0 %v1896
      %v2284 = vpop.f32.mrf.mxu0
      %v2285 = vadd.f32 %v2060, %v2284
      %v2286 = vpop.f32.mrf.mxu0
      %2287 = vmatprep.mubr.f32.mxu0 0.0
      %2288 = vmatmul.mubr.f32.gmra.mxu0 %v1897
      %v2289 = vpop.f32.mrf.mxu0
      %v2290 = vadd.f32 %v2065, %v2289
      %v2291 = vpop.f32.mrf.mxu0
      %2292 = vmatprep.mubr.f32.mxu0 0.0
      %2293 = vmatmul.mubr.f32.gmra.mxu0 %v1898
      %v2294 = vpop.f32.mrf.mxu0
      %v2295 = vadd.f32 %v2070, %v2294
      %v2296 = vpop.f32.mrf.mxu0
      %2297 = vmatprep.mubr.f32.mxu0 0.0
      %2298 = vmatmul.mubr.f32.gmra.mxu0 %v1899
      %v2299 = vpop.f32.mrf.mxu0
      %v2300 = vadd.f32 %v2075, %v2299
      %v2301 = vpop.f32.mrf.mxu0
      %2302 = vmatprep.mubr.f32.mxu0 0.0
      %2303 = vmatmul.mubr.f32.gmra.mxu0 %v1900
      %v2304 = vpop.f32.mrf.mxu0
      %v2305 = vadd.f32 %v2080, %v2304
      %v2306 = vpop.f32.mrf.mxu0
      %2307 = vmatprep.mubr.f32.mxu0 0.0
      %2308 = vmatmul.mubr.f32.gmra.mxu0 %v1901
      %v2309 = vpop.f32.mrf.mxu0
      %v2310 = vadd.f32 %v2085, %v2309
      %v2311 = vpop.f32.mrf.mxu0
      %2312 = vmatprep.mubr.f32.mxu0 0.0
      %2313 = vmatmul.mubr.f32.gmra.mxu0 %v1902
      %v2314 = vpop.f32.mrf.mxu0
      %v2315 = vadd.f32 %v2090, %v2314
      %v2316 = vpop.f32.mrf.mxu0
      %2317 = vmatprep.mubr.f32.mxu0 0.0
      %2318 = vmatmul.mubr.f32.gmra.mxu0 %v1903
      %v2319 = vpop.f32.mrf.mxu0
      %v2320 = vadd.f32 %v2095, %v2319
      %v2321 = vpop.f32.mrf.mxu0
      %2322 = vmatprep.mubr.f32.mxu0 0.0
      %2323 = vmatmul.mubr.f32.gmra.mxu0 %v1904
      %v2324 = vpop.f32.mrf.mxu0
      %v2325 = vadd.f32 %v2100, %v2324
      %v2326 = vpop.f32.mrf.mxu0
      %2327 = vmatprep.mubr.f32.mxu0 0.0
      %2328 = vmatmul.mubr.f32.gmra.mxu0 %v1905
      %v2329 = vpop.f32.mrf.mxu0
      %v2330 = vadd.f32 %v2105, %v2329
      %v2331 = vpop.f32.mrf.mxu0
      %2332 = vmatprep.mubr.f32.mxu0 0.0
      %2333 = vmatmul.mubr.f32.gmra.mxu0 %v1906
      %v2334 = vpop.f32.mrf.mxu0
      %v2335 = vadd.f32 %v2110, %v2334
      %v2336 = vpop.f32.mrf.mxu0
      %2337 = vmatprep.mubr.f32.mxu0 0.0
      %2338 = vmatmul.mubr.f32.gmra.mxu0 %v1907
      %v2339 = vpop.f32.mrf.mxu0
      %v2340 = vadd.f32 %v2115, %v2339
      %v2341 = vpop.f32.mrf.mxu0
      %2342 = vmatprep.mubr.f32.mxu0 0.0
      %2343 = vmatmul.mubr.f32.gmra.mxu0 %v1908
      %v2344 = vpop.f32.mrf.mxu0
      %v2345 = vadd.f32 %v2120, %v2344
      %v2346 = vpop.f32.mrf.mxu0
      %2347 = vmatprep.mubr.f32.mxu0 0.0
      %2348 = vmatmul.mubr.f32.gmra.mxu0 %v1909
      %v2349 = vpop.f32.mrf.mxu0
      %v2350 = vadd.f32 %v2125, %v2349
      %v2351 = vpop.f32.mrf.mxu0
      %2352 = vmatprep.mubr.f32.mxu0 0.0
      %2353 = vmatmul.mubr.f32.gmra.mxu0 %v1910
      %v2354 = vpop.f32.mrf.mxu0
      %v2355 = vadd.f32 %v2130, %v2354
      %v2356 = vpop.f32.mrf.mxu0
      %2357 = vmatprep.mubr.f32.mxu0 0.0
      %2358 = vmatmul.mubr.f32.gmra.mxu0 %v1911
      %v2359 = vpop.f32.mrf.mxu0
      %v2360 = vadd.f32 %v2135, %v2359
      %v2361 = vpop.f32.mrf.mxu0
      %2362 = vmatprep.mubr.f32.mxu0 0.0
      %2363 = vmatmul.mubr.f32.gmra.mxu0 %v1912
      %v2364 = vpop.f32.mrf.mxu0
      %v2365 = vadd.f32 %v2140, %v2364
      %v2366 = vpop.f32.mrf.mxu0
      %2367 = vmatprep.mubr.f32.mxu0 0.0
      %2368 = vmatmul.mubr.f32.gmra.mxu0 %v1913
      %v2369 = vpop.f32.mrf.mxu0
      %v2370 = vadd.f32 %v2145, %v2369
      %v2371 = vpop.f32.mrf.mxu0
      %2372 = vmatprep.mubr.f32.mxu0 0.0
      %2373 = vmatmul.mubr.f32.gmra.mxu0 %v1914
      %v2374 = vpop.f32.mrf.mxu0
      %v2375 = vadd.f32 %v2150, %v2374
      %v2376 = vpop.f32.mrf.mxu0
      %2377 = vmatprep.mubr.f32.mxu0 0.0
      %2378 = vmatmul.mubr.f32.gmra.mxu0 %v1915
      %v2379 = vpop.f32.mrf.mxu0
      %v2380 = vadd.f32 %v2155, %v2379
      %v2381 = vpop.f32.mrf.mxu0
      %2382 = vmatprep.mubr.f32.mxu0 0.0
      %2383 = vmatmul.mubr.f32.gmra.mxu0 %v1916
      %v2384 = vpop.f32.mrf.mxu0
      %v2385 = vadd.f32 %v2160, %v2384
      %v2386 = vpop.f32.mrf.mxu0
      %2387 = vmatprep.mubr.f32.mxu0 0.0
      %2388 = vmatmul.mubr.f32.gmra.mxu0 %v1917
      %v2389 = vpop.f32.mrf.mxu0
      %v2390 = vadd.f32 %v2165, %v2389
      %v2391 = vpop.f32.mrf.mxu0
      %2392 = vmatprep.mubr.f32.mxu0 0.0
      %2393 = vmatmul.mubr.f32.gmra.mxu0 %v1918
      %v2394 = vpop.f32.mrf.mxu0
      %v2395 = vadd.f32 %v2170, %v2394
      %v2396 = vpop.f32.mrf.mxu0
      %2397 = vmatprep.mubr.f32.mxu0 0.0
      %2398 = vmatmul.mubr.f32.gmra.mxu0 %v1919
      %v2399 = vpop.f32.mrf.mxu0
      %v2400 = vadd.f32 %v2175, %v2399
      %v2401 = vpop.f32.mrf.mxu0
      %2402 = vmatprep.mubr.f32.mxu0 0.0
      %2403 = vmatmul.mubr.f32.gmra.mxu0 %v1920
      %v2404 = vpop.f32.mrf.mxu0
      %v2405 = vadd.f32 %v2180, %v2404
      %v2406 = vpop.f32.mrf.mxu0
      %2407 = vmatprep.mubr.f32.mxu0 0.0
      %2408 = vmatmul.mubr.f32.gmra.mxu0 %v1921
      %v2409 = vpop.f32.mrf.mxu0
      %v2410 = vadd.f32 %v2185, %v2409
      %v2411 = vpop.f32.mrf.mxu0
      %2412 = vmatprep.mubr.f32.mxu0 0.0
      %2413 = vmatmul.mubr.f32.gmra.mxu0 %v1922
      %v2414 = vpop.f32.mrf.mxu0
      %v2415 = vadd.f32 %v2190, %v2414
      %v2416 = vpop.f32.mrf.mxu0
      %2417 = vmatprep.mubr.f32.mxu0 0.0
      %2418 = vmatmul.mubr.f32.gmra.mxu0 %v1923
      %v2419 = vpop.f32.mrf.mxu0
      %v2420 = vadd.f32 %v2195, %v2419
      %v2421 = vpop.f32.mrf.mxu0
      %2422 = vdwg.mxu0
      %v2423 = vadd.f32 %v1688, %v2265
      %v2424 = vadd.f32 %v1693, %v2270
      %v2425 = vadd.f32 %v1698, %v2275
      %v2426 = vadd.f32 %v1703, %v2280
      %v2427 = vadd.f32 %v1708, %v2285
      %v2428 = vadd.f32 %v1713, %v2290
      %v2429 = vadd.f32 %v1718, %v2295
      %v2430 = vadd.f32 %v1723, %v2300
      %v2431 = vadd.f32 %v1728, %v2305
      %v2432 = vadd.f32 %v1733, %v2310
      %v2433 = vadd.f32 %v1738, %v2315
      %v2434 = vadd.f32 %v1743, %v2320
      %v2435 = vadd.f32 %v1748, %v2325
      %v2436 = vadd.f32 %v1753, %v2330
      %v2437 = vadd.f32 %v1758, %v2335
      %v2438 = vadd.f32 %v1763, %v2340
      %v2439 = vadd.f32 %v1768, %v2345
      %v2440 = vadd.f32 %v1773, %v2350
      %v2441 = vadd.f32 %v1778, %v2355
      %v2442 = vadd.f32 %v1783, %v2360
      %v2443 = vadd.f32 %v1788, %v2365
      %v2444 = vadd.f32 %v1793, %v2370
      %v2445 = vadd.f32 %v1798, %v2375
      %v2446 = vadd.f32 %v1803, %v2380
      %v2447 = vadd.f32 %v1808, %v2385
      %v2448 = vadd.f32 %v1813, %v2390
      %v2449 = vadd.f32 %v1818, %v2395
      %v2450 = vadd.f32 %v1823, %v2400
      %v2451 = vadd.f32 %v1828, %v2405
      %v2452 = vadd.f32 %v1833, %v2410
      %v2453 = vadd.f32 %v1838, %v2415
      %v2454 = vadd.f32 %v1843, %v2420
      %2455 = vst [vmem:[%s475] sm:$0xff] %v2423
      %2456 = vst [vmem:[%s475 + $0x8] sm:$0xff] %v2424
      %2457 = vst [vmem:[%s475 + $0x10] sm:$0xff] %v2425
      %2458 = vst [vmem:[%s475 + $0x18] sm:$0xff] %v2426
      %2459 = vst [vmem:[%s475 + $0x20] sm:$0xff] %v2427
      %2460 = vst [vmem:[%s475 + $0x28] sm:$0xff] %v2428
      %2461 = vst [vmem:[%s475 + $0x30] sm:$0xff] %v2429
      %2462 = vst [vmem:[%s475 + $0x38] sm:$0xff] %v2430
      %2463 = vst [vmem:[%s475 + $0x40] sm:$0xff] %v2431
      %2464 = vst [vmem:[%s475 + $0x48] sm:$0xff] %v2432
      %2465 = vst [vmem:[%s475 + $0x50] sm:$0xff] %v2433
      %2466 = vst [vmem:[%s475 + $0x58] sm:$0xff] %v2434
      %2467 = vst [vmem:[%s475 + $0x60] sm:$0xff] %v2435
      %2468 = vst [vmem:[%s475 + $0x68] sm:$0xff] %v2436
      %2469 = vst [vmem:[%s475 + $0x70] sm:$0xff] %v2437
      %2470 = vst [vmem:[%s475 + $0x78] sm:$0xff] %v2438
      %2471 = vst [vmem:[%s475 + $0x80] sm:$0xff] %v2439
      %2472 = vst [vmem:[%s475 + $0x88] sm:$0xff] %v2440
      %2473 = vst [vmem:[%s475 + $0x90] sm:$0xff] %v2441
      %2474 = vst [vmem:[%s475 + $0x98] sm:$0xff] %v2442
      %2475 = vst [vmem:[%s475 + $0xa0] sm:$0xff] %v2443
      %2476 = vst [vmem:[%s475 + $0xa8] sm:$0xff] %v2444
      %2477 = vst [vmem:[%s475 + $0xb0] sm:$0xff] %v2445
      %2478 = vst [vmem:[%s475 + $0xb8] sm:$0xff] %v2446
      %2479 = vst [vmem:[%s475 + $0xc0] sm:$0xff] %v2447
      %2480 = vst [vmem:[%s475 + $0xc8] sm:$0xff] %v2448
      %2481 = vst [vmem:[%s475 + $0xd0] sm:$0xff] %v2449
      %2482 = vst [vmem:[%s475 + $0xd8] sm:$0xff] %v2450
      %2483 = vst [vmem:[%s475 + $0xe0] sm:$0xff] %v2451
      %2484 = vst [vmem:[%s475 + $0xe8] sm:$0xff] %v2452
      %2485 = vst [vmem:[%s475 + $0xf0] sm:$0xff] %v2453
      %2486 = vst [vmem:[%s475 + $0xf8] sm:$0xff] %v2454
      %v2487 = vadd.f32 %v2423, %v2424
      %v2488 = vadd.f32 %v2487, %v2425
      %v2489 = vadd.f32 %v2488, %v2426
      %v2490 = vadd.f32 %v2489, %v2427
      %v2491 = vadd.f32 %v2490, %v2428
      %v2492 = vadd.f32 %v2491, %v2429
      %v2493 = vadd.f32 %v2492, %v2430
      %v2494 = vadd.f32 %v2493, %v2431
      %v2495 = vadd.f32 %v2494, %v2432
      %v2496 = vadd.f32 %v2495, %v2433
      %v2497 = vadd.f32 %v2496, %v2434
      %v2498 = vadd.f32 %v2497, %v2435
      %v2499 = vadd.f32 %v2498, %v2436
      %v2500 = vadd.f32 %v2499, %v2437
      %v2501 = vadd.f32 %v2500, %v2438
      %v2502 = vadd.f32 %v2501, %v2439
      %v2503 = vadd.f32 %v2502, %v2440
      %v2504 = vadd.f32 %v2503, %v2441
      %v2505 = vadd.f32 %v2504, %v2442
      %v2506 = vadd.f32 %v2505, %v2443
      %v2507 = vadd.f32 %v2506, %v2444
      %v2508 = vadd.f32 %v2507, %v2445
      %v2509 = vadd.f32 %v2508, %v2446
      %v2510 = vadd.f32 %v2509, %v2447
      %v2511 = vadd.f32 %v2510, %v2448
      %v2512 = vadd.f32 %v2511, %v2449
      %v2513 = vadd.f32 %v2512, %v2450
      %v2514 = vadd.f32 %v2513, %v2451
      %v2515 = vadd.f32 %v2514, %v2452
      %v2516 = vadd.f32 %v2515, %v2453
      %v2517 = vadd.f32 %v2516, %v2454
      %v2518 = vrot.slane %v2517, 4
      %v2519 = vadd.f32 %v2517, %v2518
      %v2520 = vrot.slane %v2519, 2
      %v2521 = vadd.f32 %v2519, %v2520
      %v2522 = vrot.slane %v2521, 1
      %v2523 = vadd.f32 %v2521, %v2522
      %2524 = vst [vmem:[%s481] sm:$0x1] %v2523
      %v2525 = vmul.f32 %v2423, %v2423
      %v2526 = vmul.f32 %v2424, %v2424
      %v2527 = vmul.f32 %v2425, %v2425
      %v2528 = vmul.f32 %v2426, %v2426
      %v2529 = vmul.f32 %v2427, %v2427
      %v2530 = vmul.f32 %v2428, %v2428
      %v2531 = vmul.f32 %v2429, %v2429
      %v2532 = vmul.f32 %v2430, %v2430
      %v2533 = vmul.f32 %v2431, %v2431
      %v2534 = vmul.f32 %v2432, %v2432
      %v2535 = vmul.f32 %v2433, %v2433
      %v2536 = vmul.f32 %v2434, %v2434
      %v2537 = vmul.f32 %v2435, %v2435
      %v2538 = vmul.f32 %v2436, %v2436
      %v2539 = vmul.f32 %v2437, %v2437
      %v2540 = vmul.f32 %v2438, %v2438
      %v2541 = vmul.f32 %v2439, %v2439
      %v2542 = vmul.f32 %v2440, %v2440
      %v2543 = vmul.f32 %v2441, %v2441
      %v2544 = vmul.f32 %v2442, %v2442
      %v2545 = vmul.f32 %v2443, %v2443
      %v2546 = vmul.f32 %v2444, %v2444
      %v2547 = vmul.f32 %v2445, %v2445
      %v2548 = vmul.f32 %v2446, %v2446
      %v2549 = vmul.f32 %v2447, %v2447
      %v2550 = vmul.f32 %v2448, %v2448
      %v2551 = vmul.f32 %v2449, %v2449
      %v2552 = vmul.f32 %v2450, %v2450
      %v2553 = vmul.f32 %v2451, %v2451
      %v2554 = vmul.f32 %v2452, %v2452
      %v2555 = vmul.f32 %v2453, %v2453
      %v2556 = vmul.f32 %v2454, %v2454
      %v2557 = vadd.f32 %v2525, %v2526
      %v2558 = vadd.f32 %v2557, %v2527
      %v2559 = vadd.f32 %v2558, %v2528
      %v2560 = vadd.f32 %v2559, %v2529
      %v2561 = vadd.f32 %v2560, %v2530
      %v2562 = vadd.f32 %v2561, %v2531
      %v2563 = vadd.f32 %v2562, %v2532
      %v2564 = vadd.f32 %v2563, %v2533
      %v2565 = vadd.f32 %v2564, %v2534
      %v2566 = vadd.f32 %v2565, %v2535
      %v2567 = vadd.f32 %v2566, %v2536
      %v2568 = vadd.f32 %v2567, %v2537
      %v2569 = vadd.f32 %v2568, %v2538
      %v2570 = vadd.f32 %v2569, %v2539
      %v2571 = vadd.f32 %v2570, %v2540
      %v2572 = vadd.f32 %v2571, %v2541
      %v2573 = vadd.f32 %v2572, %v2542
      %v2574 = vadd.f32 %v2573, %v2543
      %v2575 = vadd.f32 %v2574, %v2544
      %v2576 = vadd.f32 %v2575, %v2545
      %v2577 = vadd.f32 %v2576, %v2546
      %v2578 = vadd.f32 %v2577, %v2547
      %v2579 = vadd.f32 %v2578, %v2548
      %v2580 = vadd.f32 %v2579, %v2549
      %v2581 = vadd.f32 %v2580, %v2550
      %v2582 = vadd.f32 %v2581, %v2551
      %v2583 = vadd.f32 %v2582, %v2552
      %v2584 = vadd.f32 %v2583, %v2553
      %v2585 = vadd.f32 %v2584, %v2554
      %v2586 = vadd.f32 %v2585, %v2555
      %v2587 = vadd.f32 %v2586, %v2556
      %v2588 = vrot.slane %v2587, 4
      %v2589 = vadd.f32 %v2587, %v2588
      %v2590 = vrot.slane %v2589, 2
      %v2591 = vadd.f32 %v2589, %v2590
      %v2592 = vrot.slane %v2591, 1
      %v2593 = vadd.f32 %v2591, %v2592
      %2594 = vst [vmem:[%s486] sm:$0x1] %v2593
      %s2595 = sadd.s32 %s24, %s25
      %s2596 = smul.u32 32, %s2595
      %p2597 = scmp.lt.s32.totalorder %s2596, 63
      %s2598 = scalar_select %p2597, %s2596, 63
      %s2599 = smul.addr %s2598, 8
      %s2600 = scalar_lea.vmem %s6, %s2599
      %s2601 = sadd.s32 %s24, %s25
      %p2602 = scmp.lt.s32.totalorder %s2601, 1
      %s2603 = scalar_select %p2602, %s2601, 1
      %s2604 = scalar_lea.vmem %s7, %s2603
      %s2605 = sadd.s32 %s24, %s25
      %p2606 = scmp.lt.s32.totalorder %s2605, 1
      %s2607 = scalar_select %p2606, %s2605, 1
      %s2608 = scalar_lea.vmem %s8, %s2607
      // Predicated region
      $region61: #{double_conv.3} parent=43 // pred_check
        %p2609 = pneg %p219
      $region62: #{double_conv.3} parent=43 // pred_check_branch
        %2611 = sbr.rel (%p2609) target = $region64
      $region63: #{double_conv.3} parent=43 // pred_region
        %s2612 = sadd.s32 %s24, %s25
        %s2613 = smul.u32 32, %s2612
      $region64: #{double_conv.3} parent=43 // pred_fallthru
        _
      // Predicated region
      $region65: #{double_conv.3} parent=43 // pred_check
        %p2614 = pneg %p247
      $region66: #{double_conv.3} parent=43 // pred_check_branch
        %2616 = sbr.rel (%p2614) target = $region68
      $region67: #{double_conv.3} parent=43 // pred_region
        %s2617 = sadd.s32 %s24, %s25
      $region68: #{double_conv.3} parent=43 // pred_fallthru
        _
      // Predicated region
      $region69: #{double_conv.3} parent=43 // pred_check
        %p2618 = pneg %p275
      $region70: #{double_conv.3} parent=43 // pred_check_branch
        %2620 = sbr.rel (%p2618) target = $region72
      $region71: #{double_conv.3} parent=43 // pred_region
        %s2621 = sadd.s32 %s24, %s25
      $region72: #{double_conv.3} parent=43 // pred_fallthru
        _
    $region44: #{double_conv.3} parent=5 // pred_fallthru
      _
    %p2622 = scmp.le.s32.totalorder 2, %s15
    // Predicated region
    $region73: #{double_conv.3} parent=5 // pred_check
      %p2623 = pneg %p2622
    $region74: #{double_conv.3} parent=5 // pred_check_branch
      %2625 = sbr.rel (%p2623) target = $region76
    $region75: #{double_conv.3} parent=5 // pred_region
      %s2626 = ssub.s32 %s15, 2
      // Predicated region
      $region77: #{double_conv.3} parent=75 // pred_check
        %p2627 = pneg %p225
      $region78: #{double_conv.3} parent=75 // pred_check_branch
        %2629 = sbr.rel (%p2627) target = $region80
      $region79: #{double_conv.3} parent=75 // pred_region
        %s2630 = sadd.s32 %s26, %s27
        %s2631 = smul.u32 32, %s2630
        %p2632 = scmp.lt.s32.totalorder %s2631, 63
        %s2633 = scalar_select %p2632, %s2631, 63
        %s2634 = smul.addr %s2633, 8
        %s2635 = scalar_lea.vmem %s6, %s2634
      $region80: #{double_conv.3} parent=75 // pred_fallthru
        _
      // Predicated region
      $region81: #{double_conv.3} parent=75 // pred_check
        %p2636 = pneg %p253
      $region82: #{double_conv.3} parent=75 // pred_check_branch
        %2638 = sbr.rel (%p2636) target = $region84
      $region83: #{double_conv.3} parent=75 // pred_region
        %s2639 = sadd.s32 %s26, %s27
        %p2640 = scmp.lt.s32.totalorder %s2639, 1
        %s2641 = scalar_select %p2640, %s2639, 1
        %s2642 = scalar_lea.vmem %s7, %s2641
      $region84: #{double_conv.3} parent=75 // pred_fallthru
        _
      // Predicated region
      $region85: #{double_conv.3} parent=75 // pred_check
        %p2643 = pneg %p281
      $region86: #{double_conv.3} parent=75 // pred_check_branch
        %2645 = sbr.rel (%p2643) target = $region88
      $region87: #{double_conv.3} parent=75 // pred_region
        %s2646 = sadd.s32 %s26, %s27
        %p2647 = scmp.lt.s32.totalorder %s2646, 1
        %s2648 = scalar_select %p2647, %s2646, 1
        %s2649 = scalar_lea.vmem %s8, %s2648
      $region88: #{double_conv.3} parent=75 // pred_fallthru
        _
    $region76: #{double_conv.3} parent=5 // pred_fallthru
      _
  $region6: #{double_conv.3} parent=0 // loop_footer
    %s19 = sadd.s32 1, %s15
  $region7: #{double_conv.3} parent=0 // loop_footer_branch
    %14 = sbr.rel target = $region3
  $region8: #{double_conv.3} parent=0 // loop_exit
    _

</llo_original>
